<compile_context>
chip_gen: v7x
topology: tpu7x:2x2x1
jax: 0.10.0
libtpu: 0.0.40
codegen_flags: <defaults>
</compile_context>

<pallas_src>
import functools
import math

import jax
import jax.numpy as jnp
from jax.experimental import pallas as pl
from jax.experimental.pallas import tpu as pltpu

ACT_DTYPE = jnp.bfloat16        # MXU input / activation storage dtype (f32 accumulate)
LANES = 128                     # output-channel padding -> lane-dense stores
_VMEM_LIMIT = 32 * 1024 * 1024  # explicit scoped-VMEM limit (safe on v5e/v6e/v7x)


# ---------------------------------------------------------------------------
# Pallas kernels
# ---------------------------------------------------------------------------
def conv_bias_relu_pool_kernel(x_ref, w_ref, b_ref, o_ref, acc_ref, *, wo, rp):
    """Fused conv-as-matmul (bf16 MXU, f32 acc) -> 2x2/2 max-pool -> bias -> ReLU.

    x_ref  : (rp*2*wo, K)   im2col patch rows for `rp` conv-output row pairs
    w_ref  : (K, 128)       weights (real output channels in the low lanes, rest 0)
    b_ref  : (1, 128)       float32 bias (zero-padded)
    o_ref  : (rp*wo//2, 128) pooled activation block (lane dense)
    acc_ref: (rp*2*wo, 128) f32 VMEM scratch holding the un-pooled conv output
    """
    acc_ref[...] = jnp.dot(x_ref[...], w_ref[...],
                           preferred_element_type=jnp.float32)
    bias = b_ref[...]
    hw = wo // 2
    for r in range(rp):                                  # unrolled: static offsets
        base = r * 2 * wo
        # four 2x2-pool corners of this conv-output row pair (strided sublane loads)
        c00 = acc_ref[pl.ds(base,          hw, stride=2), :]
        c01 = acc_ref[pl.ds(base + 1,      hw, stride=2), :]
        c10 = acc_ref[pl.ds(base + wo,     hw, stride=2), :]
        c11 = acc_ref[pl.ds(base + wo + 1, hw, stride=2), :]
        pooled = jnp.maximum(jnp.maximum(c00, c01), jnp.maximum(c10, c11))
        # bias + ReLU commute with max -> applied once on the pooled tile
        o_ref[pl.ds(r * hw, hw), :] = jnp.maximum(pooled + bias, 0.0).astype(o_ref.dtype)


def fc_head_kernel(x_ref, w1_ref, b1_ref, w2_ref, b2_ref, w3_ref, b3_ref, o_ref):
    """Fused fc1(+ReLU) -> fc2(+ReLU) -> fc3 on VMEM-resident activations."""
    h = jnp.dot(x_ref[...], w1_ref[...], preferred_element_type=jnp.float32)
    h = jnp.maximum(h + b1_ref[...], 0.0)
    h = jnp.dot(h.astype(ACT_DTYPE), w2_ref[...], preferred_element_type=jnp.float32)
    h = jnp.maximum(h + b2_ref[...], 0.0)
    h = jnp.dot(h.astype(ACT_DTYPE), w3_ref[...], preferred_element_type=jnp.float32)
    o_ref[...] = (h + b3_ref[...]).astype(o_ref.dtype)


# ---------------------------------------------------------------------------
# Wrappers
# ---------------------------------------------------------------------------
def conv_relu_pool_pallas(x, wm, b, *, kh, kw):
    """Valid conv (stride 1) + bias + ReLU + 2x2/2 max-pool, fused in one kernel.

    x : (B, H, W, C)  NHWC ACT_DTYPE, only REAL channels (no lane padding)
    wm: (C*kh*kw, 128) bf16 weights, rows ordered channel-major (c, i, j)
    b : (1, 128)       float32
    returns (B, Ho//2, Wo//2, 128) ACT_DTYPE, channels zero-padded past real Cout.
    """
    B, H, W, C = x.shape
    Ho, Wo = H - kh + 1, W - kw + 1
    assert Ho % 2 == 0 and Wo % 2 == 0
    K = C * kh * kw
    N = wm.shape[1]

    # One XLA op builds all patches; feature order is channel-major (c, i, j), i.e.
    # exactly PyTorch's weight.reshape(Cout, Cin*kh*kw) flattening.
    patches = jax.lax.conv_general_dilated_patches(
        x, (kh, kw), (1, 1), "VALID",
        dimension_numbers=("NHWC", "HWIO", "NHWC"))          # (B, Ho, Wo, K)
    M = B * Ho * Wo
    pm = patches.reshape(M, K)                               # free reshape, NO K pad

    # A tile is `rp` conv-output row pairs (2*Wo patch rows each) so the 2x2 pool can
    # be finished inside the kernel.  rp*Wo//2 (pooled rows per tile) must be %8 == 0.
    hw = Wo // 2
    total_pairs = B * Ho // 2
    unit = 8 // math.gcd(hw, 8)
    target = max(unit, (1024 // (2 * Wo)) // unit * unit)        # ~1K-row tiles
    half = max(unit, ((total_pairs + 1) // 2) // unit * unit)    # keep grid >= 2
    rp = max(unit, min(target, half))
    if rp >= total_pairs:
        rp = total_pairs                                     # single full-extent tile
    tm = rp * 2 * Wo
    m_out = M // 4

    out = pl.pallas_call(
        functools.partial(conv_bias_relu_pool_kernel, wo=Wo, rp=rp),
        out_shape=jax.ShapeDtypeStruct((m_out, N), x.dtype),
        grid=(pl.cdiv(total_pairs, rp),),
        in_specs=[
            pl.BlockSpec((tm, K), lambda i: (i, 0)),
            pl.BlockSpec((K, N), lambda i: (0, 0)),
            pl.BlockSpec((1, N), lambda i: (0, 0)),
        ],
        out_specs=pl.BlockSpec((rp * hw, N), lambda i: (i, 0)),
        scratch_shapes=[pltpu.VMEM((tm, N), jnp.float32)],
        compiler_params=pltpu.CompilerParams(
            dimension_semantics=("parallel",),
            vmem_limit_bytes=_VMEM_LIMIT),
    )(pm, wm, b)
    return out.reshape(B, Ho // 2, Wo // 2, N)


def fc_head_pallas(x, w1, b1, w2, b2, w3, b3):
    """Fused fc1+fc2+fc3.  x: (B, 400) ACT_DTYPE -> (B, 128) float32."""
    B, K = x.shape
    N = w1.shape[1]
    if B <= 128:
        TB = B                       # full-extent (small batch)
    elif B >= 256:
        TB = 256                     # fill the 256-wide MXU on v6e/v7x
    else:
        TB = 128
    out = pl.pallas_call(
        fc_head_kernel,
        out_shape=jax.ShapeDtypeStruct((B, N), jnp.float32),
        grid=(pl.cdiv(B, TB),),
        in_specs=[
            pl.BlockSpec((TB, K), lambda i: (i, 0)),
            pl.BlockSpec(w1.shape, lambda i: (0, 0)),
            pl.BlockSpec(b1.shape, lambda i: (0, 0)),
            pl.BlockSpec(w2.shape, lambda i: (0, 0)),
            pl.BlockSpec(b2.shape, lambda i: (0, 0)),
            pl.BlockSpec(w3.shape, lambda i: (0, 0)),
            pl.BlockSpec(b3.shape, lambda i: (0, 0)),
        ],
        out_specs=pl.BlockSpec((TB, N), lambda i: (i, 0)),
        compiler_params=pltpu.CompilerParams(
            dimension_semantics=("parallel",),
            vmem_limit_bytes=_VMEM_LIMIT),
    )(x, w1, b1, w2, b2, w3, b3)
    return out


# ---------------------------------------------------------------------------
# Parameters (deterministic synthetic init, PyTorch-like uniform(+-1/sqrt(fan_in)))
# ---------------------------------------------------------------------------
def init_params(key):
    """Parameters in PyTorch layout."""
    def uniform(k, shape, fan_in):
        bound = 1.0 / jnp.sqrt(jnp.float32(fan_in))
        return jax.random.uniform(k, shape, jnp.float32, -bound, bound)

    ks = jax.random.split(key, 10)
    return {
        "conv1_w": uniform(ks[0], (6, 3, 5, 5), 3 * 5 * 5),
        "conv1_b": uniform(ks[1], (6,), 3 * 5 * 5),
        "conv2_w": uniform(ks[2], (16, 6, 5, 5), 6 * 5 * 5),
        "conv2_b": uniform(ks[3], (16,), 6 * 5 * 5),
        "fc1_w": uniform(ks[4], (120, 400), 400),
        "fc1_b": uniform(ks[5], (120,), 400),
        "fc2_w": uniform(ks[6], (84, 120), 120),
        "fc2_b": uniform(ks[7], (84,), 120),
        "fc3_w": uniform(ks[8], (10, 84), 84),
        "fc3_b": uniform(ks[9], (10,), 84),
    }


def prepare_params(p):
    """One-time reshape / re-order / zero-pad-to-128-lanes / bf16-cast of all weights.
    Contraction dims stay at their REAL sizes (75 / 150 / 400 / 128 / 128)."""
    act, L = ACT_DTYPE, LANES

    def pad_bias(b):
        return jnp.pad(b, (0, L - b.shape[0])).reshape(1, L).astype(jnp.float32)

    # conv1: (6,3,5,5) -> (75, 6) rows ordered (c, i, j) -> (75, 128)
    w1 = jnp.pad(p["conv1_w"].reshape(6, 75).T, ((0, 0), (0, L - 6))).astype(act)
    # conv2: (16,6,5,5) -> (150, 16) -> (150, 128)   (real 6 input channels only)
    w2 = jnp.pad(p["conv2_w"].reshape(16, 150).T, ((0, 0), (0, L - 16))).astype(act)

    # fc1: re-order PyTorch's (c,h,w) flatten -> our NHWC (h,w,c) flatten, K = 400
    fw1 = p["fc1_w"].reshape(120, 16, 5, 5).transpose(2, 3, 1, 0).reshape(400, 120)
    fw1 = jnp.pad(fw1, ((0, 0), (0, L - 120))).astype(act)
    fw2 = jnp.pad(p["fc2_w"].T, ((0, L - 120), (0, L - 84))).astype(act)
    fw3 = jnp.pad(p["fc3_w"].T, ((0, L - 84), (0, L - 10))).astype(act)

    return {
        "w1": w1, "b1": pad_bias(p["conv1_b"]),
        "w2": w2, "b2": pad_bias(p["conv2_b"]),
        "fw1": fw1, "fb1": pad_bias(p["fc1_b"]),
        "fw2": fw2, "fb2": pad_bias(p["fc2_b"]),
        "fw3": fw3, "fb3": pad_bias(p["fc3_b"]),
    }


# ---------------------------------------------------------------------------
# Forward pass (matches PyTorch Net.forward)
# ---------------------------------------------------------------------------
@jax.jit
def net_forward(p, x):
    """x: (B, 3, 32, 32) NCHW float32 -> (B, 10) float32 logits."""
    x = jnp.transpose(x, (0, 2, 3, 1)).astype(ACT_DTYPE)             # NHWC, once
    x = conv_relu_pool_pallas(x, p["w1"], p["b1"], kh=5, kw=5)       # (B,14,14,128)
    x = conv_relu_pool_pallas(x[..., :6], p["w2"], p["b2"],          # real 6 channels
                              kh=5, kw=5)                            # (B, 5, 5,128)
    B = x.shape[0]
    xf = x[..., :16].reshape(B, 5 * 5 * 16)                          # (B,400) real feats
    out = fc_head_pallas(xf, p["fw1"], p["fb1"], p["fw2"], p["fb2"],
                         p["fw3"], p["fb3"])                         # (B,128) f32
    return out[:, :10]                                               # final slice


def net_forward_reference(raw, x):
    """Pure-XLA float32 reference matching the PyTorch module (layout sanity check)."""
    dn = ("NCHW", "OIHW", "NCHW")
    y = jax.lax.conv_general_dilated(x, raw["conv1_w"], (1, 1), "VALID",
                                     dimension_numbers=dn)
    y = jax.nn.relu(y + raw["conv1_b"][None, :, None, None])
    y = jax.lax.reduce_window(y, -jnp.inf, jax.lax.max,
                              (1, 1, 2, 2), (1, 1, 2, 2), "VALID")
    y = jax.lax.conv_general_dilated(y, raw["conv2_w"], (1, 1), "VALID",
                                     dimension_numbers=dn)
    y = jax.nn.relu(y + raw["conv2_b"][None, :, None, None])
    y = jax.lax.reduce_window(y, -jnp.inf, jax.lax.max,
                              (1, 1, 2, 2), (1, 1, 2, 2), "VALID")
    y = y.reshape(y.shape[0], -1)
    y = jax.nn.relu(y @ raw["fc1_w"].T + raw["fc1_b"])
    y = jax.nn.relu(y @ raw["fc2_w"].T + raw["fc2_b"])
    return y @ raw["fc3_w"].T + raw["fc3_b"]


if __name__ == "__main__":
    key = jax.random.PRNGKey(0)
    k_param, k_x = jax.random.split(key)
    raw_params = init_params(k_param)
    params = prepare_params(raw_params)
    x = jax.random.normal(k_x, (2, 3, 32, 32), jnp.float32)

    out = jax.block_until_ready(net_forward(params, x))
    assert out.shape == (2, 10), out.shape
    assert out.dtype == jnp.float32

    # Layout/ordering sanity check vs. a pure-XLA f32 reference (bf16 activations ->
    # loose tolerance; a structural bug would give errors the size of the logits).
    ref = net_forward_reference(raw_params, x)
    err = float(jnp.max(jnp.abs(out - ref)))
    assert err < 0.1, f"max |pallas - reference| = {err}"

    print("KERNEL_OK")
</pallas_src>

<mosaic_0001>
module attributes {stable_mosaic.version = 11 : i64} {
  func.func @conv_bias_relu_pool_kernel(%arg0: i32, %arg1: memref<672x75xbf16, #tpu.memory_space<vmem>>, %arg2: memref<75x128xbf16, #tpu.memory_space<vmem>>, %arg3: memref<1x128xf32, #tpu.memory_space<vmem>>, %arg4: memref<168x128xbf16, #tpu.memory_space<vmem>>, %arg5: memref<672x128xf32, #tpu.memory_space<vmem>>) attributes {dimension_semantics = [#tpu.dimension_semantics<parallel>], iteration_bounds = array<i64: 3>, scalar_prefetch = 0 : i64, scratch_operands = 1 : i64, tpu.core_type = #tpu.core_type<tc>, window_params = [{transform_indices = @transform_0, window_bounds = array<i64: 672, 75>}, {pipeline_mode = #tpu.pipeline_mode<synchronous>, transform_indices = @transform_1, window_bounds = array<i64: 75, 128>}, {pipeline_mode = #tpu.pipeline_mode<synchronous>, transform_indices = @transform_2, window_bounds = array<i64: 1, 128>}, {transform_indices = @transform_3, window_bounds = array<i64: 168, 128>}]} {
    %c0 = arith.constant 0 : index
    %c0_0 = arith.constant 0 : index
    %0 = vector.load %arg1[%c0, %c0_0] : memref<672x75xbf16, #tpu.memory_space<vmem>>, vector<672x75xbf16>
    %c0_1 = arith.constant 0 : index
    %c0_2 = arith.constant 0 : index
    %1 = vector.load %arg2[%c0_1, %c0_2] : memref<75x128xbf16, #tpu.memory_space<vmem>>, vector<75x128xbf16>
    %cst = arith.constant dense<0.000000e+00> : vector<672x128xf32>
    %2 = tpu.matmul %0, %1, %cst {dimension_numbers = #tpu.dot_dimension_numbers<[1], [0], [0], [1], [0, 0, 1, 1], [], []>} : vector<672x75xbf16>, vector<75x128xbf16>, vector<672x128xf32> -> vector<672x128xf32>
    %c0_3 = arith.constant 0 : index
    %c0_4 = arith.constant 0 : index
    %3 = vector.load %arg5[%c0_3, %c0_4] : memref<672x128xf32, #tpu.memory_space<vmem>>, vector<672x128xf32>
    tpu.vector_store %arg5[%c0_3, %c0_4], %2 {strides = array<i32>} : memref<672x128xf32, #tpu.memory_space<vmem>>, vector<672x128xf32>,
    %c0_5 = arith.constant 0 : index
    %c0_6 = arith.constant 0 : index
    %4 = vector.load %arg3[%c0_5, %c0_6] : memref<1x128xf32, #tpu.memory_space<vmem>>, vector<1x128xf32>
    %c0_7 = arith.constant 0 : index
    %c0_8 = arith.constant 0 : index
    %5 = tpu.strided_load %arg5[%c0_7, %c0_8] {strides = array<i32: 2, 1>} : memref<672x128xf32, #tpu.memory_space<vmem>>, vector<14x128xf32>
    %c1 = arith.constant 1 : index
    %c0_9 = arith.constant 0 : index
    %6 = tpu.strided_load %arg5[%c1, %c0_9] {strides = array<i32: 2, 1>} : memref<672x128xf32, #tpu.memory_space<vmem>>, vector<14x128xf32>
    %c28 = arith.constant 28 : index
    %c0_10 = arith.constant 0 : index
    %7 = tpu.strided_load %arg5[%c28, %c0_10] {strides = array<i32: 2, 1>} : memref<672x128xf32, #tpu.memory_space<vmem>>, vector<14x128xf32>
    %c29 = arith.constant 29 : index
    %c0_11 = arith.constant 0 : index
    %8 = tpu.strided_load %arg5[%c29, %c0_11] {strides = array<i32: 2, 1>} : memref<672x128xf32, #tpu.memory_space<vmem>>, vector<14x128xf32>
    %9 = arith.maximumf %5, %6 : vector<14x128xf32>
    %10 = arith.maximumf %7, %8 : vector<14x128xf32>
    %11 = arith.maximumf %9, %10 : vector<14x128xf32>
    %12 = vector.broadcast %4 : vector<1x128xf32> to vector<14x128xf32>
    %13 = arith.addf %11, %12 : vector<14x128xf32>
    %cst_12 = arith.constant 0.000000e+00 : f32
    %14 = vector.broadcast %cst_12 : f32 to vector<14x128xf32>
    %15 = arith.maximumf %13, %14 : vector<14x128xf32>
    %16 = arith.truncf %15 : vector<14x128xf32> to vector<14x128xbf16>
    %c0_13 = arith.constant 0 : index
    %c0_14 = arith.constant 0 : index
    %17 = vector.load %arg4[%c0_13, %c0_14] : memref<168x128xbf16, #tpu.memory_space<vmem>>, vector<14x128xbf16>
    tpu.vector_store %arg4[%c0_13, %c0_14], %16 {strides = array<i32>} : memref<168x128xbf16, #tpu.memory_space<vmem>>, vector<14x128xbf16>,
    %c56 = arith.constant 56 : index
    %c0_15 = arith.constant 0 : index
    %18 = tpu.strided_load %arg5[%c56, %c0_15] {strides = array<i32: 2, 1>} : memref<672x128xf32, #tpu.memory_space<vmem>>, vector<14x128xf32>
    %c57 = arith.constant 57 : index
    %c0_16 = arith.constant 0 : index
    %19 = tpu.strided_load %arg5[%c57, %c0_16] {strides = array<i32: 2, 1>} : memref<672x128xf32, #tpu.memory_space<vmem>>, vector<14x128xf32>
    %c84 = arith.constant 84 : index
    %c0_17 = arith.constant 0 : index
    %20 = tpu.strided_load %arg5[%c84, %c0_17] {strides = array<i32: 2, 1>} : memref<672x128xf32, #tpu.memory_space<vmem>>, vector<14x128xf32>
    %c85 = arith.constant 85 : index
    %c0_18 = arith.constant 0 : index
    %21 = tpu.strided_load %arg5[%c85, %c0_18] {strides = array<i32: 2, 1>} : memref<672x128xf32, #tpu.memory_space<vmem>>, vector<14x128xf32>
    %22 = arith.maximumf %18, %19 : vector<14x128xf32>
    %23 = arith.maximumf %20, %21 : vector<14x128xf32>
    %24 = arith.maximumf %22, %23 : vector<14x128xf32>
    %25 = vector.broadcast %4 : vector<1x128xf32> to vector<14x128xf32>
    %26 = arith.addf %24, %25 : vector<14x128xf32>
    %cst_19 = arith.constant 0.000000e+00 : f32
    %27 = vector.broadcast %cst_19 : f32 to vector<14x128xf32>
    %28 = arith.maximumf %26, %27 : vector<14x128xf32>
    %29 = arith.truncf %28 : vector<14x128xf32> to vector<14x128xbf16>
    %c14 = arith.constant 14 : index
    %c0_20 = arith.constant 0 : index
    %30 = vector.load %arg4[%c14, %c0_20] : memref<168x128xbf16, #tpu.memory_space<vmem>>, vector<14x128xbf16>
    tpu.vector_store %arg4[%c14, %c0_20], %29 {strides = array<i32>} : memref<168x128xbf16, #tpu.memory_space<vmem>>, vector<14x128xbf16>,
    %c112 = arith.constant 112 : index
    %c0_21 = arith.constant 0 : index
    %31 = tpu.strided_load %arg5[%c112, %c0_21] {strides = array<i32: 2, 1>} : memref<672x128xf32, #tpu.memory_space<vmem>>, vector<14x128xf32>
    %c113 = arith.constant 113 : index
    %c0_22 = arith.constant 0 : index
    %32 = tpu.strided_load %arg5[%c113, %c0_22] {strides = array<i32: 2, 1>} : memref<672x128xf32, #tpu.memory_space<vmem>>, vector<14x128xf32>
    %c140 = arith.constant 140 : index
    %c0_23 = arith.constant 0 : index
    %33 = tpu.strided_load %arg5[%c140, %c0_23] {strides = array<i32: 2, 1>} : memref<672x128xf32, #tpu.memory_space<vmem>>, vector<14x128xf32>
    %c141 = arith.constant 141 : index
    %c0_24 = arith.constant 0 : index
    %34 = tpu.strided_load %arg5[%c141, %c0_24] {strides = array<i32: 2, 1>} : memref<672x128xf32, #tpu.memory_space<vmem>>, vector<14x128xf32>
    %35 = arith.maximumf %31, %32 : vector<14x128xf32>
    %36 = arith.maximumf %33, %34 : vector<14x128xf32>
    %37 = arith.maximumf %35, %36 : vector<14x128xf32>
    %38 = vector.broadcast %4 : vector<1x128xf32> to vector<14x128xf32>
    %39 = arith.addf %37, %38 : vector<14x128xf32>
    %cst_25 = arith.constant 0.000000e+00 : f32
    %40 = vector.broadcast %cst_25 : f32 to vector<14x128xf32>
    %41 = arith.maximumf %39, %40 : vector<14x128xf32>
    %42 = arith.truncf %41 : vector<14x128xf32> to vector<14x128xbf16>
    %c28_26 = arith.constant 28 : index
    %c0_27 = arith.constant 0 : index
    %43 = vector.load %arg4[%c28_26, %c0_27] : memref<168x128xbf16, #tpu.memory_space<vmem>>, vector<14x128xbf16>
    tpu.vector_store %arg4[%c28_26, %c0_27], %42 {strides = array<i32>} : memref<168x128xbf16, #tpu.memory_space<vmem>>, vector<14x128xbf16>,
    %c168 = arith.constant 168 : index
    %c0_28 = arith.constant 0 : index
    %44 = tpu.strided_load %arg5[%c168, %c0_28] {strides = array<i32: 2, 1>} : memref<672x128xf32, #tpu.memory_space<vmem>>, vector<14x128xf32>
    %c169 = arith.constant 169 : index
    %c0_29 = arith.constant 0 : index
    %45 = tpu.strided_load %arg5[%c169, %c0_29] {strides = array<i32: 2, 1>} : memref<672x128xf32, #tpu.memory_space<vmem>>, vector<14x128xf32>
    %c196 = arith.constant 196 : index
    %c0_30 = arith.constant 0 : index
    %46 = tpu.strided_load %arg5[%c196, %c0_30] {strides = array<i32: 2, 1>} : memref<672x128xf32, #tpu.memory_space<vmem>>, vector<14x128xf32>
    %c197 = arith.constant 197 : index
    %c0_31 = arith.constant 0 : index
    %47 = tpu.strided_load %arg5[%c197, %c0_31] {strides = array<i32: 2, 1>} : memref<672x128xf32, #tpu.memory_space<vmem>>, vector<14x128xf32>
    %48 = arith.maximumf %44, %45 : vector<14x128xf32>
    %49 = arith.maximumf %46, %47 : vector<14x128xf32>
    %50 = arith.maximumf %48, %49 : vector<14x128xf32>
    %51 = vector.broadcast %4 : vector<1x128xf32> to vector<14x128xf32>
    %52 = arith.addf %50, %51 : vector<14x128xf32>
    %cst_32 = arith.constant 0.000000e+00 : f32
    %53 = vector.broadcast %cst_32 : f32 to vector<14x128xf32>
    %54 = arith.maximumf %52, %53 : vector<14x128xf32>
    %55 = arith.truncf %54 : vector<14x128xf32> to vector<14x128xbf16>
    %c42 = arith.constant 42 : index
    %c0_33 = arith.constant 0 : index
    %56 = vector.load %arg4[%c42, %c0_33] : memref<168x128xbf16, #tpu.memory_space<vmem>>, vector<14x128xbf16>
    tpu.vector_store %arg4[%c42, %c0_33], %55 {strides = array<i32>} : memref<168x128xbf16, #tpu.memory_space<vmem>>, vector<14x128xbf16>,
    %c224 = arith.constant 224 : index
    %c0_34 = arith.constant 0 : index
    %57 = tpu.strided_load %arg5[%c224, %c0_34] {strides = array<i32: 2, 1>} : memref<672x128xf32, #tpu.memory_space<vmem>>, vector<14x128xf32>
    %c225 = arith.constant 225 : index
    %c0_35 = arith.constant 0 : index
    %58 = tpu.strided_load %arg5[%c225, %c0_35] {strides = array<i32: 2, 1>} : memref<672x128xf32, #tpu.memory_space<vmem>>, vector<14x128xf32>
    %c252 = arith.constant 252 : index
    %c0_36 = arith.constant 0 : index
    %59 = tpu.strided_load %arg5[%c252, %c0_36] {strides = array<i32: 2, 1>} : memref<672x128xf32, #tpu.memory_space<vmem>>, vector<14x128xf32>
    %c253 = arith.constant 253 : index
    %c0_37 = arith.constant 0 : index
    %60 = tpu.strided_load %arg5[%c253, %c0_37] {strides = array<i32: 2, 1>} : memref<672x128xf32, #tpu.memory_space<vmem>>, vector<14x128xf32>
    %61 = arith.maximumf %57, %58 : vector<14x128xf32>
    %62 = arith.maximumf %59, %60 : vector<14x128xf32>
    %63 = arith.maximumf %61, %62 : vector<14x128xf32>
    %64 = vector.broadcast %4 : vector<1x128xf32> to vector<14x128xf32>
    %65 = arith.addf %63, %64 : vector<14x128xf32>
    %cst_38 = arith.constant 0.000000e+00 : f32
    %66 = vector.broadcast %cst_38 : f32 to vector<14x128xf32>
    %67 = arith.maximumf %65, %66 : vector<14x128xf32>
    %68 = arith.truncf %67 : vector<14x128xf32> to vector<14x128xbf16>
    %c56_39 = arith.constant 56 : index
    %c0_40 = arith.constant 0 : index
    %69 = vector.load %arg4[%c56_39, %c0_40] : memref<168x128xbf16, #tpu.memory_space<vmem>>, vector<14x128xbf16>
    tpu.vector_store %arg4[%c56_39, %c0_40], %68 {strides = array<i32>} : memref<168x128xbf16, #tpu.memory_space<vmem>>, vector<14x128xbf16>,
    %c280 = arith.constant 280 : index
    %c0_41 = arith.constant 0 : index
    %70 = tpu.strided_load %arg5[%c280, %c0_41] {strides = array<i32: 2, 1>} : memref<672x128xf32, #tpu.memory_space<vmem>>, vector<14x128xf32>
    %c281 = arith.constant 281 : index
    %c0_42 = arith.constant 0 : index
    %71 = tpu.strided_load %arg5[%c281, %c0_42] {strides = array<i32: 2, 1>} : memref<672x128xf32, #tpu.memory_space<vmem>>, vector<14x128xf32>
    %c308 = arith.constant 308 : index
    %c0_43 = arith.constant 0 : index
    %72 = tpu.strided_load %arg5[%c308, %c0_43] {strides = array<i32: 2, 1>} : memref<672x128xf32, #tpu.memory_space<vmem>>, vector<14x128xf32>
    %c309 = arith.constant 309 : index
    %c0_44 = arith.constant 0 : index
    %73 = tpu.strided_load %arg5[%c309, %c0_44] {strides = array<i32: 2, 1>} : memref<672x128xf32, #tpu.memory_space<vmem>>, vector<14x128xf32>
    %74 = arith.maximumf %70, %71 : vector<14x128xf32>
    %75 = arith.maximumf %72, %73 : vector<14x128xf32>
    %76 = arith.maximumf %74, %75 : vector<14x128xf32>
    %77 = vector.broadcast %4 : vector<1x128xf32> to vector<14x128xf32>
    %78 = arith.addf %76, %77 : vector<14x128xf32>
    %cst_45 = arith.constant 0.000000e+00 : f32
    %79 = vector.broadcast %cst_45 : f32 to vector<14x128xf32>
    %80 = arith.maximumf %78, %79 : vector<14x128xf32>
    %81 = arith.truncf %80 : vector<14x128xf32> to vector<14x128xbf16>
    %c70 = arith.constant 70 : index
    %c0_46 = arith.constant 0 : index
    %82 = vector.load %arg4[%c70, %c0_46] : memref<168x128xbf16, #tpu.memory_space<vmem>>, vector<14x128xbf16>
    tpu.vector_store %arg4[%c70, %c0_46], %81 {strides = array<i32>} : memref<168x128xbf16, #tpu.memory_space<vmem>>, vector<14x128xbf16>,
    %c336 = arith.constant 336 : index
    %c0_47 = arith.constant 0 : index
    %83 = tpu.strided_load %arg5[%c336, %c0_47] {strides = array<i32: 2, 1>} : memref<672x128xf32, #tpu.memory_space<vmem>>, vector<14x128xf32>
    %c337 = arith.constant 337 : index
    %c0_48 = arith.constant 0 : index
    %84 = tpu.strided_load %arg5[%c337, %c0_48] {strides = array<i32: 2, 1>} : memref<672x128xf32, #tpu.memory_space<vmem>>, vector<14x128xf32>
    %c364 = arith.constant 364 : index
    %c0_49 = arith.constant 0 : index
    %85 = tpu.strided_load %arg5[%c364, %c0_49] {strides = array<i32: 2, 1>} : memref<672x128xf32, #tpu.memory_space<vmem>>, vector<14x128xf32>
    %c365 = arith.constant 365 : index
    %c0_50 = arith.constant 0 : index
    %86 = tpu.strided_load %arg5[%c365, %c0_50] {strides = array<i32: 2, 1>} : memref<672x128xf32, #tpu.memory_space<vmem>>, vector<14x128xf32>
    %87 = arith.maximumf %83, %84 : vector<14x128xf32>
    %88 = arith.maximumf %85, %86 : vector<14x128xf32>
    %89 = arith.maximumf %87, %88 : vector<14x128xf32>
    %90 = vector.broadcast %4 : vector<1x128xf32> to vector<14x128xf32>
    %91 = arith.addf %89, %90 : vector<14x128xf32>
    %cst_51 = arith.constant 0.000000e+00 : f32
    %92 = vector.broadcast %cst_51 : f32 to vector<14x128xf32>
    %93 = arith.maximumf %91, %92 : vector<14x128xf32>
    %94 = arith.truncf %93 : vector<14x128xf32> to vector<14x128xbf16>
    %c84_52 = arith.constant 84 : index
    %c0_53 = arith.constant 0 : index
    %95 = vector.load %arg4[%c84_52, %c0_53] : memref<168x128xbf16, #tpu.memory_space<vmem>>, vector<14x128xbf16>
    tpu.vector_store %arg4[%c84_52, %c0_53], %94 {strides = array<i32>} : memref<168x128xbf16, #tpu.memory_space<vmem>>, vector<14x128xbf16>,
    %c392 = arith.constant 392 : index
    %c0_54 = arith.constant 0 : index
    %96 = tpu.strided_load %arg5[%c392, %c0_54] {strides = array<i32: 2, 1>} : memref<672x128xf32, #tpu.memory_space<vmem>>, vector<14x128xf32>
    %c393 = arith.constant 393 : index
    %c0_55 = arith.constant 0 : index
    %97 = tpu.strided_load %arg5[%c393, %c0_55] {strides = array<i32: 2, 1>} : memref<672x128xf32, #tpu.memory_space<vmem>>, vector<14x128xf32>
    %c420 = arith.constant 420 : index
    %c0_56 = arith.constant 0 : index
    %98 = tpu.strided_load %arg5[%c420, %c0_56] {strides = array<i32: 2, 1>} : memref<672x128xf32, #tpu.memory_space<vmem>>, vector<14x128xf32>
    %c421 = arith.constant 421 : index
    %c0_57 = arith.constant 0 : index
    %99 = tpu.strided_load %arg5[%c421, %c0_57] {strides = array<i32: 2, 1>} : memref<672x128xf32, #tpu.memory_space<vmem>>, vector<14x128xf32>
    %100 = arith.maximumf %96, %97 : vector<14x128xf32>
    %101 = arith.maximumf %98, %99 : vector<14x128xf32>
    %102 = arith.maximumf %100, %101 : vector<14x128xf32>
    %103 = vector.broadcast %4 : vector<1x128xf32> to vector<14x128xf32>
    %104 = arith.addf %102, %103 : vector<14x128xf32>
    %cst_58 = arith.constant 0.000000e+00 : f32
    %105 = vector.broadcast %cst_58 : f32 to vector<14x128xf32>
    %106 = arith.maximumf %104, %105 : vector<14x128xf32>
    %107 = arith.truncf %106 : vector<14x128xf32> to vector<14x128xbf16>
    %c98 = arith.constant 98 : index
    %c0_59 = arith.constant 0 : index
    %108 = vector.load %arg4[%c98, %c0_59] : memref<168x128xbf16, #tpu.memory_space<vmem>>, vector<14x128xbf16>
    tpu.vector_store %arg4[%c98, %c0_59], %107 {strides = array<i32>} : memref<168x128xbf16, #tpu.memory_space<vmem>>, vector<14x128xbf16>,
    %c448 = arith.constant 448 : index
    %c0_60 = arith.constant 0 : index
    %109 = tpu.strided_load %arg5[%c448, %c0_60] {strides = array<i32: 2, 1>} : memref<672x128xf32, #tpu.memory_space<vmem>>, vector<14x128xf32>
    %c449 = arith.constant 449 : index
    %c0_61 = arith.constant 0 : index
    %110 = tpu.strided_load %arg5[%c449, %c0_61] {strides = array<i32: 2, 1>} : memref<672x128xf32, #tpu.memory_space<vmem>>, vector<14x128xf32>
    %c476 = arith.constant 476 : index
    %c0_62 = arith.constant 0 : index
    %111 = tpu.strided_load %arg5[%c476, %c0_62] {strides = array<i32: 2, 1>} : memref<672x128xf32, #tpu.memory_space<vmem>>, vector<14x128xf32>
    %c477 = arith.constant 477 : index
    %c0_63 = arith.constant 0 : index
    %112 = tpu.strided_load %arg5[%c477, %c0_63] {strides = array<i32: 2, 1>} : memref<672x128xf32, #tpu.memory_space<vmem>>, vector<14x128xf32>
    %113 = arith.maximumf %109, %110 : vector<14x128xf32>
    %114 = arith.maximumf %111, %112 : vector<14x128xf32>
    %115 = arith.maximumf %113, %114 : vector<14x128xf32>
    %116 = vector.broadcast %4 : vector<1x128xf32> to vector<14x128xf32>
    %117 = arith.addf %115, %116 : vector<14x128xf32>
    %cst_64 = arith.constant 0.000000e+00 : f32
    %118 = vector.broadcast %cst_64 : f32 to vector<14x128xf32>
    %119 = arith.maximumf %117, %118 : vector<14x128xf32>
    %120 = arith.truncf %119 : vector<14x128xf32> to vector<14x128xbf16>
    %c112_65 = arith.constant 112 : index
    %c0_66 = arith.constant 0 : index
    %121 = vector.load %arg4[%c112_65, %c0_66] : memref<168x128xbf16, #tpu.memory_space<vmem>>, vector<14x128xbf16>
    tpu.vector_store %arg4[%c112_65, %c0_66], %120 {strides = array<i32>} : memref<168x128xbf16, #tpu.memory_space<vmem>>, vector<14x128xbf16>,
    %c504 = arith.constant 504 : index
    %c0_67 = arith.constant 0 : index
    %122 = tpu.strided_load %arg5[%c504, %c0_67] {strides = array<i32: 2, 1>} : memref<672x128xf32, #tpu.memory_space<vmem>>, vector<14x128xf32>
    %c505 = arith.constant 505 : index
    %c0_68 = arith.constant 0 : index
    %123 = tpu.strided_load %arg5[%c505, %c0_68] {strides = array<i32: 2, 1>} : memref<672x128xf32, #tpu.memory_space<vmem>>, vector<14x128xf32>
    %c532 = arith.constant 532 : index
    %c0_69 = arith.constant 0 : index
    %124 = tpu.strided_load %arg5[%c532, %c0_69] {strides = array<i32: 2, 1>} : memref<672x128xf32, #tpu.memory_space<vmem>>, vector<14x128xf32>
    %c533 = arith.constant 533 : index
    %c0_70 = arith.constant 0 : index
    %125 = tpu.strided_load %arg5[%c533, %c0_70] {strides = array<i32: 2, 1>} : memref<672x128xf32, #tpu.memory_space<vmem>>, vector<14x128xf32>
    %126 = arith.maximumf %122, %123 : vector<14x128xf32>
    %127 = arith.maximumf %124, %125 : vector<14x128xf32>
    %128 = arith.maximumf %126, %127 : vector<14x128xf32>
    %129 = vector.broadcast %4 : vector<1x128xf32> to vector<14x128xf32>
    %130 = arith.addf %128, %129 : vector<14x128xf32>
    %cst_71 = arith.constant 0.000000e+00 : f32
    %131 = vector.broadcast %cst_71 : f32 to vector<14x128xf32>
    %132 = arith.maximumf %130, %131 : vector<14x128xf32>
    %133 = arith.truncf %132 : vector<14x128xf32> to vector<14x128xbf16>
    %c126 = arith.constant 126 : index
    %c0_72 = arith.constant 0 : index
    %134 = vector.load %arg4[%c126, %c0_72] : memref<168x128xbf16, #tpu.memory_space<vmem>>, vector<14x128xbf16>
    tpu.vector_store %arg4[%c126, %c0_72], %133 {strides = array<i32>} : memref<168x128xbf16, #tpu.memory_space<vmem>>, vector<14x128xbf16>,
    %c560 = arith.constant 560 : index
    %c0_73 = arith.constant 0 : index
    %135 = tpu.strided_load %arg5[%c560, %c0_73] {strides = array<i32: 2, 1>} : memref<672x128xf32, #tpu.memory_space<vmem>>, vector<14x128xf32>
    %c561 = arith.constant 561 : index
    %c0_74 = arith.constant 0 : index
    %136 = tpu.strided_load %arg5[%c561, %c0_74] {strides = array<i32: 2, 1>} : memref<672x128xf32, #tpu.memory_space<vmem>>, vector<14x128xf32>
    %c588 = arith.constant 588 : index
    %c0_75 = arith.constant 0 : index
    %137 = tpu.strided_load %arg5[%c588, %c0_75] {strides = array<i32: 2, 1>} : memref<672x128xf32, #tpu.memory_space<vmem>>, vector<14x128xf32>
    %c589 = arith.constant 589 : index
    %c0_76 = arith.constant 0 : index
    %138 = tpu.strided_load %arg5[%c589, %c0_76] {strides = array<i32: 2, 1>} : memref<672x128xf32, #tpu.memory_space<vmem>>, vector<14x128xf32>
    %139 = arith.maximumf %135, %136 : vector<14x128xf32>
    %140 = arith.maximumf %137, %138 : vector<14x128xf32>
    %141 = arith.maximumf %139, %140 : vector<14x128xf32>
    %142 = vector.broadcast %4 : vector<1x128xf32> to vector<14x128xf32>
    %143 = arith.addf %141, %142 : vector<14x128xf32>
    %cst_77 = arith.constant 0.000000e+00 : f32
    %144 = vector.broadcast %cst_77 : f32 to vector<14x128xf32>
    %145 = arith.maximumf %143, %144 : vector<14x128xf32>
    %146 = arith.truncf %145 : vector<14x128xf32> to vector<14x128xbf16>
    %c140_78 = arith.constant 140 : index
    %c0_79 = arith.constant 0 : index
    %147 = vector.load %arg4[%c140_78, %c0_79] : memref<168x128xbf16, #tpu.memory_space<vmem>>, vector<14x128xbf16>
    tpu.vector_store %arg4[%c140_78, %c0_79], %146 {strides = array<i32>} : memref<168x128xbf16, #tpu.memory_space<vmem>>, vector<14x128xbf16>,
    %c616 = arith.constant 616 : index
    %c0_80 = arith.constant 0 : index
    %148 = tpu.strided_load %arg5[%c616, %c0_80] {strides = array<i32: 2, 1>} : memref<672x128xf32, #tpu.memory_space<vmem>>, vector<14x128xf32>
    %c617 = arith.constant 617 : index
    %c0_81 = arith.constant 0 : index
    %149 = tpu.strided_load %arg5[%c617, %c0_81] {strides = array<i32: 2, 1>} : memref<672x128xf32, #tpu.memory_space<vmem>>, vector<14x128xf32>
    %c644 = arith.constant 644 : index
    %c0_82 = arith.constant 0 : index
    %150 = tpu.strided_load %arg5[%c644, %c0_82] {strides = array<i32: 2, 1>} : memref<672x128xf32, #tpu.memory_space<vmem>>, vector<14x128xf32>
    %c645 = arith.constant 645 : index
    %c0_83 = arith.constant 0 : index
    %151 = tpu.strided_load %arg5[%c645, %c0_83] {strides = array<i32: 2, 1>} : memref<672x128xf32, #tpu.memory_space<vmem>>, vector<14x128xf32>
    %152 = arith.maximumf %148, %149 : vector<14x128xf32>
    %153 = arith.maximumf %150, %151 : vector<14x128xf32>
    %154 = arith.maximumf %152, %153 : vector<14x128xf32>
    %155 = vector.broadcast %4 : vector<1x128xf32> to vector<14x128xf32>
    %156 = arith.addf %154, %155 : vector<14x128xf32>
    %cst_84 = arith.constant 0.000000e+00 : f32
    %157 = vector.broadcast %cst_84 : f32 to vector<14x128xf32>
    %158 = arith.maximumf %156, %157 : vector<14x128xf32>
    %159 = arith.truncf %158 : vector<14x128xf32> to vector<14x128xbf16>
    %c154 = arith.constant 154 : index
    %c0_85 = arith.constant 0 : index
    %160 = vector.load %arg4[%c154, %c0_85] : memref<168x128xbf16, #tpu.memory_space<vmem>>, vector<14x128xbf16>
    tpu.vector_store %arg4[%c154, %c0_85], %159 {strides = array<i32>} : memref<168x128xbf16, #tpu.memory_space<vmem>>, vector<14x128xbf16>,
    return
  }
  func.func @transform_0(%arg0: i32) -> (i32, i32) {
    %c0_i32 = arith.constant 0 : i32
    %c0_i32_0 = arith.constant 0 : i32
    return %arg0, %c0_i32 : i32, i32
  }
  func.func @transform_1(%arg0: i32) -> (i32, i32) {
    %c0_i32 = arith.constant 0 : i32
    %c0_i32_0 = arith.constant 0 : i32
    %c0_i32_1 = arith.constant 0 : i32
    return %c0_i32, %c0_i32_0 : i32, i32
  }
  func.func @transform_2(%arg0: i32) -> (i32, i32) {
    %c0_i32 = arith.constant 0 : i32
    %c0_i32_0 = arith.constant 0 : i32
    %c0_i32_1 = arith.constant 0 : i32
    return %c0_i32, %c0_i32_0 : i32, i32
  }
  func.func @transform_3(%arg0: i32) -> (i32, i32) {
    %c0_i32 = arith.constant 0 : i32
    %c0_i32_0 = arith.constant 0 : i32
    return %arg0, %c0_i32 : i32, i32
  }
}

module attributes {stable_mosaic.version = 11 : i64} {
  func.func @conv_bias_relu_pool_kernel(%arg0: i32, %arg1: memref<160x150xbf16, #tpu.memory_space<vmem>>, %arg2: memref<150x128xbf16, #tpu.memory_space<vmem>>, %arg3: memref<1x128xf32, #tpu.memory_space<vmem>>, %arg4: memref<40x128xbf16, #tpu.memory_space<vmem>>, %arg5: memref<160x128xf32, #tpu.memory_space<vmem>>) attributes {dimension_semantics = [#tpu.dimension_semantics<parallel>], iteration_bounds = array<i64: 2>, scalar_prefetch = 0 : i64, scratch_operands = 1 : i64, tpu.core_type = #tpu.core_type<tc>, window_params = [{transform_indices = @transform_0, window_bounds = array<i64: 160, 150>}, {pipeline_mode = #tpu.pipeline_mode<synchronous>, transform_indices = @transform_1, window_bounds = array<i64: 150, 128>}, {pipeline_mode = #tpu.pipeline_mode<synchronous>, transform_indices = @transform_2, window_bounds = array<i64: 1, 128>}, {transform_indices = @transform_3, window_bounds = array<i64: 40, 128>}]} {
    %c0 = arith.constant 0 : index
    %c0_0 = arith.constant 0 : index
    %0 = vector.load %arg1[%c0, %c0_0] : memref<160x150xbf16, #tpu.memory_space<vmem>>, vector<160x150xbf16>
    %c0_1 = arith.constant 0 : index
    %c0_2 = arith.constant 0 : index
    %1 = vector.load %arg2[%c0_1, %c0_2] : memref<150x128xbf16, #tpu.memory_space<vmem>>, vector<150x128xbf16>
    %cst = arith.constant dense<0.000000e+00> : vector<160x128xf32>
    %2 = tpu.matmul %0, %1, %cst {dimension_numbers = #tpu.dot_dimension_numbers<[1], [0], [0], [1], [0, 0, 1, 1], [], []>} : vector<160x150xbf16>, vector<150x128xbf16>, vector<160x128xf32> -> vector<160x128xf32>
    %c0_3 = arith.constant 0 : index
    %c0_4 = arith.constant 0 : index
    %3 = vector.load %arg5[%c0_3, %c0_4] : memref<160x128xf32, #tpu.memory_space<vmem>>, vector<160x128xf32>
    tpu.vector_store %arg5[%c0_3, %c0_4], %2 {strides = array<i32>} : memref<160x128xf32, #tpu.memory_space<vmem>>, vector<160x128xf32>,
    %c0_5 = arith.constant 0 : index
    %c0_6 = arith.constant 0 : index
    %4 = vector.load %arg3[%c0_5, %c0_6] : memref<1x128xf32, #tpu.memory_space<vmem>>, vector<1x128xf32>
    %c0_7 = arith.constant 0 : index
    %c0_8 = arith.constant 0 : index
    %5 = tpu.strided_load %arg5[%c0_7, %c0_8] {strides = array<i32: 2, 1>} : memref<160x128xf32, #tpu.memory_space<vmem>>, vector<5x128xf32>
    %c1 = arith.constant 1 : index
    %c0_9 = arith.constant 0 : index
    %6 = tpu.strided_load %arg5[%c1, %c0_9] {strides = array<i32: 2, 1>} : memref<160x128xf32, #tpu.memory_space<vmem>>, vector<5x128xf32>
    %c10 = arith.constant 10 : index
    %c0_10 = arith.constant 0 : index
    %7 = tpu.strided_load %arg5[%c10, %c0_10] {strides = array<i32: 2, 1>} : memref<160x128xf32, #tpu.memory_space<vmem>>, vector<5x128xf32>
    %c11 = arith.constant 11 : index
    %c0_11 = arith.constant 0 : index
    %8 = tpu.strided_load %arg5[%c11, %c0_11] {strides = array<i32: 2, 1>} : memref<160x128xf32, #tpu.memory_space<vmem>>, vector<5x128xf32>
    %9 = arith.maximumf %5, %6 : vector<5x128xf32>
    %10 = arith.maximumf %7, %8 : vector<5x128xf32>
    %11 = arith.maximumf %9, %10 : vector<5x128xf32>
    %12 = vector.broadcast %4 : vector<1x128xf32> to vector<5x128xf32>
    %13 = arith.addf %11, %12 : vector<5x128xf32>
    %cst_12 = arith.constant 0.000000e+00 : f32
    %14 = vector.broadcast %cst_12 : f32 to vector<5x128xf32>
    %15 = arith.maximumf %13, %14 : vector<5x128xf32>
    %16 = arith.truncf %15 : vector<5x128xf32> to vector<5x128xbf16>
    %c0_13 = arith.constant 0 : index
    %c0_14 = arith.constant 0 : index
    %17 = vector.load %arg4[%c0_13, %c0_14] : memref<40x128xbf16, #tpu.memory_space<vmem>>, vector<5x128xbf16>
    tpu.vector_store %arg4[%c0_13, %c0_14], %16 {strides = array<i32>} : memref<40x128xbf16, #tpu.memory_space<vmem>>, vector<5x128xbf16>,
    %c20 = arith.constant 20 : index
    %c0_15 = arith.constant 0 : index
    %18 = tpu.strided_load %arg5[%c20, %c0_15] {strides = array<i32: 2, 1>} : memref<160x128xf32, #tpu.memory_space<vmem>>, vector<5x128xf32>
    %c21 = arith.constant 21 : index
    %c0_16 = arith.constant 0 : index
    %19 = tpu.strided_load %arg5[%c21, %c0_16] {strides = array<i32: 2, 1>} : memref<160x128xf32, #tpu.memory_space<vmem>>, vector<5x128xf32>
    %c30 = arith.constant 30 : index
    %c0_17 = arith.constant 0 : index
    %20 = tpu.strided_load %arg5[%c30, %c0_17] {strides = array<i32: 2, 1>} : memref<160x128xf32, #tpu.memory_space<vmem>>, vector<5x128xf32>
    %c31 = arith.constant 31 : index
    %c0_18 = arith.constant 0 : index
    %21 = tpu.strided_load %arg5[%c31, %c0_18] {strides = array<i32: 2, 1>} : memref<160x128xf32, #tpu.memory_space<vmem>>, vector<5x128xf32>
    %22 = arith.maximumf %18, %19 : vector<5x128xf32>
    %23 = arith.maximumf %20, %21 : vector<5x128xf32>
    %24 = arith.maximumf %22, %23 : vector<5x128xf32>
    %25 = vector.broadcast %4 : vector<1x128xf32> to vector<5x128xf32>
    %26 = arith.addf %24, %25 : vector<5x128xf32>
    %cst_19 = arith.constant 0.000000e+00 : f32
    %27 = vector.broadcast %cst_19 : f32 to vector<5x128xf32>
    %28 = arith.maximumf %26, %27 : vector<5x128xf32>
    %29 = arith.truncf %28 : vector<5x128xf32> to vector<5x128xbf16>
    %c5 = arith.constant 5 : index
    %c0_20 = arith.constant 0 : index
    %30 = vector.load %arg4[%c5, %c0_20] : memref<40x128xbf16, #tpu.memory_space<vmem>>, vector<5x128xbf16>
    tpu.vector_store %arg4[%c5, %c0_20], %29 {strides = array<i32>} : memref<40x128xbf16, #tpu.memory_space<vmem>>, vector<5x128xbf16>,
    %c40 = arith.constant 40 : index
    %c0_21 = arith.constant 0 : index
    %31 = tpu.strided_load %arg5[%c40, %c0_21] {strides = array<i32: 2, 1>} : memref<160x128xf32, #tpu.memory_space<vmem>>, vector<5x128xf32>
    %c41 = arith.constant 41 : index
    %c0_22 = arith.constant 0 : index
    %32 = tpu.strided_load %arg5[%c41, %c0_22] {strides = array<i32: 2, 1>} : memref<160x128xf32, #tpu.memory_space<vmem>>, vector<5x128xf32>
    %c50 = arith.constant 50 : index
    %c0_23 = arith.constant 0 : index
    %33 = tpu.strided_load %arg5[%c50, %c0_23] {strides = array<i32: 2, 1>} : memref<160x128xf32, #tpu.memory_space<vmem>>, vector<5x128xf32>
    %c51 = arith.constant 51 : index
    %c0_24 = arith.constant 0 : index
    %34 = tpu.strided_load %arg5[%c51, %c0_24] {strides = array<i32: 2, 1>} : memref<160x128xf32, #tpu.memory_space<vmem>>, vector<5x128xf32>
    %35 = arith.maximumf %31, %32 : vector<5x128xf32>
    %36 = arith.maximumf %33, %34 : vector<5x128xf32>
    %37 = arith.maximumf %35, %36 : vector<5x128xf32>
    %38 = vector.broadcast %4 : vector<1x128xf32> to vector<5x128xf32>
    %39 = arith.addf %37, %38 : vector<5x128xf32>
    %cst_25 = arith.constant 0.000000e+00 : f32
    %40 = vector.broadcast %cst_25 : f32 to vector<5x128xf32>
    %41 = arith.maximumf %39, %40 : vector<5x128xf32>
    %42 = arith.truncf %41 : vector<5x128xf32> to vector<5x128xbf16>
    %c10_26 = arith.constant 10 : index
    %c0_27 = arith.constant 0 : index
    %43 = vector.load %arg4[%c10_26, %c0_27] : memref<40x128xbf16, #tpu.memory_space<vmem>>, vector<5x128xbf16>
    tpu.vector_store %arg4[%c10_26, %c0_27], %42 {strides = array<i32>} : memref<40x128xbf16, #tpu.memory_space<vmem>>, vector<5x128xbf16>,
    %c60 = arith.constant 60 : index
    %c0_28 = arith.constant 0 : index
    %44 = tpu.strided_load %arg5[%c60, %c0_28] {strides = array<i32: 2, 1>} : memref<160x128xf32, #tpu.memory_space<vmem>>, vector<5x128xf32>
    %c61 = arith.constant 61 : index
    %c0_29 = arith.constant 0 : index
    %45 = tpu.strided_load %arg5[%c61, %c0_29] {strides = array<i32: 2, 1>} : memref<160x128xf32, #tpu.memory_space<vmem>>, vector<5x128xf32>
    %c70 = arith.constant 70 : index
    %c0_30 = arith.constant 0 : index
    %46 = tpu.strided_load %arg5[%c70, %c0_30] {strides = array<i32: 2, 1>} : memref<160x128xf32, #tpu.memory_space<vmem>>, vector<5x128xf32>
    %c71 = arith.constant 71 : index
    %c0_31 = arith.constant 0 : index
    %47 = tpu.strided_load %arg5[%c71, %c0_31] {strides = array<i32: 2, 1>} : memref<160x128xf32, #tpu.memory_space<vmem>>, vector<5x128xf32>
    %48 = arith.maximumf %44, %45 : vector<5x128xf32>
    %49 = arith.maximumf %46, %47 : vector<5x128xf32>
    %50 = arith.maximumf %48, %49 : vector<5x128xf32>
    %51 = vector.broadcast %4 : vector<1x128xf32> to vector<5x128xf32>
    %52 = arith.addf %50, %51 : vector<5x128xf32>
    %cst_32 = arith.constant 0.000000e+00 : f32
    %53 = vector.broadcast %cst_32 : f32 to vector<5x128xf32>
    %54 = arith.maximumf %52, %53 : vector<5x128xf32>
    %55 = arith.truncf %54 : vector<5x128xf32> to vector<5x128xbf16>
    %c15 = arith.constant 15 : index
    %c0_33 = arith.constant 0 : index
    %56 = vector.load %arg4[%c15, %c0_33] : memref<40x128xbf16, #tpu.memory_space<vmem>>, vector<5x128xbf16>
    tpu.vector_store %arg4[%c15, %c0_33], %55 {strides = array<i32>} : memref<40x128xbf16, #tpu.memory_space<vmem>>, vector<5x128xbf16>,
    %c80 = arith.constant 80 : index
    %c0_34 = arith.constant 0 : index
    %57 = tpu.strided_load %arg5[%c80, %c0_34] {strides = array<i32: 2, 1>} : memref<160x128xf32, #tpu.memory_space<vmem>>, vector<5x128xf32>
    %c81 = arith.constant 81 : index
    %c0_35 = arith.constant 0 : index
    %58 = tpu.strided_load %arg5[%c81, %c0_35] {strides = array<i32: 2, 1>} : memref<160x128xf32, #tpu.memory_space<vmem>>, vector<5x128xf32>
    %c90 = arith.constant 90 : index
    %c0_36 = arith.constant 0 : index
    %59 = tpu.strided_load %arg5[%c90, %c0_36] {strides = array<i32: 2, 1>} : memref<160x128xf32, #tpu.memory_space<vmem>>, vector<5x128xf32>
    %c91 = arith.constant 91 : index
    %c0_37 = arith.constant 0 : index
    %60 = tpu.strided_load %arg5[%c91, %c0_37] {strides = array<i32: 2, 1>} : memref<160x128xf32, #tpu.memory_space<vmem>>, vector<5x128xf32>
    %61 = arith.maximumf %57, %58 : vector<5x128xf32>
    %62 = arith.maximumf %59, %60 : vector<5x128xf32>
    %63 = arith.maximumf %61, %62 : vector<5x128xf32>
    %64 = vector.broadcast %4 : vector<1x128xf32> to vector<5x128xf32>
    %65 = arith.addf %63, %64 : vector<5x128xf32>
    %cst_38 = arith.constant 0.000000e+00 : f32
    %66 = vector.broadcast %cst_38 : f32 to vector<5x128xf32>
    %67 = arith.maximumf %65, %66 : vector<5x128xf32>
    %68 = arith.truncf %67 : vector<5x128xf32> to vector<5x128xbf16>
    %c20_39 = arith.constant 20 : index
    %c0_40 = arith.constant 0 : index
    %69 = vector.load %arg4[%c20_39, %c0_40] : memref<40x128xbf16, #tpu.memory_space<vmem>>, vector<5x128xbf16>
    tpu.vector_store %arg4[%c20_39, %c0_40], %68 {strides = array<i32>} : memref<40x128xbf16, #tpu.memory_space<vmem>>, vector<5x128xbf16>,
    %c100 = arith.constant 100 : index
    %c0_41 = arith.constant 0 : index
    %70 = tpu.strided_load %arg5[%c100, %c0_41] {strides = array<i32: 2, 1>} : memref<160x128xf32, #tpu.memory_space<vmem>>, vector<5x128xf32>
    %c101 = arith.constant 101 : index
    %c0_42 = arith.constant 0 : index
    %71 = tpu.strided_load %arg5[%c101, %c0_42] {strides = array<i32: 2, 1>} : memref<160x128xf32, #tpu.memory_space<vmem>>, vector<5x128xf32>
    %c110 = arith.constant 110 : index
    %c0_43 = arith.constant 0 : index
    %72 = tpu.strided_load %arg5[%c110, %c0_43] {strides = array<i32: 2, 1>} : memref<160x128xf32, #tpu.memory_space<vmem>>, vector<5x128xf32>
    %c111 = arith.constant 111 : index
    %c0_44 = arith.constant 0 : index
    %73 = tpu.strided_load %arg5[%c111, %c0_44] {strides = array<i32: 2, 1>} : memref<160x128xf32, #tpu.memory_space<vmem>>, vector<5x128xf32>
    %74 = arith.maximumf %70, %71 : vector<5x128xf32>
    %75 = arith.maximumf %72, %73 : vector<5x128xf32>
    %76 = arith.maximumf %74, %75 : vector<5x128xf32>
    %77 = vector.broadcast %4 : vector<1x128xf32> to vector<5x128xf32>
    %78 = arith.addf %76, %77 : vector<5x128xf32>
    %cst_45 = arith.constant 0.000000e+00 : f32
    %79 = vector.broadcast %cst_45 : f32 to vector<5x128xf32>
    %80 = arith.maximumf %78, %79 : vector<5x128xf32>
    %81 = arith.truncf %80 : vector<5x128xf32> to vector<5x128xbf16>
    %c25 = arith.constant 25 : index
    %c0_46 = arith.constant 0 : index
    %82 = vector.load %arg4[%c25, %c0_46] : memref<40x128xbf16, #tpu.memory_space<vmem>>, vector<5x128xbf16>
    tpu.vector_store %arg4[%c25, %c0_46], %81 {strides = array<i32>} : memref<40x128xbf16, #tpu.memory_space<vmem>>, vector<5x128xbf16>,
    %c120 = arith.constant 120 : index
    %c0_47 = arith.constant 0 : index
    %83 = tpu.strided_load %arg5[%c120, %c0_47] {strides = array<i32: 2, 1>} : memref<160x128xf32, #tpu.memory_space<vmem>>, vector<5x128xf32>
    %c121 = arith.constant 121 : index
    %c0_48 = arith.constant 0 : index
    %84 = tpu.strided_load %arg5[%c121, %c0_48] {strides = array<i32: 2, 1>} : memref<160x128xf32, #tpu.memory_space<vmem>>, vector<5x128xf32>
    %c130 = arith.constant 130 : index
    %c0_49 = arith.constant 0 : index
    %85 = tpu.strided_load %arg5[%c130, %c0_49] {strides = array<i32: 2, 1>} : memref<160x128xf32, #tpu.memory_space<vmem>>, vector<5x128xf32>
    %c131 = arith.constant 131 : index
    %c0_50 = arith.constant 0 : index
    %86 = tpu.strided_load %arg5[%c131, %c0_50] {strides = array<i32: 2, 1>} : memref<160x128xf32, #tpu.memory_space<vmem>>, vector<5x128xf32>
    %87 = arith.maximumf %83, %84 : vector<5x128xf32>
    %88 = arith.maximumf %85, %86 : vector<5x128xf32>
    %89 = arith.maximumf %87, %88 : vector<5x128xf32>
    %90 = vector.broadcast %4 : vector<1x128xf32> to vector<5x128xf32>
    %91 = arith.addf %89, %90 : vector<5x128xf32>
    %cst_51 = arith.constant 0.000000e+00 : f32
    %92 = vector.broadcast %cst_51 : f32 to vector<5x128xf32>
    %93 = arith.maximumf %91, %92 : vector<5x128xf32>
    %94 = arith.truncf %93 : vector<5x128xf32> to vector<5x128xbf16>
    %c30_52 = arith.constant 30 : index
    %c0_53 = arith.constant 0 : index
    %95 = vector.load %arg4[%c30_52, %c0_53] : memref<40x128xbf16, #tpu.memory_space<vmem>>, vector<5x128xbf16>
    tpu.vector_store %arg4[%c30_52, %c0_53], %94 {strides = array<i32>} : memref<40x128xbf16, #tpu.memory_space<vmem>>, vector<5x128xbf16>,
    %c140 = arith.constant 140 : index
    %c0_54 = arith.constant 0 : index
    %96 = tpu.strided_load %arg5[%c140, %c0_54] {strides = array<i32: 2, 1>} : memref<160x128xf32, #tpu.memory_space<vmem>>, vector<5x128xf32>
    %c141 = arith.constant 141 : index
    %c0_55 = arith.constant 0 : index
    %97 = tpu.strided_load %arg5[%c141, %c0_55] {strides = array<i32: 2, 1>} : memref<160x128xf32, #tpu.memory_space<vmem>>, vector<5x128xf32>
    %c150 = arith.constant 150 : index
    %c0_56 = arith.constant 0 : index
    %98 = tpu.strided_load %arg5[%c150, %c0_56] {strides = array<i32: 2, 1>} : memref<160x128xf32, #tpu.memory_space<vmem>>, vector<5x128xf32>
    %c151 = arith.constant 151 : index
    %c0_57 = arith.constant 0 : index
    %99 = tpu.strided_load %arg5[%c151, %c0_57] {strides = array<i32: 2, 1>} : memref<160x128xf32, #tpu.memory_space<vmem>>, vector<5x128xf32>
    %100 = arith.maximumf %96, %97 : vector<5x128xf32>
    %101 = arith.maximumf %98, %99 : vector<5x128xf32>
    %102 = arith.maximumf %100, %101 : vector<5x128xf32>
    %103 = vector.broadcast %4 : vector<1x128xf32> to vector<5x128xf32>
    %104 = arith.addf %102, %103 : vector<5x128xf32>
    %cst_58 = arith.constant 0.000000e+00 : f32
    %105 = vector.broadcast %cst_58 : f32 to vector<5x128xf32>
    %106 = arith.maximumf %104, %105 : vector<5x128xf32>
    %107 = arith.truncf %106 : vector<5x128xf32> to vector<5x128xbf16>
    %c35 = arith.constant 35 : index
    %c0_59 = arith.constant 0 : index
    %108 = vector.load %arg4[%c35, %c0_59] : memref<40x128xbf16, #tpu.memory_space<vmem>>, vector<5x128xbf16>
    tpu.vector_store %arg4[%c35, %c0_59], %107 {strides = array<i32>} : memref<40x128xbf16, #tpu.memory_space<vmem>>, vector<5x128xbf16>,
    return
  }
  func.func @transform_0(%arg0: i32) -> (i32, i32) {
    %c0_i32 = arith.constant 0 : i32
    %c0_i32_0 = arith.constant 0 : i32
    return %arg0, %c0_i32 : i32, i32
  }
  func.func @transform_1(%arg0: i32) -> (i32, i32) {
    %c0_i32 = arith.constant 0 : i32
    %c0_i32_0 = arith.constant 0 : i32
    %c0_i32_1 = arith.constant 0 : i32
    return %c0_i32, %c0_i32_0 : i32, i32
  }
  func.func @transform_2(%arg0: i32) -> (i32, i32) {
    %c0_i32 = arith.constant 0 : i32
    %c0_i32_0 = arith.constant 0 : i32
    %c0_i32_1 = arith.constant 0 : i32
    return %c0_i32, %c0_i32_0 : i32, i32
  }
  func.func @transform_3(%arg0: i32) -> (i32, i32) {
    %c0_i32 = arith.constant 0 : i32
    %c0_i32_0 = arith.constant 0 : i32
    return %arg0, %c0_i32 : i32, i32
  }
}

module attributes {stable_mosaic.version = 11 : i64} {
  func.func @fc_head_kernel(%arg0: i32, %arg1: memref<2x400xbf16, #tpu.memory_space<vmem>>, %arg2: memref<400x128xbf16, #tpu.memory_space<vmem>>, %arg3: memref<1x128xf32, #tpu.memory_space<vmem>>, %arg4: memref<128x128xbf16, #tpu.memory_space<vmem>>, %arg5: memref<1x128xf32, #tpu.memory_space<vmem>>, %arg6: memref<128x128xbf16, #tpu.memory_space<vmem>>, %arg7: memref<1x128xf32, #tpu.memory_space<vmem>>, %arg8: memref<2x128xf32, #tpu.memory_space<vmem>>) attributes {dimension_semantics = [#tpu.dimension_semantics<parallel>], iteration_bounds = array<i64: 1>, scalar_prefetch = 0 : i64, scratch_operands = 0 : i64, tpu.core_type = #tpu.core_type<tc>, window_params = [{transform_indices = @transform_0, window_bounds = array<i64: 2, 400>}, {pipeline_mode = #tpu.pipeline_mode<synchronous>, transform_indices = @transform_1, window_bounds = array<i64: 400, 128>}, {pipeline_mode = #tpu.pipeline_mode<synchronous>, transform_indices = @transform_2, window_bounds = array<i64: 1, 128>}, {pipeline_mode = #tpu.pipeline_mode<synchronous>, transform_indices = @transform_3, window_bounds = array<i64: 128, 128>}, {pipeline_mode = #tpu.pipeline_mode<synchronous>, transform_indices = @transform_4, window_bounds = array<i64: 1, 128>}, {pipeline_mode = #tpu.pipeline_mode<synchronous>, transform_indices = @transform_5, window_bounds = array<i64: 128, 128>}, {pipeline_mode = #tpu.pipeline_mode<synchronous>, transform_indices = @transform_6, window_bounds = array<i64: 1, 128>}, {transform_indices = @transform_7, window_bounds = array<i64: 2, 128>}]} {
    %c0 = arith.constant 0 : index
    %c0_0 = arith.constant 0 : index
    %0 = vector.load %arg1[%c0, %c0_0] : memref<2x400xbf16, #tpu.memory_space<vmem>>, vector<2x400xbf16>
    %c0_1 = arith.constant 0 : index
    %c0_2 = arith.constant 0 : index
    %1 = vector.load %arg2[%c0_1, %c0_2] : memref<400x128xbf16, #tpu.memory_space<vmem>>, vector<400x128xbf16>
    %cst = arith.constant dense<0.000000e+00> : vector<2x128xf32>
    %2 = tpu.matmul %0, %1, %cst {dimension_numbers = #tpu.dot_dimension_numbers<[1], [0], [0], [1], [0, 0, 1, 1], [], []>} : vector<2x400xbf16>, vector<400x128xbf16>, vector<2x128xf32> -> vector<2x128xf32>
    %c0_3 = arith.constant 0 : index
    %c0_4 = arith.constant 0 : index
    %3 = vector.load %arg3[%c0_3, %c0_4] : memref<1x128xf32, #tpu.memory_space<vmem>>, vector<1x128xf32>
    %4 = vector.broadcast %3 : vector<1x128xf32> to vector<2x128xf32>
    %5 = arith.addf %2, %4 : vector<2x128xf32>
    %cst_5 = arith.constant 0.000000e+00 : f32
    %6 = vector.broadcast %cst_5 : f32 to vector<2x128xf32>
    %7 = arith.maximumf %5, %6 : vector<2x128xf32>
    %8 = arith.truncf %7 : vector<2x128xf32> to vector<2x128xbf16>
    %c0_6 = arith.constant 0 : index
    %c0_7 = arith.constant 0 : index
    %9 = vector.load %arg4[%c0_6, %c0_7] : memref<128x128xbf16, #tpu.memory_space<vmem>>, vector<128x128xbf16>
    %cst_8 = arith.constant dense<0.000000e+00> : vector<2x128xf32>
    %10 = tpu.matmul %8, %9, %cst_8 {dimension_numbers = #tpu.dot_dimension_numbers<[1], [0], [0], [1], [0, 0, 1, 1], [], []>} : vector<2x128xbf16>, vector<128x128xbf16>, vector<2x128xf32> -> vector<2x128xf32>
    %c0_9 = arith.constant 0 : index
    %c0_10 = arith.constant 0 : index
    %11 = vector.load %arg5[%c0_9, %c0_10] : memref<1x128xf32, #tpu.memory_space<vmem>>, vector<1x128xf32>
    %12 = vector.broadcast %11 : vector<1x128xf32> to vector<2x128xf32>
    %13 = arith.addf %10, %12 : vector<2x128xf32>
    %cst_11 = arith.constant 0.000000e+00 : f32
    %14 = vector.broadcast %cst_11 : f32 to vector<2x128xf32>
    %15 = arith.maximumf %13, %14 : vector<2x128xf32>
    %16 = arith.truncf %15 : vector<2x128xf32> to vector<2x128xbf16>
    %c0_12 = arith.constant 0 : index
    %c0_13 = arith.constant 0 : index
    %17 = vector.load %arg6[%c0_12, %c0_13] : memref<128x128xbf16, #tpu.memory_space<vmem>>, vector<128x128xbf16>
    %cst_14 = arith.constant dense<0.000000e+00> : vector<2x128xf32>
    %18 = tpu.matmul %16, %17, %cst_14 {dimension_numbers = #tpu.dot_dimension_numbers<[1], [0], [0], [1], [0, 0, 1, 1], [], []>} : vector<2x128xbf16>, vector<128x128xbf16>, vector<2x128xf32> -> vector<2x128xf32>
    %c0_15 = arith.constant 0 : index
    %c0_16 = arith.constant 0 : index
    %19 = vector.load %arg7[%c0_15, %c0_16] : memref<1x128xf32, #tpu.memory_space<vmem>>, vector<1x128xf32>
    %20 = vector.broadcast %19 : vector<1x128xf32> to vector<2x128xf32>
    %21 = arith.addf %18, %20 : vector<2x128xf32>
    %c0_17 = arith.constant 0 : index
    %c0_18 = arith.constant 0 : index
    %22 = vector.load %arg8[%c0_17, %c0_18] : memref<2x128xf32, #tpu.memory_space<vmem>>, vector<2x128xf32>
    tpu.vector_store %arg8[%c0_17, %c0_18], %21 {strides = array<i32>} : memref<2x128xf32, #tpu.memory_space<vmem>>, vector<2x128xf32>,
    return
  }
  func.func @transform_0(%arg0: i32) -> (i32, i32) {
    %c0_i32 = arith.constant 0 : i32
    %c0_i32_0 = arith.constant 0 : i32
    return %arg0, %c0_i32 : i32, i32
  }
  func.func @transform_1(%arg0: i32) -> (i32, i32) {
    %c0_i32 = arith.constant 0 : i32
    %c0_i32_0 = arith.constant 0 : i32
    %c0_i32_1 = arith.constant 0 : i32
    return %c0_i32, %c0_i32_0 : i32, i32
  }
  func.func @transform_2(%arg0: i32) -> (i32, i32) {
    %c0_i32 = arith.constant 0 : i32
    %c0_i32_0 = arith.constant 0 : i32
    %c0_i32_1 = arith.constant 0 : i32
    return %c0_i32, %c0_i32_0 : i32, i32
  }
  func.func @transform_3(%arg0: i32) -> (i32, i32) {
    %c0_i32 = arith.constant 0 : i32
    %c0_i32_0 = arith.constant 0 : i32
    %c0_i32_1 = arith.constant 0 : i32
    return %c0_i32, %c0_i32_0 : i32, i32
  }
  func.func @transform_4(%arg0: i32) -> (i32, i32) {
    %c0_i32 = arith.constant 0 : i32
    %c0_i32_0 = arith.constant 0 : i32
    %c0_i32_1 = arith.constant 0 : i32
    return %c0_i32, %c0_i32_0 : i32, i32
  }
  func.func @transform_5(%arg0: i32) -> (i32, i32) {
    %c0_i32 = arith.constant 0 : i32
    %c0_i32_0 = arith.constant 0 : i32
    %c0_i32_1 = arith.constant 0 : i32
    return %c0_i32, %c0_i32_0 : i32, i32
  }
  func.func @transform_6(%arg0: i32) -> (i32, i32) {
    %c0_i32 = arith.constant 0 : i32
    %c0_i32_0 = arith.constant 0 : i32
    %c0_i32_1 = arith.constant 0 : i32
    return %c0_i32, %c0_i32_0 : i32, i32
  }
  func.func @transform_7(%arg0: i32) -> (i32, i32) {
    %c0_i32 = arith.constant 0 : i32
    %c0_i32_0 = arith.constant 0 : i32
    return %arg0, %c0_i32 : i32, i32
  }
}

</mosaic_0001>

<llo_original>
// kernel: net_forward.3
$region0: #{net_forward.3}
  #allocation0 [shape = 'u32[]', space=smem, size = 0x4, offset = 0x4, fixed_abs, tag = 'smem constant byte address 0x4 - core index']
  #allocation1 [shape = 'u32[144,128]{1,0:T(1,128)}', space=vmem, size = 0x12000, scoped, tag = 'internal scratch']
  #allocation2 [shape = 'f32[672,128]{1,0:T(8,128)}', space=vmem, size = 0x54000, scoped, tag = 'scratch operand']
  %s0 = inlined_call_operand.vmem [shape: bf16[1568,75], index: 0, kind: input, shape index: {}]
  %s1 = inlined_call_operand.vmem [shape: bf16[75,128], index: 1, kind: input, shape index: {}]
  %s2 = inlined_call_operand.vmem [shape: f32[1,128], index: 2, kind: input, shape index: {}]
  %s3 = inlined_call_operand.vmem [shape: bf16[392,128], index: 3, kind: output, shape index: {}]
  %s4 = sld [smem:[#allocation0]]
  $region89: #{net_forward.3} parent=0
    _
  %s6 = ssub.s32 1, %s4
  %s7 = scalar_select 0, %s6, %s4
  $region1: #{net_forward.3} parent=0
    #allocation3 [shape = 'u8[86016]{0}', space=vmem, size = 0x15000, scoped, tag = 'output window, operand 0']
    loop: start=0, step=1, limit=5
    $region2: #{net_forward.3} parent=1 // loop_pre_header
      _
    $region3: #{net_forward.3} parent=1 // loop_header
      %s9 = sphi 0, %s13
      %p10 = scmp.ge.s32.totalorder %s9, 5
      %s19 = sphi 0, %s21
      %s22 = sphi 0, %s19
      %s23 = sphi 0, %s22
      %s39 = sphi 0, %s23
      %s43 = sphi 0, %s43
      %s45 = sphi 0, %s43
      %s46 = sphi 0, %s45
      %s60 = sphi 0, %s46
      %s64 = sphi 0, %s64
      %s66 = sphi 0, %s64
      %s67 = sphi 0, %s66
      %s81 = sphi 0, %s67
      %s87 = sphi 0, %s89
      %s90 = sphi 0, %s87
      %s91 = sphi 0, %s90
      %s107 = sphi 0, %s91
    $region4: #{net_forward.3} parent=1 // loop_header_branch
      %12 = sbr.rel (%p10) target = $region8
    $region5: #{net_forward.3} parent=1 // loop_body
      %s14 = ssub.s32 %s9, 1
      %s15 = ssub.s32 %s9, 2
      %s16 = sadd.s32 %s9, 1
      %s17 = ssub.s32 %s9, %s16
      %p18 = scmp.eq.s32.totalorder %s17, 0
      %s20 = sadd.s32 %s19, 1
      %s21 = scalar_select %p18, %s19, %s20
      %p24 = pneg %p18
      %p25 = scmp.eq.s32.totalorder %s9, 2
      %p26 = por %p24, %p25
      %p27 = scmp.ne.s32.totalorder %s19, %s22
      %p28 = scmp.eq.s32.totalorder %s9, 0
      %p29 = por %p27, %p28
      %p30 = scmp.ne.s32.totalorder %s19, %s22
      %p31 = scmp.eq.s32.totalorder %s14, 2
      %p32 = por %p30, %p31
      %p33 = scmp.ne.s32.totalorder %s22, %s23
      %p34 = scmp.eq.s32.totalorder %s14, 0
      %p35 = por %p33, %p34
      %p36 = scmp.ne.s32.totalorder %s22, %s23
      %p37 = scmp.eq.s32.totalorder %s15, 2
      %p38 = por %p36, %p37
      %p40 = scmp.ne.s32.totalorder %s23, %s39
      %p41 = scmp.eq.s32.totalorder %s15, 0
      %p42 = por %p40, %p41
      %s44 = sadd.s32 %s43, 1
      %p47 = scmp.eq.s32.totalorder %s9, 2
      %p48 = scmp.ne.s32.totalorder %s43, %s45
      %p49 = scmp.eq.s32.totalorder %s9, 0
      %p50 = por %p48, %p49
      %p51 = scmp.ne.s32.totalorder %s43, %s45
      %p52 = scmp.eq.s32.totalorder %s14, 2
      %p53 = por %p51, %p52
      %p54 = scmp.ne.s32.totalorder %s45, %s46
      %p55 = scmp.eq.s32.totalorder %s14, 0
      %p56 = por %p54, %p55
      %p57 = scmp.ne.s32.totalorder %s45, %s46
      %p58 = scmp.eq.s32.totalorder %s15, 2
      %p59 = por %p57, %p58
      %p61 = scmp.ne.s32.totalorder %s46, %s60
      %p62 = scmp.eq.s32.totalorder %s15, 0
      %p63 = por %p61, %p62
      %s65 = sadd.s32 %s64, 1
      %p68 = scmp.eq.s32.totalorder %s9, 2
      %p69 = scmp.ne.s32.totalorder %s64, %s66
      %p70 = scmp.eq.s32.totalorder %s9, 0
      %p71 = por %p69, %p70
      %p72 = scmp.ne.s32.totalorder %s64, %s66
      %p73 = scmp.eq.s32.totalorder %s14, 2
      %p74 = por %p72, %p73
      %p75 = scmp.ne.s32.totalorder %s66, %s67
      %p76 = scmp.eq.s32.totalorder %s14, 0
      %p77 = por %p75, %p76
      %p78 = scmp.ne.s32.totalorder %s66, %s67
      %p79 = scmp.eq.s32.totalorder %s15, 2
      %p80 = por %p78, %p79
      %p82 = scmp.ne.s32.totalorder %s67, %s81
      %p83 = scmp.eq.s32.totalorder %s15, 0
      %p84 = por %p82, %p83
      %s85 = ssub.s32 %s9, %s16
      %p86 = scmp.eq.s32.totalorder %s85, 0
      %s88 = sadd.s32 %s87, 1
      %s89 = scalar_select %p86, %s87, %s88
      %p92 = pneg %p86
      %p93 = scmp.eq.s32.totalorder %s9, 2
      %p94 = por %p92, %p93
      %p95 = scmp.ne.s32.totalorder %s87, %s90
      %p96 = scmp.eq.s32.totalorder %s9, 0
      %p97 = por %p95, %p96
      %p98 = scmp.ne.s32.totalorder %s87, %s90
      %p99 = scmp.eq.s32.totalorder %s14, 2
      %p100 = por %p98, %p99
      %p101 = scmp.ne.s32.totalorder %s90, %s91
      %p102 = scmp.eq.s32.totalorder %s14, 0
      %p103 = por %p101, %p102
      %p104 = scmp.ne.s32.totalorder %s90, %s91
      %p105 = scmp.eq.s32.totalorder %s15, 2
      %p106 = por %p104, %p105
      %p108 = scmp.ne.s32.totalorder %s91, %s107
      %p109 = scmp.eq.s32.totalorder %s15, 0
      %p110 = por %p108, %p109
      %p111 = scmp.le.s32.totalorder 1, %s9
      %p112 = scmp.lt.s32.totalorder %s9, 4
      %p113 = pnand %p111, %p112
      %p114 = pneg %p113
      // Predicated region
      $region9: #{net_forward.3} parent=5 // pred_check
        _
      $region10: #{net_forward.3} parent=5 // pred_check_branch
        %116 = sbr.rel (%p113) target = $region12
      $region11: #{net_forward.3} parent=5 // pred_region
        %s117 = ssub.s32 %s9, 1
        // Predicated region
        $region13: #{net_forward.3} parent=11 // pred_check
          %p118 = pneg %p56
        $region14: #{net_forward.3} parent=11 // pred_check_branch
          %120 = sbr.rel (%p118) target = $region16
        $region15: #{net_forward.3} parent=11 // pred_region
          _
        $region16: #{net_forward.3} parent=11 // pred_fallthru
          _
        // Predicated region
        $region17: #{net_forward.3} parent=11 // pred_check
          %p121 = pneg %p77
        $region18: #{net_forward.3} parent=11 // pred_check_branch
          %123 = sbr.rel (%p121) target = $region20
        $region19: #{net_forward.3} parent=11 // pred_region
          _
        $region20: #{net_forward.3} parent=11 // pred_fallthru
          _
      $region12: #{net_forward.3} parent=5 // pred_fallthru
        _
      %p124 = scmp.lt.s32.totalorder %s9, 3
      // Predicated region
      $region21: #{net_forward.3} parent=5 // pred_check
        %p125 = pneg %p124
      $region22: #{net_forward.3} parent=5 // pred_check_branch
        %127 = sbr.rel (%p125) target = $region24
      $region23: #{net_forward.3} parent=5 // pred_region
        // Predicated region
        $region25: #{net_forward.3} parent=23 // pred_check
          %p128 = pneg %p29
        $region26: #{net_forward.3} parent=23 // pred_check_branch
          %130 = sbr.rel (%p128) target = $region28
        $region27: #{net_forward.3} parent=23 // pred_region
          %s131 = smul.u32 84, %s9
          %s132 = ssub.s32 196, %s131
          %p133 = scmp.lt.s32.totalorder %s132, 84
          %s134 = scalar_select %p133, %s132, 84
          %s135 = smul.u32 64, %s134
          %p136 = scmp.lt.s32.totalorder %s131, 195
          %s137 = scalar_select %p136, %s131, 195
          %s138 = smul.addr %s137, 4
          %s139 = scalar_lea.vmem %s0, %s138
          %s140 = smul.u32 84, %s9
          %s141 = ssub.s32 196, %s140
          %p142 = scmp.lt.s32.totalorder %s141, 84
          %s143 = scalar_select %p142, %s141, 84
          %s144 = smul.u32 64, %s143
        $region28: #{net_forward.3} parent=23 // pred_fallthru
          _
      $region24: #{net_forward.3} parent=5 // pred_fallthru
        _
      %p145 = scmp.le.s32.totalorder 1, %s9
      %p146 = scmp.lt.s32.totalorder %s9, 4
      %p147 = pnand %p145, %p146
      %p148 = pneg %p147
      // Predicated region
      $region29: #{net_forward.3} parent=5 // pred_check
        _
      $region30: #{net_forward.3} parent=5 // pred_check_branch
        %150 = sbr.rel (%p147) target = $region32
      $region31: #{net_forward.3} parent=5 // pred_region
        %s151 = ssub.s32 %s9, 1
        %s152 = smul.u32 84, %s14
        %s153 = ssub.s32 196, %s152
        %p154 = scmp.lt.s32.totalorder %s153, 84
        %s155 = scalar_select %p154, %s153, 84
        %s156 = smul.u32 64, %s155
        %p157 = scmp.lt.s32.totalorder %s152, 195
        %s158 = scalar_select %p157, %s152, 195
        %s159 = smul.addr %s158, 4
        %s160 = scalar_lea.vmem %s0, %s159
        %p161 = pneg %p35
        %p162 = pneg %p32
        %p163 = pneg %p56
        %p164 = pneg %p53
        %p165 = pneg %p77
        %p166 = pneg %p74
        %p167 = pneg %p103
        %p168 = pneg %p100
        %s169 = sand.u32 %s90, 1
        %s170 = sand.u32 %s90, 1
        %s171 = smul.addr %s170, 84
        %s172 = scalar_lea.vmem [#allocation3], %s171
        %s173 = smul.u32 84, %s14
        %s174 = ssub.s32 196, %s173
        %p175 = scmp.lt.s32.totalorder %s174, 84
        %s176 = scalar_select %p175, %s174, 84
        %s177 = smul.u32 64, %s176
        %p178 = scmp.lt.s32.totalorder %s173, 195
        %s179 = scalar_select %p178, %s173, 195
        %s180 = smul.addr %s179, 4
        %s181 = scalar_lea.vmem %s0, %s180
        %s182 = smul.u32 84, %s14
        %s183 = ssub.s32 196, %s182
        %p184 = scmp.lt.s32.totalorder %s183, 84
        %s185 = scalar_select %p184, %s183, 84
        %s186 = smul.u32 64, %s185
        %s187 = smul.u32 21, %s14
        %s188 = ssub.s32 49, %s187
        %p189 = scmp.lt.s32.totalorder %s188, 21
        %s190 = scalar_select %p189, %s188, 21
        %s191 = smul.u32 64, %s190
        %v193 = vld [vmem:[%s181] sm:$0xf]
        %v194 = vld [vmem:[%s181 + $0x4] sm:$0xf]
        %v195 = vld [vmem:[%s181 + $0x8] sm:$0xf]
        %v196 = vld [vmem:[%s181 + $0xc] sm:$0xf]
        %v197 = vld [vmem:[%s181 + $0x10] sm:$0xf]
        %v198 = vld [vmem:[%s181 + $0x14] sm:$0xf]
        %v199 = vld [vmem:[%s181 + $0x18] sm:$0xf]
        %v200 = vld [vmem:[%s181 + $0x1c] sm:$0xf]
        %v201 = vld [vmem:[%s181 + $0x20] sm:$0xf]
        %v202 = vld [vmem:[%s181 + $0x24] sm:$0xf]
        %v203 = vld [vmem:[%s181 + $0x28] sm:$0xf]
        %v204 = vld [vmem:[%s181 + $0x2c] sm:$0xf]
        %v205 = vld [vmem:[%s181 + $0x30] sm:$0xf]
        %v206 = vld [vmem:[%s181 + $0x34] sm:$0xf]
        %v207 = vld [vmem:[%s181 + $0x38] sm:$0xf]
        %v208 = vld [vmem:[%s181 + $0x3c] sm:$0xf]
        %v209 = vld [vmem:[%s181 + $0x40] sm:$0xf]
        %v210 = vld [vmem:[%s181 + $0x44] sm:$0xf]
        %v211 = vld [vmem:[%s181 + $0x48] sm:$0xf]
        %v212 = vld [vmem:[%s181 + $0x4c] sm:$0xf]
        %v213 = vld [vmem:[%s181 + $0x50] sm:$0xf]
        %v214 = vld [vmem:[%s181 + $0x54] sm:$0xf]
        %v215 = vld [vmem:[%s181 + $0x58] sm:$0xf]
        %v216 = vld [vmem:[%s181 + $0x5c] sm:$0xf]
        %v217 = vld [vmem:[%s181 + $0x60] sm:$0xf]
        %v218 = vld [vmem:[%s181 + $0x64] sm:$0xf]
        %v219 = vld [vmem:[%s181 + $0x68] sm:$0xf]
        %v220 = vld [vmem:[%s181 + $0x6c] sm:$0xf]
        %v221 = vld [vmem:[%s181 + $0x70] sm:$0xf]
        %v222 = vld [vmem:[%s181 + $0x74] sm:$0xf]
        %v223 = vld [vmem:[%s181 + $0x78] sm:$0xf]
        %v224 = vld [vmem:[%s181 + $0x7c] sm:$0xf]
        %v225 = vld [vmem:[%s181 + $0x80] sm:$0xf]
        %v226 = vld [vmem:[%s181 + $0x84] sm:$0xf]
        %v227 = vld [vmem:[%s181 + $0x88] sm:$0xf]
        %v228 = vld [vmem:[%s181 + $0x8c] sm:$0xf]
        %v229 = vld [vmem:[%s181 + $0x90] sm:$0xf]
        %v230 = vld [vmem:[%s181 + $0x94] sm:$0xf]
        %v231 = vld [vmem:[%s181 + $0x98] sm:$0xf]
        %v232 = vld [vmem:[%s181 + $0x9c] sm:$0xf]
        %v233 = vld [vmem:[%s181 + $0xa0] sm:$0xf]
        %v234 = vld [vmem:[%s181 + $0xa4] sm:$0xf]
        %v235 = vld [vmem:[%s181 + $0xa8] sm:$0xf]
        %v236 = vld [vmem:[%s181 + $0xac] sm:$0xf]
        %v237 = vld [vmem:[%s181 + $0xb0] sm:$0xf]
        %v238 = vld [vmem:[%s181 + $0xb4] sm:$0xf]
        %v239 = vld [vmem:[%s181 + $0xb8] sm:$0xf]
        %v240 = vld [vmem:[%s181 + $0xbc] sm:$0xf]
        %v241 = vld [vmem:[%s181 + $0xc0] sm:$0xf]
        %v242 = vld [vmem:[%s181 + $0xc4] sm:$0xf]
        %v243 = vld [vmem:[%s181 + $0xc8] sm:$0xf]
        %v244 = vld [vmem:[%s181 + $0xcc] sm:$0xf]
        %v245 = vld [vmem:[%s181 + $0xd0] sm:$0xf]
        %v246 = vld [vmem:[%s181 + $0xd4] sm:$0xf]
        %v247 = vld [vmem:[%s181 + $0xd8] sm:$0xf]
        %v248 = vld [vmem:[%s181 + $0xdc] sm:$0xf]
        %v249 = vld [vmem:[%s181 + $0xe0] sm:$0xf]
        %v250 = vld [vmem:[%s181 + $0xe4] sm:$0xf]
        %v251 = vld [vmem:[%s181 + $0xe8] sm:$0xf]
        %v252 = vld [vmem:[%s181 + $0xec] sm:$0xf]
        %v253 = vld [vmem:[%s181 + $0xf0] sm:$0xf]
        %v254 = vld [vmem:[%s181 + $0xf4] sm:$0xf]
        %v255 = vld [vmem:[%s181 + $0xf8] sm:$0xf]
        %v256 = vld [vmem:[%s181 + $0xfc] sm:$0xf]
        %v257 = vld [vmem:[%s181 + $0x100] sm:$0xf]
        %v258 = vld [vmem:[%s181 + $0x104] sm:$0xf]
        %v259 = vld [vmem:[%s181 + $0x108] sm:$0xf]
        %v260 = vld [vmem:[%s181 + $0x10c] sm:$0xf]
        %v261 = vld [vmem:[%s181 + $0x110] sm:$0xf]
        %v262 = vld [vmem:[%s181 + $0x114] sm:$0xf]
        %v263 = vld [vmem:[%s181 + $0x118] sm:$0xf]
        %v264 = vld [vmem:[%s181 + $0x11c] sm:$0xf]
        %v265 = vld [vmem:[%s181 + $0x120] sm:$0xf]
        %v266 = vld [vmem:[%s181 + $0x124] sm:$0xf]
        %v267 = vld [vmem:[%s181 + $0x128] sm:$0xf]
        %v268 = vld [vmem:[%s181 + $0x12c] sm:$0xf]
        %v269 = vld [vmem:[%s181 + $0x130] sm:$0xf]
        %v270 = vld [vmem:[%s181 + $0x134] sm:$0xf]
        %v271 = vld [vmem:[%s181 + $0x138] sm:$0xf]
        %v272 = vld [vmem:[%s181 + $0x13c] sm:$0xf]
        %v273 = vld [vmem:[%s181 + $0x140] sm:$0xf]
        %v274 = vld [vmem:[%s181 + $0x144] sm:$0xf]
        %v275 = vld [vmem:[%s181 + $0x148] sm:$0xf]
        %v276 = vld [vmem:[%s181 + $0x14c] sm:$0xf]
        %v277 = vld [vmem:[%s1] sm:$0xf]
        %v278 = vld [vmem:[%s1 + $0x4] sm:$0xf]
        %v279 = vld [vmem:[%s1 + $0x8] sm:$0xf]
        %v280 = vld [vmem:[%s1 + $0xc] sm:$0xf]
        %v281 = vld [vmem:[%s1 + $0x10] sm:$0xf]
        %v282 = vld [vmem:[%s1 + $0x14] sm:$0xf]
        %v283 = vld [vmem:[%s1 + $0x18] sm:$0xf]
        %v284 = vld [vmem:[%s1 + $0x1c] sm:$0xf]
        %v285 = vld [vmem:[%s1 + $0x20] sm:$0xf]
        %v286 = vld [vmem:[%s1 + $0x24] sm:$0x3]
        %v371 = vunpack.c.l.b16 %v193
        %v372 = vunpack.c.l.b16 %v194
        %v373 = vunpack.c.l.b16 %v195
        %v374 = vunpack.c.l.b16 %v196
        %v375 = vunpack.c.l.b16 %v197
        %v376 = vunpack.c.l.b16 %v198
        %v377 = vunpack.c.l.b16 %v199
        %v378 = vunpack.c.l.b16 %v200
        %v379 = vunpack.c.l.b16 %v201
        %v380 = vunpack.c.l.b16 %v202
        %v381 = vunpack.c.l.b16 %v203
        %v382 = vunpack.c.l.b16 %v204
        %v383 = vunpack.c.l.b16 %v205
        %v384 = vunpack.c.l.b16 %v206
        %v385 = vunpack.c.l.b16 %v207
        %v386 = vunpack.c.l.b16 %v208
        %v387 = vunpack.c.l.b16 %v209
        %v388 = vunpack.c.l.b16 %v210
        %v389 = vunpack.c.l.b16 %v211
        %v390 = vunpack.c.l.b16 %v212
        %v391 = vunpack.c.l.b16 %v213
        %v392 = vunpack.c.l.b16 %v214
        %v393 = vunpack.c.l.b16 %v215
        %v394 = vunpack.c.l.b16 %v216
        %v395 = vunpack.c.l.b16 %v217
        %v396 = vunpack.c.l.b16 %v218
        %v397 = vunpack.c.l.b16 %v219
        %v398 = vunpack.c.l.b16 %v220
        %v399 = vunpack.c.l.b16 %v221
        %v400 = vunpack.c.l.b16 %v222
        %v401 = vunpack.c.l.b16 %v223
        %v402 = vunpack.c.l.b16 %v224
        %v403 = vunpack.c.l.b16 %v225
        %v404 = vunpack.c.l.b16 %v226
        %v405 = vunpack.c.l.b16 %v227
        %v406 = vunpack.c.l.b16 %v228
        %v407 = vunpack.c.l.b16 %v229
        %v408 = vunpack.c.l.b16 %v230
        %v409 = vunpack.c.l.b16 %v231
        %v410 = vunpack.c.l.b16 %v232
        %v411 = vunpack.c.l.b16 %v233
        %v412 = vunpack.c.l.b16 %v234
        %v413 = vunpack.c.l.b16 %v235
        %v414 = vunpack.c.l.b16 %v236
        %v415 = vunpack.c.l.b16 %v237
        %v416 = vunpack.c.l.b16 %v238
        %v417 = vunpack.c.l.b16 %v239
        %v418 = vunpack.c.l.b16 %v240
        %v419 = vunpack.c.l.b16 %v241
        %v420 = vunpack.c.l.b16 %v242
        %v421 = vunpack.c.l.b16 %v243
        %v422 = vunpack.c.l.b16 %v244
        %v423 = vunpack.c.l.b16 %v245
        %v424 = vunpack.c.l.b16 %v246
        %v425 = vunpack.c.l.b16 %v247
        %v426 = vunpack.c.l.b16 %v248
        %v427 = vunpack.c.l.b16 %v249
        %v428 = vunpack.c.l.b16 %v250
        %v429 = vunpack.c.l.b16 %v251
        %v430 = vunpack.c.l.b16 %v252
        %v431 = vunpack.c.l.b16 %v253
        %v432 = vunpack.c.l.b16 %v254
        %v433 = vunpack.c.l.b16 %v255
        %v434 = vunpack.c.l.b16 %v256
        %v435 = vunpack.c.l.b16 %v257
        %v436 = vunpack.c.l.b16 %v258
        %v437 = vunpack.c.l.b16 %v259
        %v438 = vunpack.c.l.b16 %v260
        %v439 = vunpack.c.l.b16 %v261
        %v440 = vunpack.c.l.b16 %v262
        %v441 = vunpack.c.l.b16 %v263
        %v442 = vunpack.c.l.b16 %v264
        %v443 = vunpack.c.l.b16 %v265
        %v444 = vunpack.c.l.b16 %v266
        %v445 = vunpack.c.l.b16 %v267
        %v446 = vunpack.c.l.b16 %v268
        %v447 = vunpack.c.l.b16 %v269
        %v448 = vunpack.c.l.b16 %v270
        %v449 = vunpack.c.l.b16 %v271
        %v450 = vunpack.c.l.b16 %v272
        %v451 = vunpack.c.l.b16 %v273
        %v452 = vunpack.c.l.b16 %v274
        %v453 = vunpack.c.l.b16 %v275
        %v454 = vunpack.c.l.b16 %v276
        %v455 = vpack.c.b16 %v372, %v371
        %v456 = vpack.c.b16 %v374, %v373
        %v457 = vpack.c.b16 %v376, %v375
        %v458 = vpack.c.b16 %v378, %v377
        %v459 = vpack.c.b16 %v380, %v379
        %v460 = vpack.c.b16 %v382, %v381
        %v461 = vpack.c.b16 %v384, %v383
        %v462 = vpack.c.b16 %v386, %v385
        %v463 = vpack.c.b16 %v388, %v387
        %v464 = vpack.c.b16 %v390, %v389
        %v465 = vpack.c.b16 %v392, %v391
        %v466 = vpack.c.b16 %v394, %v393
        %v467 = vpack.c.b16 %v396, %v395
        %v468 = vpack.c.b16 %v398, %v397
        %v469 = vpack.c.b16 %v400, %v399
        %v470 = vpack.c.b16 %v402, %v401
        %v471 = vpack.c.b16 %v404, %v403
        %v472 = vpack.c.b16 %v406, %v405
        %v473 = vpack.c.b16 %v408, %v407
        %v474 = vpack.c.b16 %v410, %v409
        %v475 = vpack.c.b16 %v412, %v411
        %v476 = vpack.c.b16 %v414, %v413
        %v477 = vpack.c.b16 %v416, %v415
        %v478 = vpack.c.b16 %v418, %v417
        %v479 = vpack.c.b16 %v420, %v419
        %v480 = vpack.c.b16 %v422, %v421
        %v481 = vpack.c.b16 %v424, %v423
        %v482 = vpack.c.b16 %v426, %v425
        %v483 = vpack.c.b16 %v428, %v427
        %v484 = vpack.c.b16 %v430, %v429
        %v485 = vpack.c.b16 %v432, %v431
        %v486 = vpack.c.b16 %v434, %v433
        %v487 = vpack.c.b16 %v436, %v435
        %v488 = vpack.c.b16 %v438, %v437
        %v489 = vpack.c.b16 %v440, %v439
        %v490 = vpack.c.b16 %v442, %v441
        %v491 = vpack.c.b16 %v444, %v443
        %v492 = vpack.c.b16 %v446, %v445
        %v493 = vpack.c.b16 %v448, %v447
        %v494 = vpack.c.b16 %v450, %v449
        %v495 = vpack.c.b16 %v452, %v451
        %v496 = vpack.c.b16 %v454, %v453
        %v507 = vunpack.c.l.b16 %v277
        %v508 = vunpack.c.l.b16 %v278
        %v509 = vunpack.c.l.b16 %v279
        %v510 = vunpack.c.l.b16 %v280
        %v511 = vunpack.c.l.b16 %v281
        %v512 = vunpack.c.l.b16 %v282
        %v513 = vunpack.c.l.b16 %v283
        %v514 = vunpack.c.l.b16 %v284
        %v515 = vunpack.c.l.b16 %v285
        %v516 = vunpack.c.l.b16 %v286
        %v517 = vpack.c.b16 %v508, %v507
        %v518 = vpack.c.b16 %v510, %v509
        %v519 = vpack.c.b16 %v512, %v511
        %v520 = vpack.c.b16 %v514, %v513
        %v521 = vpack.c.b16 %v516, %v515
        %vm526 = vcmask 613376
        %v528 = vsel %vm526, %v455, 0
        %v531 = vsel %vm526, %v456, 0
        %v534 = vsel %vm526, %v457, 0
        %v537 = vsel %vm526, %v458, 0
        %v540 = vsel %vm526, %v459, 0
        %v543 = vsel %vm526, %v460, 0
        %v546 = vsel %vm526, %v461, 0
        %v549 = vsel %vm526, %v462, 0
        %v552 = vsel %vm526, %v463, 0
        %v555 = vsel %vm526, %v464, 0
        %v558 = vsel %vm526, %v465, 0
        %v561 = vsel %vm526, %v466, 0
        %v564 = vsel %vm526, %v467, 0
        %v567 = vsel %vm526, %v468, 0
        %v570 = vsel %vm526, %v469, 0
        %v573 = vsel %vm526, %v470, 0
        %v576 = vsel %vm526, %v471, 0
        %v579 = vsel %vm526, %v472, 0
        %v582 = vsel %vm526, %v473, 0
        %v585 = vsel %vm526, %v474, 0
        %v588 = vsel %vm526, %v475, 0
        %v591 = vsel %vm526, %v476, 0
        %v594 = vsel %vm526, %v477, 0
        %v597 = vsel %vm526, %v478, 0
        %v600 = vsel %vm526, %v479, 0
        %v603 = vsel %vm526, %v480, 0
        %v606 = vsel %vm526, %v481, 0
        %v609 = vsel %vm526, %v482, 0
        %v612 = vsel %vm526, %v483, 0
        %v615 = vsel %vm526, %v484, 0
        %v618 = vsel %vm526, %v485, 0
        %v621 = vsel %vm526, %v486, 0
        %v624 = vsel %vm526, %v487, 0
        %v627 = vsel %vm526, %v488, 0
        %v630 = vsel %vm526, %v489, 0
        %v633 = vsel %vm526, %v490, 0
        %v636 = vsel %vm526, %v491, 0
        %v639 = vsel %vm526, %v492, 0
        %v642 = vsel %vm526, %v493, 0
        %v645 = vsel %vm526, %v494, 0
        %v648 = vsel %vm526, %v495, 0
        %v651 = vsel %vm526, %v496, 0
        %vm653 = vcmask 1044480
        %vm654 = vcmask 1045504
        %v655 = vsel %vm653, 4294967295, 65535
        %v656 = vsel %vm654, %v655, 0
        %v658 = vand.u32 %v521, %v656
        %660 = vmatprep.subr.bf16.mxu0 0
        %661 = vmatpush1.bf16.msra.mxu0 %v517
        %662 = vmatprep.subr.bf16.mxu0 0
        %663 = vmatpush1.bf16.msra.mxu0 %v518
        %664 = vmatprep.subr.bf16.mxu0 0
        %665 = vmatpush1.bf16.msra.mxu0 %v519
        %666 = vmatprep.subr.bf16.mxu0 0
        %667 = vmatpush1.bf16.msra.mxu0 %v520
        %668 = vmatprep.subr.bf16.mxu0 0
        %669 = vmatpush1.bf16.msra.mxu0 %v658
        %670 = vmatprep.subr.bf16.mxu0 0
        %671 = vmatpush1.bf16.msra.mxu0 0
        %672 = vmatprep.subr.bf16.mxu0 0
        %673 = vmatpush1.bf16.msra.mxu0 0
        %674 = vmatprep.subr.bf16.mxu0 0
        %675 = vmatpush1.bf16.msra.mxu0 0
        %676 = vmatprep.subr.bf16.mxu0 0
        %677 = vmatpush1.bf16.msra.mxu0 0
        %678 = vmatprep.subr.bf16.mxu0 0
        %679 = vmatpush1.bf16.msra.mxu0 0
        %680 = vmatprep.subr.bf16.mxu0 0
        %681 = vmatpush1.bf16.msra.mxu0 0
        %682 = vmatprep.subr.bf16.mxu0 0
        %683 = vmatpush1.bf16.msra.mxu0 0
        %684 = vmatprep.subr.bf16.mxu0 0
        %685 = vmatpush1.bf16.msra.mxu0 0
        %686 = vmatprep.subr.bf16.mxu0 0
        %687 = vmatpush1.bf16.msra.mxu0 0
        %688 = vmatprep.subr.bf16.mxu0 0
        %689 = vmatpush1.bf16.msra.mxu0 0
        %690 = vmatprep.subr.bf16.mxu0 0
        %691 = vmatpush1.bf16.msra.mxu0 0
        %692 = vmatprep.mubr.bf16.mxu0 0
        %693 = vmatmul.mubr.bf16.gmra.mrb[0].mxu0 %v528
        %v694 = vpop.f32.mrb[0].mxu0
        %v695 = vadd.f32 0.0, %v694
        %v696 = vpop.f32.mrb[0].mxu0
        %v697 = vpop.f32.mrb[0].mxu0
        %v698 = vadd.f32 0.0, %v697
        %v699 = vpop.f32.mrb[0].mxu0
        %700 = vmatprep.mubr.bf16.mxu0 0
        %701 = vmatmul.mubr.bf16.gmra.mrb[0].mxu0 %v531
        %v702 = vpop.f32.mrb[0].mxu0
        %v703 = vadd.f32 0.0, %v702
        %v704 = vpop.f32.mrb[0].mxu0
        %v705 = vpop.f32.mrb[0].mxu0
        %v706 = vadd.f32 0.0, %v705
        %v707 = vpop.f32.mrb[0].mxu0
        %708 = vmatprep.mubr.bf16.mxu0 0
        %709 = vmatmul.mubr.bf16.gmra.mrb[0].mxu0 %v534
        %v710 = vpop.f32.mrb[0].mxu0
        %v711 = vadd.f32 0.0, %v710
        %v712 = vpop.f32.mrb[0].mxu0
        %v713 = vpop.f32.mrb[0].mxu0
        %v714 = vadd.f32 0.0, %v713
        %v715 = vpop.f32.mrb[0].mxu0
        %716 = vmatprep.mubr.bf16.mxu0 0
        %717 = vmatmul.mubr.bf16.gmra.mrb[0].mxu0 %v537
        %v718 = vpop.f32.mrb[0].mxu0
        %v719 = vadd.f32 0.0, %v718
        %v720 = vpop.f32.mrb[0].mxu0
        %v721 = vpop.f32.mrb[0].mxu0
        %v722 = vadd.f32 0.0, %v721
        %v723 = vpop.f32.mrb[0].mxu0
        %724 = vmatprep.mubr.bf16.mxu0 0
        %725 = vmatmul.mubr.bf16.gmra.mrb[0].mxu0 %v540
        %v726 = vpop.f32.mrb[0].mxu0
        %v727 = vadd.f32 0.0, %v726
        %v728 = vpop.f32.mrb[0].mxu0
        %v729 = vpop.f32.mrb[0].mxu0
        %v730 = vadd.f32 0.0, %v729
        %v731 = vpop.f32.mrb[0].mxu0
        %732 = vmatprep.mubr.bf16.mxu0 0
        %733 = vmatmul.mubr.bf16.gmra.mrb[0].mxu0 %v543
        %v734 = vpop.f32.mrb[0].mxu0
        %v735 = vadd.f32 0.0, %v734
        %v736 = vpop.f32.mrb[0].mxu0
        %v737 = vpop.f32.mrb[0].mxu0
        %v738 = vadd.f32 0.0, %v737
        %v739 = vpop.f32.mrb[0].mxu0
        %740 = vmatprep.mubr.bf16.mxu0 0
        %741 = vmatmul.mubr.bf16.gmra.mrb[0].mxu0 %v546
        %v742 = vpop.f32.mrb[0].mxu0
        %v743 = vadd.f32 0.0, %v742
        %v744 = vpop.f32.mrb[0].mxu0
        %v745 = vpop.f32.mrb[0].mxu0
        %v746 = vadd.f32 0.0, %v745
        %v747 = vpop.f32.mrb[0].mxu0
        %748 = vmatprep.mubr.bf16.mxu0 0
        %749 = vmatmul.mubr.bf16.gmra.mrb[0].mxu0 %v549
        %v750 = vpop.f32.mrb[0].mxu0
        %v751 = vadd.f32 0.0, %v750
        %v752 = vpop.f32.mrb[0].mxu0
        %v753 = vpop.f32.mrb[0].mxu0
        %v754 = vadd.f32 0.0, %v753
        %v755 = vpop.f32.mrb[0].mxu0
        %756 = vmatprep.mubr.bf16.mxu0 0
        %757 = vmatmul.mubr.bf16.gmra.mrb[0].mxu0 %v552
        %v758 = vpop.f32.mrb[0].mxu0
        %v759 = vadd.f32 0.0, %v758
        %v760 = vpop.f32.mrb[0].mxu0
        %v761 = vpop.f32.mrb[0].mxu0
        %v762 = vadd.f32 0.0, %v761
        %v763 = vpop.f32.mrb[0].mxu0
        %764 = vmatprep.mubr.bf16.mxu0 0
        %765 = vmatmul.mubr.bf16.gmra.mrb[0].mxu0 %v555
        %v766 = vpop.f32.mrb[0].mxu0
        %v767 = vadd.f32 0.0, %v766
        %v768 = vpop.f32.mrb[0].mxu0
        %v769 = vpop.f32.mrb[0].mxu0
        %v770 = vadd.f32 0.0, %v769
        %v771 = vpop.f32.mrb[0].mxu0
        %772 = vmatprep.mubr.bf16.mxu0 0
        %773 = vmatmul.mubr.bf16.gmra.mrb[0].mxu0 %v558
        %v774 = vpop.f32.mrb[0].mxu0
        %v775 = vadd.f32 0.0, %v774
        %v776 = vpop.f32.mrb[0].mxu0
        %v777 = vpop.f32.mrb[0].mxu0
        %v778 = vadd.f32 0.0, %v777
        %v779 = vpop.f32.mrb[0].mxu0
        %780 = vmatprep.mubr.bf16.mxu0 0
        %781 = vmatmul.mubr.bf16.gmra.mrb[0].mxu0 %v561
        %v782 = vpop.f32.mrb[0].mxu0
        %v783 = vadd.f32 0.0, %v782
        %v784 = vpop.f32.mrb[0].mxu0
        %v785 = vpop.f32.mrb[0].mxu0
        %v786 = vadd.f32 0.0, %v785
        %v787 = vpop.f32.mrb[0].mxu0
        %788 = vmatprep.mubr.bf16.mxu0 0
        %789 = vmatmul.mubr.bf16.gmra.mrb[0].mxu0 %v564
        %v790 = vpop.f32.mrb[0].mxu0
        %v791 = vadd.f32 0.0, %v790
        %v792 = vpop.f32.mrb[0].mxu0
        %v793 = vpop.f32.mrb[0].mxu0
        %v794 = vadd.f32 0.0, %v793
        %v795 = vpop.f32.mrb[0].mxu0
        %796 = vmatprep.mubr.bf16.mxu0 0
        %797 = vmatmul.mubr.bf16.gmra.mrb[0].mxu0 %v567
        %v798 = vpop.f32.mrb[0].mxu0
        %v799 = vadd.f32 0.0, %v798
        %v800 = vpop.f32.mrb[0].mxu0
        %v801 = vpop.f32.mrb[0].mxu0
        %v802 = vadd.f32 0.0, %v801
        %v803 = vpop.f32.mrb[0].mxu0
        %804 = vmatprep.mubr.bf16.mxu0 0
        %805 = vmatmul.mubr.bf16.gmra.mrb[0].mxu0 %v570
        %v806 = vpop.f32.mrb[0].mxu0
        %v807 = vadd.f32 0.0, %v806
        %v808 = vpop.f32.mrb[0].mxu0
        %v809 = vpop.f32.mrb[0].mxu0
        %v810 = vadd.f32 0.0, %v809
        %v811 = vpop.f32.mrb[0].mxu0
        %812 = vmatprep.mubr.bf16.mxu0 0
        %813 = vmatmul.mubr.bf16.gmra.mrb[0].mxu0 %v573
        %v814 = vpop.f32.mrb[0].mxu0
        %v815 = vadd.f32 0.0, %v814
        %v816 = vpop.f32.mrb[0].mxu0
        %v817 = vpop.f32.mrb[0].mxu0
        %v818 = vadd.f32 0.0, %v817
        %v819 = vpop.f32.mrb[0].mxu0
        %820 = vmatprep.mubr.bf16.mxu0 0
        %821 = vmatmul.mubr.bf16.gmra.mrb[0].mxu0 %v576
        %v822 = vpop.f32.mrb[0].mxu0
        %v823 = vadd.f32 0.0, %v822
        %v824 = vpop.f32.mrb[0].mxu0
        %v825 = vpop.f32.mrb[0].mxu0
        %v826 = vadd.f32 0.0, %v825
        %v827 = vpop.f32.mrb[0].mxu0
        %828 = vmatprep.mubr.bf16.mxu0 0
        %829 = vmatmul.mubr.bf16.gmra.mrb[0].mxu0 %v579
        %v830 = vpop.f32.mrb[0].mxu0
        %v831 = vadd.f32 0.0, %v830
        %v832 = vpop.f32.mrb[0].mxu0
        %v833 = vpop.f32.mrb[0].mxu0
        %v834 = vadd.f32 0.0, %v833
        %v835 = vpop.f32.mrb[0].mxu0
        %836 = vmatprep.mubr.bf16.mxu0 0
        %837 = vmatmul.mubr.bf16.gmra.mrb[0].mxu0 %v582
        %v838 = vpop.f32.mrb[0].mxu0
        %v839 = vadd.f32 0.0, %v838
        %v840 = vpop.f32.mrb[0].mxu0
        %v841 = vpop.f32.mrb[0].mxu0
        %v842 = vadd.f32 0.0, %v841
        %v843 = vpop.f32.mrb[0].mxu0
        %844 = vmatprep.mubr.bf16.mxu0 0
        %845 = vmatmul.mubr.bf16.gmra.mrb[0].mxu0 %v585
        %v846 = vpop.f32.mrb[0].mxu0
        %v847 = vadd.f32 0.0, %v846
        %v848 = vpop.f32.mrb[0].mxu0
        %v849 = vpop.f32.mrb[0].mxu0
        %v850 = vadd.f32 0.0, %v849
        %v851 = vpop.f32.mrb[0].mxu0
        %852 = vmatprep.mubr.bf16.mxu0 0
        %853 = vmatmul.mubr.bf16.gmra.mrb[0].mxu0 %v588
        %v854 = vpop.f32.mrb[0].mxu0
        %v855 = vadd.f32 0.0, %v854
        %v856 = vpop.f32.mrb[0].mxu0
        %v857 = vpop.f32.mrb[0].mxu0
        %v858 = vadd.f32 0.0, %v857
        %v859 = vpop.f32.mrb[0].mxu0
        %860 = vmatprep.mubr.bf16.mxu0 0
        %861 = vmatmul.mubr.bf16.gmra.mrb[0].mxu0 %v591
        %v862 = vpop.f32.mrb[0].mxu0
        %v863 = vadd.f32 0.0, %v862
        %v864 = vpop.f32.mrb[0].mxu0
        %v865 = vpop.f32.mrb[0].mxu0
        %v866 = vadd.f32 0.0, %v865
        %v867 = vpop.f32.mrb[0].mxu0
        %868 = vmatprep.mubr.bf16.mxu0 0
        %869 = vmatmul.mubr.bf16.gmra.mrb[0].mxu0 %v594
        %v870 = vpop.f32.mrb[0].mxu0
        %v871 = vadd.f32 0.0, %v870
        %v872 = vpop.f32.mrb[0].mxu0
        %v873 = vpop.f32.mrb[0].mxu0
        %v874 = vadd.f32 0.0, %v873
        %v875 = vpop.f32.mrb[0].mxu0
        %876 = vmatprep.mubr.bf16.mxu0 0
        %877 = vmatmul.mubr.bf16.gmra.mrb[0].mxu0 %v597
        %v878 = vpop.f32.mrb[0].mxu0
        %v879 = vadd.f32 0.0, %v878
        %v880 = vpop.f32.mrb[0].mxu0
        %v881 = vpop.f32.mrb[0].mxu0
        %v882 = vadd.f32 0.0, %v881
        %v883 = vpop.f32.mrb[0].mxu0
        %884 = vmatprep.mubr.bf16.mxu0 0
        %885 = vmatmul.mubr.bf16.gmra.mrb[0].mxu0 %v600
        %v886 = vpop.f32.mrb[0].mxu0
        %v887 = vadd.f32 0.0, %v886
        %v888 = vpop.f32.mrb[0].mxu0
        %v889 = vpop.f32.mrb[0].mxu0
        %v890 = vadd.f32 0.0, %v889
        %v891 = vpop.f32.mrb[0].mxu0
        %892 = vmatprep.mubr.bf16.mxu0 0
        %893 = vmatmul.mubr.bf16.gmra.mrb[0].mxu0 %v603
        %v894 = vpop.f32.mrb[0].mxu0
        %v895 = vadd.f32 0.0, %v894
        %v896 = vpop.f32.mrb[0].mxu0
        %v897 = vpop.f32.mrb[0].mxu0
        %v898 = vadd.f32 0.0, %v897
        %v899 = vpop.f32.mrb[0].mxu0
        %900 = vmatprep.mubr.bf16.mxu0 0
        %901 = vmatmul.mubr.bf16.gmra.mrb[0].mxu0 %v606
        %v902 = vpop.f32.mrb[0].mxu0
        %v903 = vadd.f32 0.0, %v902
        %v904 = vpop.f32.mrb[0].mxu0
        %v905 = vpop.f32.mrb[0].mxu0
        %v906 = vadd.f32 0.0, %v905
        %v907 = vpop.f32.mrb[0].mxu0
        %908 = vmatprep.mubr.bf16.mxu0 0
        %909 = vmatmul.mubr.bf16.gmra.mrb[0].mxu0 %v609
        %v910 = vpop.f32.mrb[0].mxu0
        %v911 = vadd.f32 0.0, %v910
        %v912 = vpop.f32.mrb[0].mxu0
        %v913 = vpop.f32.mrb[0].mxu0
        %v914 = vadd.f32 0.0, %v913
        %v915 = vpop.f32.mrb[0].mxu0
        %916 = vmatprep.mubr.bf16.mxu0 0
        %917 = vmatmul.mubr.bf16.gmra.mrb[0].mxu0 %v612
        %v918 = vpop.f32.mrb[0].mxu0
        %v919 = vadd.f32 0.0, %v918
        %v920 = vpop.f32.mrb[0].mxu0
        %v921 = vpop.f32.mrb[0].mxu0
        %v922 = vadd.f32 0.0, %v921
        %v923 = vpop.f32.mrb[0].mxu0
        %924 = vmatprep.mubr.bf16.mxu0 0
        %925 = vmatmul.mubr.bf16.gmra.mrb[0].mxu0 %v615
        %v926 = vpop.f32.mrb[0].mxu0
        %v927 = vadd.f32 0.0, %v926
        %v928 = vpop.f32.mrb[0].mxu0
        %v929 = vpop.f32.mrb[0].mxu0
        %v930 = vadd.f32 0.0, %v929
        %v931 = vpop.f32.mrb[0].mxu0
        %932 = vmatprep.mubr.bf16.mxu0 0
        %933 = vmatmul.mubr.bf16.gmra.mrb[0].mxu0 %v618
        %v934 = vpop.f32.mrb[0].mxu0
        %v935 = vadd.f32 0.0, %v934
        %v936 = vpop.f32.mrb[0].mxu0
        %v937 = vpop.f32.mrb[0].mxu0
        %v938 = vadd.f32 0.0, %v937
        %v939 = vpop.f32.mrb[0].mxu0
        %940 = vmatprep.mubr.bf16.mxu0 0
        %941 = vmatmul.mubr.bf16.gmra.mrb[0].mxu0 %v621
        %v942 = vpop.f32.mrb[0].mxu0
        %v943 = vadd.f32 0.0, %v942
        %v944 = vpop.f32.mrb[0].mxu0
        %v945 = vpop.f32.mrb[0].mxu0
        %v946 = vadd.f32 0.0, %v945
        %v947 = vpop.f32.mrb[0].mxu0
        %948 = vmatprep.mubr.bf16.mxu0 0
        %949 = vmatmul.mubr.bf16.gmra.mrb[0].mxu0 %v624
        %v950 = vpop.f32.mrb[0].mxu0
        %v951 = vadd.f32 0.0, %v950
        %v952 = vpop.f32.mrb[0].mxu0
        %v953 = vpop.f32.mrb[0].mxu0
        %v954 = vadd.f32 0.0, %v953
        %v955 = vpop.f32.mrb[0].mxu0
        %956 = vmatprep.mubr.bf16.mxu0 0
        %957 = vmatmul.mubr.bf16.gmra.mrb[0].mxu0 %v627
        %v958 = vpop.f32.mrb[0].mxu0
        %v959 = vadd.f32 0.0, %v958
        %v960 = vpop.f32.mrb[0].mxu0
        %v961 = vpop.f32.mrb[0].mxu0
        %v962 = vadd.f32 0.0, %v961
        %v963 = vpop.f32.mrb[0].mxu0
        %964 = vmatprep.mubr.bf16.mxu0 0
        %965 = vmatmul.mubr.bf16.gmra.mrb[0].mxu0 %v630
        %v966 = vpop.f32.mrb[0].mxu0
        %v967 = vadd.f32 0.0, %v966
        %v968 = vpop.f32.mrb[0].mxu0
        %v969 = vpop.f32.mrb[0].mxu0
        %v970 = vadd.f32 0.0, %v969
        %v971 = vpop.f32.mrb[0].mxu0
        %972 = vmatprep.mubr.bf16.mxu0 0
        %973 = vmatmul.mubr.bf16.gmra.mrb[0].mxu0 %v633
        %v974 = vpop.f32.mrb[0].mxu0
        %v975 = vadd.f32 0.0, %v974
        %v976 = vpop.f32.mrb[0].mxu0
        %v977 = vpop.f32.mrb[0].mxu0
        %v978 = vadd.f32 0.0, %v977
        %v979 = vpop.f32.mrb[0].mxu0
        %980 = vmatprep.mubr.bf16.mxu0 0
        %981 = vmatmul.mubr.bf16.gmra.mrb[0].mxu0 %v636
        %v982 = vpop.f32.mrb[0].mxu0
        %v983 = vadd.f32 0.0, %v982
        %v984 = vpop.f32.mrb[0].mxu0
        %v985 = vpop.f32.mrb[0].mxu0
        %v986 = vadd.f32 0.0, %v985
        %v987 = vpop.f32.mrb[0].mxu0
        %988 = vmatprep.mubr.bf16.mxu0 0
        %989 = vmatmul.mubr.bf16.gmra.mrb[0].mxu0 %v639
        %v990 = vpop.f32.mrb[0].mxu0
        %v991 = vadd.f32 0.0, %v990
        %v992 = vpop.f32.mrb[0].mxu0
        %v993 = vpop.f32.mrb[0].mxu0
        %v994 = vadd.f32 0.0, %v993
        %v995 = vpop.f32.mrb[0].mxu0
        %996 = vmatprep.mubr.bf16.mxu0 0
        %997 = vmatmul.mubr.bf16.gmra.mrb[0].mxu0 %v642
        %v998 = vpop.f32.mrb[0].mxu0
        %v999 = vadd.f32 0.0, %v998
        %v1000 = vpop.f32.mrb[0].mxu0
        %v1001 = vpop.f32.mrb[0].mxu0
        %v1002 = vadd.f32 0.0, %v1001
        %v1003 = vpop.f32.mrb[0].mxu0
        %1004 = vmatprep.mubr.bf16.mxu0 0
        %1005 = vmatmul.mubr.bf16.gmra.mrb[0].mxu0 %v645
        %v1006 = vpop.f32.mrb[0].mxu0
        %v1007 = vadd.f32 0.0, %v1006
        %v1008 = vpop.f32.mrb[0].mxu0
        %v1009 = vpop.f32.mrb[0].mxu0
        %v1010 = vadd.f32 0.0, %v1009
        %v1011 = vpop.f32.mrb[0].mxu0
        %1012 = vmatprep.mubr.bf16.mxu0 0
        %1013 = vmatmul.mubr.bf16.gmra.mrb[0].mxu0 %v648
        %v1014 = vpop.f32.mrb[0].mxu0
        %v1015 = vadd.f32 0.0, %v1014
        %v1016 = vpop.f32.mrb[0].mxu0
        %v1017 = vpop.f32.mrb[0].mxu0
        %v1018 = vadd.f32 0.0, %v1017
        %v1019 = vpop.f32.mrb[0].mxu0
        %1020 = vmatprep.mubr.bf16.mxu0 0
        %1021 = vmatmul.mubr.bf16.gmra.mrb[0].mxu0 %v651
        %v1022 = vpop.f32.mrb[0].mxu0
        %v1023 = vadd.f32 0.0, %v1022
        %v1024 = vpop.f32.mrb[0].mxu0
        %v1025 = vpop.f32.mrb[0].mxu0
        %v1026 = vadd.f32 0.0, %v1025
        %v1027 = vpop.f32.mrb[0].mxu0
        %1028 = vdwg.mxu0
        %1029 = vst [vmem:[#allocation2] sm:$0xff] %v695
        %1030 = vst [vmem:[#allocation2 + $0x8] sm:$0xff] %v698
        %1031 = vst [vmem:[#allocation2 + $0x10] sm:$0xff] %v703
        %1032 = vst [vmem:[#allocation2 + $0x18] sm:$0xff] %v706
        %1033 = vst [vmem:[#allocation2 + $0x20] sm:$0xff] %v711
        %1034 = vst [vmem:[#allocation2 + $0x28] sm:$0xff] %v714
        %1035 = vst [vmem:[#allocation2 + $0x30] sm:$0xff] %v719
        %1036 = vst [vmem:[#allocation2 + $0x38] sm:$0xff] %v722
        %1037 = vst [vmem:[#allocation2 + $0x40] sm:$0xff] %v727
        %1038 = vst [vmem:[#allocation2 + $0x48] sm:$0xff] %v730
        %1039 = vst [vmem:[#allocation2 + $0x50] sm:$0xff] %v735
        %1040 = vst [vmem:[#allocation2 + $0x58] sm:$0xff] %v738
        %1041 = vst [vmem:[#allocation2 + $0x60] sm:$0xff] %v743
        %1042 = vst [vmem:[#allocation2 + $0x68] sm:$0xff] %v746
        %1043 = vst [vmem:[#allocation2 + $0x70] sm:$0xff] %v751
        %1044 = vst [vmem:[#allocation2 + $0x78] sm:$0xff] %v754
        %1045 = vst [vmem:[#allocation2 + $0x80] sm:$0xff] %v759
        %1046 = vst [vmem:[#allocation2 + $0x88] sm:$0xff] %v762
        %1047 = vst [vmem:[#allocation2 + $0x90] sm:$0xff] %v767
        %1048 = vst [vmem:[#allocation2 + $0x98] sm:$0xff] %v770
        %1049 = vst [vmem:[#allocation2 + $0xa0] sm:$0xff] %v775
        %1050 = vst [vmem:[#allocation2 + $0xa8] sm:$0xff] %v778
        %1051 = vst [vmem:[#allocation2 + $0xb0] sm:$0xff] %v783
        %1052 = vst [vmem:[#allocation2 + $0xb8] sm:$0xff] %v786
        %1053 = vst [vmem:[#allocation2 + $0xc0] sm:$0xff] %v791
        %1054 = vst [vmem:[#allocation2 + $0xc8] sm:$0xff] %v794
        %1055 = vst [vmem:[#allocation2 + $0xd0] sm:$0xff] %v799
        %1056 = vst [vmem:[#allocation2 + $0xd8] sm:$0xff] %v802
        %1057 = vst [vmem:[#allocation2 + $0xe0] sm:$0xff] %v807
        %1058 = vst [vmem:[#allocation2 + $0xe8] sm:$0xff] %v810
        %1059 = vst [vmem:[#allocation2 + $0xf0] sm:$0xff] %v815
        %1060 = vst [vmem:[#allocation2 + $0xf8] sm:$0xff] %v818
        %1061 = vst [vmem:[#allocation2 + $0x100] sm:$0xff] %v823
        %1062 = vst [vmem:[#allocation2 + $0x108] sm:$0xff] %v826
        %1063 = vst [vmem:[#allocation2 + $0x110] sm:$0xff] %v831
        %1064 = vst [vmem:[#allocation2 + $0x118] sm:$0xff] %v834
        %1065 = vst [vmem:[#allocation2 + $0x120] sm:$0xff] %v839
        %1066 = vst [vmem:[#allocation2 + $0x128] sm:$0xff] %v842
        %1067 = vst [vmem:[#allocation2 + $0x130] sm:$0xff] %v847
        %1068 = vst [vmem:[#allocation2 + $0x138] sm:$0xff] %v850
        %1069 = vst [vmem:[#allocation2 + $0x140] sm:$0xff] %v855
        %1070 = vst [vmem:[#allocation2 + $0x148] sm:$0xff] %v858
        %1071 = vst [vmem:[#allocation2 + $0x150] sm:$0xff] %v863
        %1072 = vst [vmem:[#allocation2 + $0x158] sm:$0xff] %v866
        %1073 = vst [vmem:[#allocation2 + $0x160] sm:$0xff] %v871
        %1074 = vst [vmem:[#allocation2 + $0x168] sm:$0xff] %v874
        %1075 = vst [vmem:[#allocation2 + $0x170] sm:$0xff] %v879
        %1076 = vst [vmem:[#allocation2 + $0x178] sm:$0xff] %v882
        %1077 = vst [vmem:[#allocation2 + $0x180] sm:$0xff] %v887
        %1078 = vst [vmem:[#allocation2 + $0x188] sm:$0xff] %v890
        %1079 = vst [vmem:[#allocation2 + $0x190] sm:$0xff] %v895
        %1080 = vst [vmem:[#allocation2 + $0x198] sm:$0xff] %v898
        %1081 = vst [vmem:[#allocation2 + $0x1a0] sm:$0xff] %v903
        %1082 = vst [vmem:[#allocation2 + $0x1a8] sm:$0xff] %v906
        %1083 = vst [vmem:[#allocation2 + $0x1b0] sm:$0xff] %v911
        %1084 = vst [vmem:[#allocation2 + $0x1b8] sm:$0xff] %v914
        %1085 = vst [vmem:[#allocation2 + $0x1c0] sm:$0xff] %v919
        %1086 = vst [vmem:[#allocation2 + $0x1c8] sm:$0xff] %v922
        %1087 = vst [vmem:[#allocation2 + $0x1d0] sm:$0xff] %v927
        %1088 = vst [vmem:[#allocation2 + $0x1d8] sm:$0xff] %v930
        %1089 = vst [vmem:[#allocation2 + $0x1e0] sm:$0xff] %v935
        %1090 = vst [vmem:[#allocation2 + $0x1e8] sm:$0xff] %v938
        %1091 = vst [vmem:[#allocation2 + $0x1f0] sm:$0xff] %v943
        %1092 = vst [vmem:[#allocation2 + $0x1f8] sm:$0xff] %v946
        %1093 = vst [vmem:[#allocation2 + $0x200] sm:$0xff] %v951
        %1094 = vst [vmem:[#allocation2 + $0x208] sm:$0xff] %v954
        %1095 = vst [vmem:[#allocation2 + $0x210] sm:$0xff] %v959
        %1096 = vst [vmem:[#allocation2 + $0x218] sm:$0xff] %v962
        %1097 = vst [vmem:[#allocation2 + $0x220] sm:$0xff] %v967
        %1098 = vst [vmem:[#allocation2 + $0x228] sm:$0xff] %v970
        %1099 = vst [vmem:[#allocation2 + $0x230] sm:$0xff] %v975
        %1100 = vst [vmem:[#allocation2 + $0x238] sm:$0xff] %v978
        %1101 = vst [vmem:[#allocation2 + $0x240] sm:$0xff] %v983
        %1102 = vst [vmem:[#allocation2 + $0x248] sm:$0xff] %v986
        %1103 = vst [vmem:[#allocation2 + $0x250] sm:$0xff] %v991
        %1104 = vst [vmem:[#allocation2 + $0x258] sm:$0xff] %v994
        %1105 = vst [vmem:[#allocation2 + $0x260] sm:$0xff] %v999
        %1106 = vst [vmem:[#allocation2 + $0x268] sm:$0xff] %v1002
        %1107 = vst [vmem:[#allocation2 + $0x270] sm:$0xff] %v1007
        %1108 = vst [vmem:[#allocation2 + $0x278] sm:$0xff] %v1010
        %1109 = vst [vmem:[#allocation2 + $0x280] sm:$0xff] %v1015
        %1110 = vst [vmem:[#allocation2 + $0x288] sm:$0xff] %v1018
        %1111 = vst [vmem:[#allocation2 + $0x290] sm:$0xff] %v1023
        %1112 = vst [vmem:[#allocation2 + $0x298] sm:$0xff] %v1026
        %v1113 = vld [vmem:[%s2] sm:$0x1]
        %v1114 = vld [vmem:[#allocation2] ss:$2 sm:$0xff]
        %s1115 = scalar_lea.vmem [#allocation2], 16
        %v1116 = vld [vmem:[%s1115] ss:$2 sm:$0x3f]
        %s1117 = scalar_lea.vmem [#allocation2], 1
        %v1118 = vld [vmem:[%s1117] ss:$2 sm:$0xff]
        %s1119 = scalar_lea.vmem [#allocation2], 17
        %v1120 = vld [vmem:[%s1119] ss:$2 sm:$0x3f]
        %s1121 = scalar_lea.vmem [#allocation2], 28
        %v1122 = vld [vmem:[%s1121] ss:$2 sm:$0xff]
        %s1123 = scalar_lea.vmem [#allocation2], 44
        %v1124 = vld [vmem:[%s1123] ss:$2 sm:$0x3f]
        %s1125 = scalar_lea.vmem [#allocation2], 29
        %v1126 = vld [vmem:[%s1125] ss:$2 sm:$0xff]
        %s1127 = scalar_lea.vmem [#allocation2], 45
        %v1128 = vld [vmem:[%s1127] ss:$2 sm:$0x3f]
        %v1129 = vmax.f32 %v1114, %v1118
        %v1130 = vmax.f32 %v1116, %v1120
        %v1131 = vmax.f32 %v1122, %v1126
        %v1132 = vmax.f32 %v1124, %v1128
        %v1133 = vmax.f32 %v1129, %v1131
        %v1134 = vmax.f32 %v1130, %v1132
        %v1136 = vlaneseq
        %v1137 = vshrl.u32 %v1136, 7
        %v1138 = vsub.s32 0, %v1137
        %v1139 = vrot.slane %v1113, %v1138
        %v1141 = vadd.f32 %v1133, %v1139
        %v1142 = vadd.f32 %v1134, %v1139
        %v1143 = vmax.f32 %v1141, 0.0
        %v1144 = vmax.f32 %v1142, 0.0
        %v1145 = vpack.c.bf16 %v1144, %v1143
        %v1147 = vunpack.c.l.b16 %v1145
        %v1148 = vunpack.c.h.b16 %v1145
        %v1149 = vpack.c.b16 %v1147, %v1147
        %v1150 = vpack.c.b16 %v1148, %v1148
        %1153 = vst [vmem:[%s172] sm:$0xf] %v1149
        %1154 = vst [vmem:[%s172 + $0x4] sm:$0x7] %v1150
        %s1155 = scalar_lea.vmem [#allocation2], 56
        %v1156 = vld [vmem:[%s1155] ss:$2 sm:$0xff]
        %s1157 = scalar_lea.vmem [#allocation2], 72
        %v1158 = vld [vmem:[%s1157] ss:$2 sm:$0x3f]
        %s1159 = scalar_lea.vmem [#allocation2], 57
        %v1160 = vld [vmem:[%s1159] ss:$2 sm:$0xff]
        %s1161 = scalar_lea.vmem [#allocation2], 73
        %v1162 = vld [vmem:[%s1161] ss:$2 sm:$0x3f]
        %s1163 = scalar_lea.vmem [#allocation2], 84
        %v1164 = vld [vmem:[%s1163] ss:$2 sm:$0xff]
        %s1165 = scalar_lea.vmem [#allocation2], 100
        %v1166 = vld [vmem:[%s1165] ss:$2 sm:$0x3f]
        %s1167 = scalar_lea.vmem [#allocation2], 85
        %v1168 = vld [vmem:[%s1167] ss:$2 sm:$0xff]
        %s1169 = scalar_lea.vmem [#allocation2], 101
        %v1170 = vld [vmem:[%s1169] ss:$2 sm:$0x3f]
        %v1171 = vmax.f32 %v1156, %v1160
        %v1172 = vmax.f32 %v1158, %v1162
        %v1173 = vmax.f32 %v1164, %v1168
        %v1174 = vmax.f32 %v1166, %v1170
        %v1175 = vmax.f32 %v1171, %v1173
        %v1176 = vmax.f32 %v1172, %v1174
        %v1177 = vadd.f32 %v1175, %v1139
        %v1178 = vadd.f32 %v1176, %v1139
        %v1179 = vmax.f32 %v1177, 0.0
        %v1180 = vmax.f32 %v1178, 0.0
        %v1181 = vpack.c.bf16 %v1180, %v1179
        %v1183 = vunpack.c.l.b16 %v1181
        %v1184 = vunpack.c.h.b16 %v1181
        %v1185 = vpack.c.b16 %v1183, %v1183
        %v1186 = vpack.c.b16 %v1184, %v1184
        %vm1187 = vcmask 1042432
        %vm1188 = vcmask 1046532
        %vm1189 = vmor %vm1187, %vm1188
        %v1190 = vrot.slane %v1185, 5
        %v1191 = vrot.slane %v1190, 4
        %v1192 = vrot.slane %v1186, 5
        %v1193 = vsel %vm1189, %v1191, %v1192
        %v1194 = vrot.slane %v1192, 4
        %1198 = vst [vmem:[%s172 + $0x4] sm:$0x8] %v1190
        %1199 = vst [vmem:[%s172 + $0x8] sm:$0xf] %v1193
        %1200 = vst [vmem:[%s172 + $0xc] sm:$0x3] %v1194
        %s1201 = scalar_lea.vmem [#allocation2], 112
        %v1202 = vld [vmem:[%s1201] ss:$2 sm:$0xff]
        %s1203 = scalar_lea.vmem [#allocation2], 128
        %v1204 = vld [vmem:[%s1203] ss:$2 sm:$0x3f]
        %s1205 = scalar_lea.vmem [#allocation2], 113
        %v1206 = vld [vmem:[%s1205] ss:$2 sm:$0xff]
        %s1207 = scalar_lea.vmem [#allocation2], 129
        %v1208 = vld [vmem:[%s1207] ss:$2 sm:$0x3f]
        %s1209 = scalar_lea.vmem [#allocation2], 140
        %v1210 = vld [vmem:[%s1209] ss:$2 sm:$0xff]
        %s1211 = scalar_lea.vmem [#allocation2], 156
        %v1212 = vld [vmem:[%s1211] ss:$2 sm:$0x3f]
        %s1213 = scalar_lea.vmem [#allocation2], 141
        %v1214 = vld [vmem:[%s1213] ss:$2 sm:$0xff]
        %s1215 = scalar_lea.vmem [#allocation2], 157
        %v1216 = vld [vmem:[%s1215] ss:$2 sm:$0x3f]
        %v1217 = vmax.f32 %v1202, %v1206
        %v1218 = vmax.f32 %v1204, %v1208
        %v1219 = vmax.f32 %v1210, %v1214
        %v1220 = vmax.f32 %v1212, %v1216
        %v1221 = vmax.f32 %v1217, %v1219
        %v1222 = vmax.f32 %v1218, %v1220
        %v1223 = vadd.f32 %v1221, %v1139
        %v1224 = vadd.f32 %v1222, %v1139
        %v1225 = vmax.f32 %v1223, 0.0
        %v1226 = vmax.f32 %v1224, 0.0
        %v1227 = vpack.c.bf16 %v1226, %v1225
        %v1229 = vunpack.c.l.b16 %v1227
        %v1230 = vunpack.c.h.b16 %v1227
        %v1231 = vpack.c.b16 %v1229, %v1229
        %v1232 = vpack.c.b16 %v1230, %v1230
        %vm1233 = vcmask 1041408
        %vm1234 = vcmask 1045508
        %vm1235 = vmor %vm1233, %vm1234
        %v1236 = vrot.slane %v1231, 6
        %v1237 = vrot.slane %v1236, 4
        %v1238 = vrot.slane %v1232, 6
        %v1239 = vsel %vm1235, %v1237, %v1238
        %v1240 = vrot.slane %v1238, 4
        %1244 = vst [vmem:[%s172 + $0xc] sm:$0xc] %v1236
        %1245 = vst [vmem:[%s172 + $0x10] sm:$0xf] %v1239
        %1246 = vst [vmem:[%s172 + $0x14] sm:$0x1] %v1240
        %s1247 = scalar_lea.vmem [#allocation2], 168
        %v1248 = vld [vmem:[%s1247] ss:$2 sm:$0xff]
        %s1249 = scalar_lea.vmem [#allocation2], 184
        %v1250 = vld [vmem:[%s1249] ss:$2 sm:$0x3f]
        %s1251 = scalar_lea.vmem [#allocation2], 169
        %v1252 = vld [vmem:[%s1251] ss:$2 sm:$0xff]
        %s1253 = scalar_lea.vmem [#allocation2], 185
        %v1254 = vld [vmem:[%s1253] ss:$2 sm:$0x3f]
        %s1255 = scalar_lea.vmem [#allocation2], 196
        %v1256 = vld [vmem:[%s1255] ss:$2 sm:$0xff]
        %s1257 = scalar_lea.vmem [#allocation2], 212
        %v1258 = vld [vmem:[%s1257] ss:$2 sm:$0x3f]
        %s1259 = scalar_lea.vmem [#allocation2], 197
        %v1260 = vld [vmem:[%s1259] ss:$2 sm:$0xff]
        %s1261 = scalar_lea.vmem [#allocation2], 213
        %v1262 = vld [vmem:[%s1261] ss:$2 sm:$0x3f]
        %v1263 = vmax.f32 %v1248, %v1252
        %v1264 = vmax.f32 %v1250, %v1254
        %v1265 = vmax.f32 %v1256, %v1260
        %v1266 = vmax.f32 %v1258, %v1262
        %v1267 = vmax.f32 %v1263, %v1265
        %v1268 = vmax.f32 %v1264, %v1266
        %v1269 = vadd.f32 %v1267, %v1139
        %v1270 = vadd.f32 %v1268, %v1139
        %v1271 = vmax.f32 %v1269, 0.0
        %v1272 = vmax.f32 %v1270, 0.0
        %v1273 = vpack.c.bf16 %v1272, %v1271
        %v1275 = vunpack.c.l.b16 %v1273
        %v1276 = vunpack.c.h.b16 %v1273
        %v1277 = vpack.c.b16 %v1275, %v1275
        %v1278 = vpack.c.b16 %v1276, %v1276
        %vm1279 = vcmask 1040384
        %vm1280 = vcmask 1044484
        %vm1281 = vmor %vm1279, %vm1280
        %v1282 = vrot.slane %v1277, 7
        %v1283 = vrot.slane %v1282, 4
        %v1284 = vrot.slane %v1278, 7
        %v1285 = vsel %vm1281, %v1283, %v1284
        %1288 = vst [vmem:[%s172 + $0x14] sm:$0xe] %v1282
        %1289 = vst [vmem:[%s172 + $0x18] sm:$0xf] %v1285
        %s1290 = scalar_lea.vmem [#allocation2], 224
        %v1291 = vld [vmem:[%s1290] ss:$2 sm:$0xff]
        %s1292 = scalar_lea.vmem [#allocation2], 240
        %v1293 = vld [vmem:[%s1292] ss:$2 sm:$0x3f]
        %s1294 = scalar_lea.vmem [#allocation2], 225
        %v1295 = vld [vmem:[%s1294] ss:$2 sm:$0xff]
        %s1296 = scalar_lea.vmem [#allocation2], 241
        %v1297 = vld [vmem:[%s1296] ss:$2 sm:$0x3f]
        %s1298 = scalar_lea.vmem [#allocation2], 252
        %v1299 = vld [vmem:[%s1298] ss:$2 sm:$0xff]
        %s1300 = scalar_lea.vmem [#allocation2], 268
        %v1301 = vld [vmem:[%s1300] ss:$2 sm:$0x3f]
        %s1302 = scalar_lea.vmem [#allocation2], 253
        %v1303 = vld [vmem:[%s1302] ss:$2 sm:$0xff]
        %s1304 = scalar_lea.vmem [#allocation2], 269
        %v1305 = vld [vmem:[%s1304] ss:$2 sm:$0x3f]
        %v1306 = vmax.f32 %v1291, %v1295
        %v1307 = vmax.f32 %v1293, %v1297
        %v1308 = vmax.f32 %v1299, %v1303
        %v1309 = vmax.f32 %v1301, %v1305
        %v1310 = vmax.f32 %v1306, %v1308
        %v1311 = vmax.f32 %v1307, %v1309
        %v1312 = vadd.f32 %v1310, %v1139
        %v1313 = vadd.f32 %v1311, %v1139
        %v1314 = vmax.f32 %v1312, 0.0
        %v1315 = vmax.f32 %v1313, 0.0
        %v1316 = vpack.c.bf16 %v1315, %v1314
        %v1318 = vunpack.c.l.b16 %v1316
        %v1319 = vunpack.c.h.b16 %v1316
        %v1320 = vpack.c.b16 %v1318, %v1318
        %v1321 = vpack.c.b16 %v1319, %v1319
        %1324 = vst [vmem:[%s172 + $0x1c] sm:$0xf] %v1320
        %1325 = vst [vmem:[%s172 + $0x20] sm:$0x7] %v1321
        %s1326 = scalar_lea.vmem [#allocation2], 280
        %v1327 = vld [vmem:[%s1326] ss:$2 sm:$0xff]
        %s1328 = scalar_lea.vmem [#allocation2], 296
        %v1329 = vld [vmem:[%s1328] ss:$2 sm:$0x3f]
        %s1330 = scalar_lea.vmem [#allocation2], 281
        %v1331 = vld [vmem:[%s1330] ss:$2 sm:$0xff]
        %s1332 = scalar_lea.vmem [#allocation2], 297
        %v1333 = vld [vmem:[%s1332] ss:$2 sm:$0x3f]
        %s1334 = scalar_lea.vmem [#allocation2], 308
        %v1335 = vld [vmem:[%s1334] ss:$2 sm:$0xff]
        %s1336 = scalar_lea.vmem [#allocation2], 324
        %v1337 = vld [vmem:[%s1336] ss:$2 sm:$0x3f]
        %s1338 = scalar_lea.vmem [#allocation2], 309
        %v1339 = vld [vmem:[%s1338] ss:$2 sm:$0xff]
        %s1340 = scalar_lea.vmem [#allocation2], 325
        %v1341 = vld [vmem:[%s1340] ss:$2 sm:$0x3f]
        %v1342 = vmax.f32 %v1327, %v1331
        %v1343 = vmax.f32 %v1329, %v1333
        %v1344 = vmax.f32 %v1335, %v1339
        %v1345 = vmax.f32 %v1337, %v1341
        %v1346 = vmax.f32 %v1342, %v1344
        %v1347 = vmax.f32 %v1343, %v1345
        %v1348 = vadd.f32 %v1346, %v1139
        %v1349 = vadd.f32 %v1347, %v1139
        %v1350 = vmax.f32 %v1348, 0.0
        %v1351 = vmax.f32 %v1349, 0.0
        %v1352 = vpack.c.bf16 %v1351, %v1350
        %v1354 = vunpack.c.l.b16 %v1352
        %v1355 = vunpack.c.h.b16 %v1352
        %v1356 = vpack.c.b16 %v1354, %v1354
        %v1357 = vpack.c.b16 %v1355, %v1355
        %v1358 = vrot.slane %v1356, 5
        %v1359 = vrot.slane %v1358, 4
        %v1360 = vrot.slane %v1357, 5
        %v1361 = vsel %vm1189, %v1359, %v1360
        %v1362 = vrot.slane %v1360, 4
        %1366 = vst [vmem:[%s172 + $0x20] sm:$0x8] %v1358
        %1367 = vst [vmem:[%s172 + $0x24] sm:$0xf] %v1361
        %1368 = vst [vmem:[%s172 + $0x28] sm:$0x3] %v1362
        %s1369 = scalar_lea.vmem [#allocation2], 336
        %v1370 = vld [vmem:[%s1369] ss:$2 sm:$0xff]
        %s1371 = scalar_lea.vmem [#allocation2], 352
        %v1372 = vld [vmem:[%s1371] ss:$2 sm:$0x3f]
        %s1373 = scalar_lea.vmem [#allocation2], 337
        %v1374 = vld [vmem:[%s1373] ss:$2 sm:$0xff]
        %s1375 = scalar_lea.vmem [#allocation2], 353
        %v1376 = vld [vmem:[%s1375] ss:$2 sm:$0x3f]
        %s1377 = scalar_lea.vmem [#allocation2], 364
        %v1378 = vld [vmem:[%s1377] ss:$2 sm:$0xff]
        %s1379 = scalar_lea.vmem [#allocation2], 380
        %v1380 = vld [vmem:[%s1379] ss:$2 sm:$0x3f]
        %s1381 = scalar_lea.vmem [#allocation2], 365
        %v1382 = vld [vmem:[%s1381] ss:$2 sm:$0xff]
        %s1383 = scalar_lea.vmem [#allocation2], 381
        %v1384 = vld [vmem:[%s1383] ss:$2 sm:$0x3f]
        %v1385 = vmax.f32 %v1370, %v1374
        %v1386 = vmax.f32 %v1372, %v1376
        %v1387 = vmax.f32 %v1378, %v1382
        %v1388 = vmax.f32 %v1380, %v1384
        %v1389 = vmax.f32 %v1385, %v1387
        %v1390 = vmax.f32 %v1386, %v1388
        %v1391 = vadd.f32 %v1389, %v1139
        %v1392 = vadd.f32 %v1390, %v1139
        %v1393 = vmax.f32 %v1391, 0.0
        %v1394 = vmax.f32 %v1392, 0.0
        %v1395 = vpack.c.bf16 %v1394, %v1393
        %v1397 = vunpack.c.l.b16 %v1395
        %v1398 = vunpack.c.h.b16 %v1395
        %v1399 = vpack.c.b16 %v1397, %v1397
        %v1400 = vpack.c.b16 %v1398, %v1398
        %v1401 = vrot.slane %v1399, 6
        %v1402 = vrot.slane %v1401, 4
        %v1403 = vrot.slane %v1400, 6
        %v1404 = vsel %vm1235, %v1402, %v1403
        %v1405 = vrot.slane %v1403, 4
        %1409 = vst [vmem:[%s172 + $0x28] sm:$0xc] %v1401
        %1410 = vst [vmem:[%s172 + $0x2c] sm:$0xf] %v1404
        %1411 = vst [vmem:[%s172 + $0x30] sm:$0x1] %v1405
        %s1412 = scalar_lea.vmem [#allocation2], 392
        %v1413 = vld [vmem:[%s1412] ss:$2 sm:$0xff]
        %s1414 = scalar_lea.vmem [#allocation2], 408
        %v1415 = vld [vmem:[%s1414] ss:$2 sm:$0x3f]
        %s1416 = scalar_lea.vmem [#allocation2], 393
        %v1417 = vld [vmem:[%s1416] ss:$2 sm:$0xff]
        %s1418 = scalar_lea.vmem [#allocation2], 409
        %v1419 = vld [vmem:[%s1418] ss:$2 sm:$0x3f]
        %s1420 = scalar_lea.vmem [#allocation2], 420
        %v1421 = vld [vmem:[%s1420] ss:$2 sm:$0xff]
        %s1422 = scalar_lea.vmem [#allocation2], 436
        %v1423 = vld [vmem:[%s1422] ss:$2 sm:$0x3f]
        %s1424 = scalar_lea.vmem [#allocation2], 421
        %v1425 = vld [vmem:[%s1424] ss:$2 sm:$0xff]
        %s1426 = scalar_lea.vmem [#allocation2], 437
        %v1427 = vld [vmem:[%s1426] ss:$2 sm:$0x3f]
        %v1428 = vmax.f32 %v1413, %v1417
        %v1429 = vmax.f32 %v1415, %v1419
        %v1430 = vmax.f32 %v1421, %v1425
        %v1431 = vmax.f32 %v1423, %v1427
        %v1432 = vmax.f32 %v1428, %v1430
        %v1433 = vmax.f32 %v1429, %v1431
        %v1434 = vadd.f32 %v1432, %v1139
        %v1435 = vadd.f32 %v1433, %v1139
        %v1436 = vmax.f32 %v1434, 0.0
        %v1437 = vmax.f32 %v1435, 0.0
        %v1438 = vpack.c.bf16 %v1437, %v1436
        %v1440 = vunpack.c.l.b16 %v1438
        %v1441 = vunpack.c.h.b16 %v1438
        %v1442 = vpack.c.b16 %v1440, %v1440
        %v1443 = vpack.c.b16 %v1441, %v1441
        %v1444 = vrot.slane %v1442, 7
        %v1445 = vrot.slane %v1444, 4
        %v1446 = vrot.slane %v1443, 7
        %v1447 = vsel %vm1281, %v1445, %v1446
        %1450 = vst [vmem:[%s172 + $0x30] sm:$0xe] %v1444
        %1451 = vst [vmem:[%s172 + $0x34] sm:$0xf] %v1447
        %s1452 = scalar_lea.vmem [#allocation2], 448
        %v1453 = vld [vmem:[%s1452] ss:$2 sm:$0xff]
        %s1454 = scalar_lea.vmem [#allocation2], 464
        %v1455 = vld [vmem:[%s1454] ss:$2 sm:$0x3f]
        %s1456 = scalar_lea.vmem [#allocation2], 449
        %v1457 = vld [vmem:[%s1456] ss:$2 sm:$0xff]
        %s1458 = scalar_lea.vmem [#allocation2], 465
        %v1459 = vld [vmem:[%s1458] ss:$2 sm:$0x3f]
        %s1460 = scalar_lea.vmem [#allocation2], 476
        %v1461 = vld [vmem:[%s1460] ss:$2 sm:$0xff]
        %s1462 = scalar_lea.vmem [#allocation2], 492
        %v1463 = vld [vmem:[%s1462] ss:$2 sm:$0x3f]
        %s1464 = scalar_lea.vmem [#allocation2], 477
        %v1465 = vld [vmem:[%s1464] ss:$2 sm:$0xff]
        %s1466 = scalar_lea.vmem [#allocation2], 493
        %v1467 = vld [vmem:[%s1466] ss:$2 sm:$0x3f]
        %v1468 = vmax.f32 %v1453, %v1457
        %v1469 = vmax.f32 %v1455, %v1459
        %v1470 = vmax.f32 %v1461, %v1465
        %v1471 = vmax.f32 %v1463, %v1467
        %v1472 = vmax.f32 %v1468, %v1470
        %v1473 = vmax.f32 %v1469, %v1471
        %v1474 = vadd.f32 %v1472, %v1139
        %v1475 = vadd.f32 %v1473, %v1139
        %v1476 = vmax.f32 %v1474, 0.0
        %v1477 = vmax.f32 %v1475, 0.0
        %v1478 = vpack.c.bf16 %v1477, %v1476
        %v1480 = vunpack.c.l.b16 %v1478
        %v1481 = vunpack.c.h.b16 %v1478
        %v1482 = vpack.c.b16 %v1480, %v1480
        %v1483 = vpack.c.b16 %v1481, %v1481
        %1486 = vst [vmem:[%s172 + $0x38] sm:$0xf] %v1482
        %1487 = vst [vmem:[%s172 + $0x3c] sm:$0x7] %v1483
        %s1488 = scalar_lea.vmem [#allocation2], 504
        %v1489 = vld [vmem:[%s1488] ss:$2 sm:$0xff]
        %s1490 = scalar_lea.vmem [#allocation2], 520
        %v1491 = vld [vmem:[%s1490] ss:$2 sm:$0x3f]
        %s1492 = scalar_lea.vmem [#allocation2], 505
        %v1493 = vld [vmem:[%s1492] ss:$2 sm:$0xff]
        %s1494 = scalar_lea.vmem [#allocation2], 521
        %v1495 = vld [vmem:[%s1494] ss:$2 sm:$0x3f]
        %s1496 = scalar_lea.vmem [#allocation2], 532
        %v1497 = vld [vmem:[%s1496] ss:$2 sm:$0xff]
        %s1498 = scalar_lea.vmem [#allocation2], 548
        %v1499 = vld [vmem:[%s1498] ss:$2 sm:$0x3f]
        %s1500 = scalar_lea.vmem [#allocation2], 533
        %v1501 = vld [vmem:[%s1500] ss:$2 sm:$0xff]
        %s1502 = scalar_lea.vmem [#allocation2], 549
        %v1503 = vld [vmem:[%s1502] ss:$2 sm:$0x3f]
        %v1504 = vmax.f32 %v1489, %v1493
        %v1505 = vmax.f32 %v1491, %v1495
        %v1506 = vmax.f32 %v1497, %v1501
        %v1507 = vmax.f32 %v1499, %v1503
        %v1508 = vmax.f32 %v1504, %v1506
        %v1509 = vmax.f32 %v1505, %v1507
        %v1510 = vadd.f32 %v1508, %v1139
        %v1511 = vadd.f32 %v1509, %v1139
        %v1512 = vmax.f32 %v1510, 0.0
        %v1513 = vmax.f32 %v1511, 0.0
        %v1514 = vpack.c.bf16 %v1513, %v1512
        %v1516 = vunpack.c.l.b16 %v1514
        %v1517 = vunpack.c.h.b16 %v1514
        %v1518 = vpack.c.b16 %v1516, %v1516
        %v1519 = vpack.c.b16 %v1517, %v1517
        %v1520 = vrot.slane %v1518, 5
        %v1521 = vrot.slane %v1520, 4
        %v1522 = vrot.slane %v1519, 5
        %v1523 = vsel %vm1189, %v1521, %v1522
        %v1524 = vrot.slane %v1522, 4
        %1528 = vst [vmem:[%s172 + $0x3c] sm:$0x8] %v1520
        %1529 = vst [vmem:[%s172 + $0x40] sm:$0xf] %v1523
        %1530 = vst [vmem:[%s172 + $0x44] sm:$0x3] %v1524
        %s1531 = scalar_lea.vmem [#allocation2], 560
        %v1532 = vld [vmem:[%s1531] ss:$2 sm:$0xff]
        %s1533 = scalar_lea.vmem [#allocation2], 576
        %v1534 = vld [vmem:[%s1533] ss:$2 sm:$0x3f]
        %s1535 = scalar_lea.vmem [#allocation2], 561
        %v1536 = vld [vmem:[%s1535] ss:$2 sm:$0xff]
        %s1537 = scalar_lea.vmem [#allocation2], 577
        %v1538 = vld [vmem:[%s1537] ss:$2 sm:$0x3f]
        %s1539 = scalar_lea.vmem [#allocation2], 588
        %v1540 = vld [vmem:[%s1539] ss:$2 sm:$0xff]
        %s1541 = scalar_lea.vmem [#allocation2], 604
        %v1542 = vld [vmem:[%s1541] ss:$2 sm:$0x3f]
        %s1543 = scalar_lea.vmem [#allocation2], 589
        %v1544 = vld [vmem:[%s1543] ss:$2 sm:$0xff]
        %s1545 = scalar_lea.vmem [#allocation2], 605
        %v1546 = vld [vmem:[%s1545] ss:$2 sm:$0x3f]
        %v1547 = vmax.f32 %v1532, %v1536
        %v1548 = vmax.f32 %v1534, %v1538
        %v1549 = vmax.f32 %v1540, %v1544
        %v1550 = vmax.f32 %v1542, %v1546
        %v1551 = vmax.f32 %v1547, %v1549
        %v1552 = vmax.f32 %v1548, %v1550
        %v1553 = vadd.f32 %v1551, %v1139
        %v1554 = vadd.f32 %v1552, %v1139
        %v1555 = vmax.f32 %v1553, 0.0
        %v1556 = vmax.f32 %v1554, 0.0
        %v1557 = vpack.c.bf16 %v1556, %v1555
        %v1559 = vunpack.c.l.b16 %v1557
        %v1560 = vunpack.c.h.b16 %v1557
        %v1561 = vpack.c.b16 %v1559, %v1559
        %v1562 = vpack.c.b16 %v1560, %v1560
        %v1563 = vrot.slane %v1561, 6
        %v1564 = vrot.slane %v1563, 4
        %v1565 = vrot.slane %v1562, 6
        %v1566 = vsel %vm1235, %v1564, %v1565
        %v1567 = vrot.slane %v1565, 4
        %1571 = vst [vmem:[%s172 + $0x44] sm:$0xc] %v1563
        %1572 = vst [vmem:[%s172 + $0x48] sm:$0xf] %v1566
        %1573 = vst [vmem:[%s172 + $0x4c] sm:$0x1] %v1567
        %s1574 = scalar_lea.vmem [#allocation2], 616
        %v1575 = vld [vmem:[%s1574] ss:$2 sm:$0xff]
        %s1576 = scalar_lea.vmem [#allocation2], 632
        %v1577 = vld [vmem:[%s1576] ss:$2 sm:$0x3f]
        %s1578 = scalar_lea.vmem [#allocation2], 617
        %v1579 = vld [vmem:[%s1578] ss:$2 sm:$0xff]
        %s1580 = scalar_lea.vmem [#allocation2], 633
        %v1581 = vld [vmem:[%s1580] ss:$2 sm:$0x3f]
        %s1582 = scalar_lea.vmem [#allocation2], 644
        %v1583 = vld [vmem:[%s1582] ss:$2 sm:$0xff]
        %s1584 = scalar_lea.vmem [#allocation2], 660
        %v1585 = vld [vmem:[%s1584] ss:$2 sm:$0x3f]
        %s1586 = scalar_lea.vmem [#allocation2], 645
        %v1587 = vld [vmem:[%s1586] ss:$2 sm:$0xff]
        %s1588 = scalar_lea.vmem [#allocation2], 661
        %v1589 = vld [vmem:[%s1588] ss:$2 sm:$0x3f]
        %v1590 = vmax.f32 %v1575, %v1579
        %v1591 = vmax.f32 %v1577, %v1581
        %v1592 = vmax.f32 %v1583, %v1587
        %v1593 = vmax.f32 %v1585, %v1589
        %v1594 = vmax.f32 %v1590, %v1592
        %v1595 = vmax.f32 %v1591, %v1593
        %v1596 = vadd.f32 %v1594, %v1139
        %v1597 = vadd.f32 %v1595, %v1139
        %v1598 = vmax.f32 %v1596, 0.0
        %v1599 = vmax.f32 %v1597, 0.0
        %v1600 = vpack.c.bf16 %v1599, %v1598
        %v1602 = vunpack.c.l.b16 %v1600
        %v1603 = vunpack.c.h.b16 %v1600
        %v1604 = vpack.c.b16 %v1602, %v1602
        %v1605 = vpack.c.b16 %v1603, %v1603
        %v1606 = vrot.slane %v1604, 7
        %v1607 = vrot.slane %v1606, 4
        %v1608 = vrot.slane %v1605, 7
        %v1609 = vsel %vm1281, %v1607, %v1608
        %1612 = vst [vmem:[%s172 + $0x4c] sm:$0xe] %v1606
        %1613 = vst [vmem:[%s172 + $0x50] sm:$0xf] %v1609
        %s1614 = sand.u32 %s90, 1
        %s1615 = sand.u32 %s90, 1
        %s1616 = smul.addr %s1615, 84
        %s1617 = scalar_lea.vmem [#allocation3], %s1616
        // Predicated region
        $region33: #{net_forward.3} parent=31 // pred_check
          %p1618 = pneg %p100
        $region34: #{net_forward.3} parent=31 // pred_check_branch
          %1620 = sbr.rel (%p1618) target = $region36
        $region35: #{net_forward.3} parent=31 // pred_region
          %s1621 = smul.u32 21, %s14
          %s1622 = ssub.s32 49, %s1621
          %p1623 = scmp.lt.s32.totalorder %s1622, 21
          %s1624 = scalar_select %p1623, %s1622, 21
          %s1625 = smul.u32 64, %s1624
          %p1626 = scmp.ne.s32.totalorder 0, %s1625
          %s1627 = smul.addr %s1621, 4
          %s1628 = scalar_lea.vmem %s3, %s1627
          // Predicated region
          $region37: #{net_forward.3} parent=35 // pred_check
            %p1629 = pneg %p1626
          $region38: #{net_forward.3} parent=35 // pred_check_branch
            %1631 = sbr.rel (%p1629) target = $region40
          $region39: #{net_forward.3} parent=35 // pred_region
            // Predicated region
            $region41: #{net_forward.3} parent=39 // pred_check
              _
            $region42: #{net_forward.3} parent=39 // pred_check_branch
              %1633 = sbr.rel target = $region44
            $region43: #{net_forward.3} parent=39 // pred_region
              // Predicated region
              $region63: #{net_forward.3} parent=43 // pred_check
                _
              $region64: #{net_forward.3} parent=43 // pred_check_branch
                %1723 = sbr.rel (0) target = $region66
              $region65: #{net_forward.3} parent=43 // pred_region
                %s1725 = sdiv.u32.pop %s1624, 21
                %s1726 = srem.u32.pop %s1624, 21
                // While loop
                $region67: #{net_forward.3} parent=65 // loop_pre_header
                  _
                $region68: #{net_forward.3} parent=65 // loop_header
                  %s1728 = sphi 0, %s1730
                  %p1729 = scmp.ge.s32.totalorder %s1728, %s1725
                  %s1733 = sphi 0, %s1780
                  %s1734 = sphi %s1617, %s1783
                  %s1735 = sphi %s1628, %s1784
                $region69: #{net_forward.3} parent=65 // loop_header_branch
                  %1732 = sbr.rel (%p1729) target = $region73
                $region70: #{net_forward.3} parent=65 // loop_body
                  %v1736 = vld [vmem:[%s1734] sm:$0xf]
                  %1737 = vst [vmem:[%s1735] sm:$0xf] %v1736
                  %v1738 = vld [vmem:[%s1734 + $0x4] sm:$0xf]
                  %1739 = vst [vmem:[%s1735 + $0x4] sm:$0xf] %v1738
                  %v1740 = vld [vmem:[%s1734 + $0x8] sm:$0xf]
                  %1741 = vst [vmem:[%s1735 + $0x8] sm:$0xf] %v1740
                  %v1742 = vld [vmem:[%s1734 + $0xc] sm:$0xf]
                  %1743 = vst [vmem:[%s1735 + $0xc] sm:$0xf] %v1742
                  %v1744 = vld [vmem:[%s1734 + $0x10] sm:$0xf]
                  %1745 = vst [vmem:[%s1735 + $0x10] sm:$0xf] %v1744
                  %v1746 = vld [vmem:[%s1734 + $0x14] sm:$0xf]
                  %1747 = vst [vmem:[%s1735 + $0x14] sm:$0xf] %v1746
                  %v1748 = vld [vmem:[%s1734 + $0x18] sm:$0xf]
                  %1749 = vst [vmem:[%s1735 + $0x18] sm:$0xf] %v1748
                  %v1750 = vld [vmem:[%s1734 + $0x1c] sm:$0xf]
                  %1751 = vst [vmem:[%s1735 + $0x1c] sm:$0xf] %v1750
                  %v1752 = vld [vmem:[%s1734 + $0x20] sm:$0xf]
                  %1753 = vst [vmem:[%s1735 + $0x20] sm:$0xf] %v1752
                  %v1754 = vld [vmem:[%s1734 + $0x24] sm:$0xf]
                  %1755 = vst [vmem:[%s1735 + $0x24] sm:$0xf] %v1754
                  %v1756 = vld [vmem:[%s1734 + $0x28] sm:$0xf]
                  %1757 = vst [vmem:[%s1735 + $0x28] sm:$0xf] %v1756
                  %v1758 = vld [vmem:[%s1734 + $0x2c] sm:$0xf]
                  %1759 = vst [vmem:[%s1735 + $0x2c] sm:$0xf] %v1758
                  %v1760 = vld [vmem:[%s1734 + $0x30] sm:$0xf]
                  %1761 = vst [vmem:[%s1735 + $0x30] sm:$0xf] %v1760
                  %v1762 = vld [vmem:[%s1734 + $0x34] sm:$0xf]
                  %1763 = vst [vmem:[%s1735 + $0x34] sm:$0xf] %v1762
                  %v1764 = vld [vmem:[%s1734 + $0x38] sm:$0xf]
                  %1765 = vst [vmem:[%s1735 + $0x38] sm:$0xf] %v1764
                  %v1766 = vld [vmem:[%s1734 + $0x3c] sm:$0xf]
                  %1767 = vst [vmem:[%s1735 + $0x3c] sm:$0xf] %v1766
                  %v1768 = vld [vmem:[%s1734 + $0x40] sm:$0xf]
                  %1769 = vst [vmem:[%s1735 + $0x40] sm:$0xf] %v1768
                  %v1770 = vld [vmem:[%s1734 + $0x44] sm:$0xf]
                  %1771 = vst [vmem:[%s1735 + $0x44] sm:$0xf] %v1770
                  %v1772 = vld [vmem:[%s1734 + $0x48] sm:$0xf]
                  %1773 = vst [vmem:[%s1735 + $0x48] sm:$0xf] %v1772
                  %v1774 = vld [vmem:[%s1734 + $0x4c] sm:$0xf]
                  %1775 = vst [vmem:[%s1735 + $0x4c] sm:$0xf] %v1774
                  %v1776 = vld [vmem:[%s1734 + $0x50] sm:$0xf]
                  %1777 = vst [vmem:[%s1735 + $0x50] sm:$0xf] %v1776
                  %s1778 = sadd.s32 1, %s1733
                  %p1779 = scmp.ge.s32.totalorder %s1778, %s1725
                  %s1780 = scalar_select %p1779, 0, %s1778
                  %s1781 = smul.u32 %s1780, 84
                  %s1782 = smul.u32 %s1780, 84
                  %s1783 = scalar_lea.vmem %s1617, %s1781 [#allocation3]
                  %s1784 = scalar_lea.vmem %s1628, %s1782
                $region71: #{net_forward.3} parent=65 // loop_footer
                  %s1730 = sadd.s32 %s1728, 1
                $region72: #{net_forward.3} parent=65 // loop_footer_branch
                  %1727 = sbr.rel target = $region68
                $region73: #{net_forward.3} parent=65 // loop_exit
                  _
                %s1785 = sdiv.u32.pop %s1624, 21
                %s1786 = srem.u32.pop %s1624, 21
                %s1787 = smul.u32 %s1785, 21
                %s1788 = smul.u32 4, %s1787
                %s1789 = scalar_lea.vmem %s1617, %s1788 [#allocation3]
                %s1790 = smul.u32 4, %s1787
                %s1791 = scalar_lea.vmem %s1628, %s1790
                // While loop
                $region74: #{net_forward.3} parent=65 // loop_pre_header
                  _
                $region75: #{net_forward.3} parent=65 // loop_header
                  %s1793 = sphi 0, %s1795
                  %p1794 = scmp.ge.s32.totalorder %s1793, %s1786
                  %s1798 = sphi 0, %s1805
                  %s1799 = sphi %s1789, %s1808
                  %s1800 = sphi %s1791, %s1809
                $region76: #{net_forward.3} parent=65 // loop_header_branch
                  %1797 = sbr.rel (%p1794) target = $region80
                $region77: #{net_forward.3} parent=65 // loop_body
                  %v1801 = vld [vmem:[%s1799] sm:$0xf]
                  %1802 = vst [vmem:[%s1800] sm:$0xf] %v1801
                  %s1803 = sadd.s32 1, %s1798
                  %p1804 = scmp.ge.s32.totalorder %s1803, %s1786
                  %s1805 = scalar_select %p1804, 0, %s1803
                  %s1806 = smul.u32 %s1805, 4
                  %s1807 = smul.u32 %s1805, 4
                  %s1808 = scalar_lea.vmem %s1789, %s1806 [#allocation3]
                  %s1809 = scalar_lea.vmem %s1791, %s1807
                $region78: #{net_forward.3} parent=65 // loop_footer
                  %s1795 = sadd.s32 %s1793, 1
                $region79: #{net_forward.3} parent=65 // loop_footer_branch
                  %1792 = sbr.rel target = $region75
                $region80: #{net_forward.3} parent=65 // loop_exit
                  _
              $region66: #{net_forward.3} parent=43 // pred_fallthru
                _
            $region44: #{net_forward.3} parent=39 // pred_fallthru
              _
            // Predicated region
            $region45: #{net_forward.3} parent=39 // pred_check
              _
            $region46: #{net_forward.3} parent=39 // pred_check_branch
              %1635 = sbr.rel (0) target = $region48
            $region47: #{net_forward.3} parent=39 // pred_region
              %s1637 = sdiv.u32.pop %s1624, 21
              %s1638 = srem.u32.pop %s1624, 21
              // While loop
              $region49: #{net_forward.3} parent=47 // loop_pre_header
                _
              $region50: #{net_forward.3} parent=47 // loop_header
                %s1640 = sphi 0, %s1642
                %p1641 = scmp.ge.s32.totalorder %s1640, %s1637
                %s1645 = sphi 0, %s1692
                %s1646 = sphi %s1617, %s1695
                %s1647 = sphi %s1628, %s1696
              $region51: #{net_forward.3} parent=47 // loop_header_branch
                %1644 = sbr.rel (%p1641) target = $region55
              $region52: #{net_forward.3} parent=47 // loop_body
                %v1648 = vld [vmem:[%s1646] sm:$0xf]
                %1649 = vst [vmem:[%s1647] sm:$0xf] %v1648
                %v1650 = vld [vmem:[%s1646 + $0x4] sm:$0xf]
                %1651 = vst [vmem:[%s1647 + $0x4] sm:$0xf] %v1650
                %v1652 = vld [vmem:[%s1646 + $0x8] sm:$0xf]
                %1653 = vst [vmem:[%s1647 + $0x8] sm:$0xf] %v1652
                %v1654 = vld [vmem:[%s1646 + $0xc] sm:$0xf]
                %1655 = vst [vmem:[%s1647 + $0xc] sm:$0xf] %v1654
                %v1656 = vld [vmem:[%s1646 + $0x10] sm:$0xf]
                %1657 = vst [vmem:[%s1647 + $0x10] sm:$0xf] %v1656
                %v1658 = vld [vmem:[%s1646 + $0x14] sm:$0xf]
                %1659 = vst [vmem:[%s1647 + $0x14] sm:$0xf] %v1658
                %v1660 = vld [vmem:[%s1646 + $0x18] sm:$0xf]
                %1661 = vst [vmem:[%s1647 + $0x18] sm:$0xf] %v1660
                %v1662 = vld [vmem:[%s1646 + $0x1c] sm:$0xf]
                %1663 = vst [vmem:[%s1647 + $0x1c] sm:$0xf] %v1662
                %v1664 = vld [vmem:[%s1646 + $0x20] sm:$0xf]
                %1665 = vst [vmem:[%s1647 + $0x20] sm:$0xf] %v1664
                %v1666 = vld [vmem:[%s1646 + $0x24] sm:$0xf]
                %1667 = vst [vmem:[%s1647 + $0x24] sm:$0xf] %v1666
                %v1668 = vld [vmem:[%s1646 + $0x28] sm:$0xf]
                %1669 = vst [vmem:[%s1647 + $0x28] sm:$0xf] %v1668
                %v1670 = vld [vmem:[%s1646 + $0x2c] sm:$0xf]
                %1671 = vst [vmem:[%s1647 + $0x2c] sm:$0xf] %v1670
                %v1672 = vld [vmem:[%s1646 + $0x30] sm:$0xf]
                %1673 = vst [vmem:[%s1647 + $0x30] sm:$0xf] %v1672
                %v1674 = vld [vmem:[%s1646 + $0x34] sm:$0xf]
                %1675 = vst [vmem:[%s1647 + $0x34] sm:$0xf] %v1674
                %v1676 = vld [vmem:[%s1646 + $0x38] sm:$0xf]
                %1677 = vst [vmem:[%s1647 + $0x38] sm:$0xf] %v1676
                %v1678 = vld [vmem:[%s1646 + $0x3c] sm:$0xf]
                %1679 = vst [vmem:[%s1647 + $0x3c] sm:$0xf] %v1678
                %v1680 = vld [vmem:[%s1646 + $0x40] sm:$0xf]
                %1681 = vst [vmem:[%s1647 + $0x40] sm:$0xf] %v1680
                %v1682 = vld [vmem:[%s1646 + $0x44] sm:$0xf]
                %1683 = vst [vmem:[%s1647 + $0x44] sm:$0xf] %v1682
                %v1684 = vld [vmem:[%s1646 + $0x48] sm:$0xf]
                %1685 = vst [vmem:[%s1647 + $0x48] sm:$0xf] %v1684
                %v1686 = vld [vmem:[%s1646 + $0x4c] sm:$0xf]
                %1687 = vst [vmem:[%s1647 + $0x4c] sm:$0xf] %v1686
                %v1688 = vld [vmem:[%s1646 + $0x50] sm:$0xf]
                %1689 = vst [vmem:[%s1647 + $0x50] sm:$0xf] %v1688
                %s1690 = sadd.s32 1, %s1645
                %p1691 = scmp.ge.s32.totalorder %s1690, %s1637
                %s1692 = scalar_select %p1691, 0, %s1690
                %s1693 = smul.u32 %s1692, 84
                %s1694 = smul.u32 %s1692, 84
                %s1695 = scalar_lea.vmem %s1617, %s1693 [#allocation3]
                %s1696 = scalar_lea.vmem %s1628, %s1694
              $region53: #{net_forward.3} parent=47 // loop_footer
                %s1642 = sadd.s32 %s1640, 1
              $region54: #{net_forward.3} parent=47 // loop_footer_branch
                %1639 = sbr.rel target = $region50
              $region55: #{net_forward.3} parent=47 // loop_exit
                _
              %s1697 = sdiv.u32.pop %s1624, 21
              %s1698 = srem.u32.pop %s1624, 21
              %s1699 = smul.u32 %s1697, 21
              %s1700 = smul.u32 4, %s1699
              %s1701 = scalar_lea.vmem %s1617, %s1700 [#allocation3]
              %s1702 = smul.u32 4, %s1699
              %s1703 = scalar_lea.vmem %s1628, %s1702
              // While loop
              $region56: #{net_forward.3} parent=47 // loop_pre_header
                _
              $region57: #{net_forward.3} parent=47 // loop_header
                %s1705 = sphi 0, %s1707
                %p1706 = scmp.ge.s32.totalorder %s1705, %s1698
                %s1710 = sphi 0, %s1717
                %s1711 = sphi %s1701, %s1720
                %s1712 = sphi %s1703, %s1721
              $region58: #{net_forward.3} parent=47 // loop_header_branch
                %1709 = sbr.rel (%p1706) target = $region62
              $region59: #{net_forward.3} parent=47 // loop_body
                %v1713 = vld [vmem:[%s1711] sm:$0xf]
                %1714 = vst [vmem:[%s1712] sm:$0xf] %v1713
                %s1715 = sadd.s32 1, %s1710
                %p1716 = scmp.ge.s32.totalorder %s1715, %s1698
                %s1717 = scalar_select %p1716, 0, %s1715
                %s1718 = smul.u32 %s1717, 4
                %s1719 = smul.u32 %s1717, 4
                %s1720 = scalar_lea.vmem %s1701, %s1718 [#allocation3]
                %s1721 = scalar_lea.vmem %s1703, %s1719
              $region60: #{net_forward.3} parent=47 // loop_footer
                %s1707 = sadd.s32 %s1705, 1
              $region61: #{net_forward.3} parent=47 // loop_footer_branch
                %1704 = sbr.rel target = $region57
              $region62: #{net_forward.3} parent=47 // loop_exit
                _
            $region48: #{net_forward.3} parent=39 // pred_fallthru
              _
          $region40: #{net_forward.3} parent=35 // pred_fallthru
            _
          %1810 = vnop
        $region36: #{net_forward.3} parent=31 // pred_fallthru
          _
      $region32: #{net_forward.3} parent=5 // pred_fallthru
        _
      %p1811 = scmp.le.s32.totalorder 2, %s9
      // Predicated region
      $region81: #{net_forward.3} parent=5 // pred_check
        %p1812 = pneg %p1811
      $region82: #{net_forward.3} parent=5 // pred_check_branch
        %1814 = sbr.rel (%p1812) target = $region84
      $region83: #{net_forward.3} parent=5 // pred_region
        %s1815 = ssub.s32 %s9, 2
        // Predicated region
        $region85: #{net_forward.3} parent=83 // pred_check
          %p1816 = pneg %p106
        $region86: #{net_forward.3} parent=83 // pred_check_branch
          %1818 = sbr.rel (%p1816) target = $region88
        $region87: #{net_forward.3} parent=83 // pred_region
          %s1819 = sand.u32 %s91, 1
          %s1820 = sand.u32 %s91, 1
          %s1821 = smul.addr %s1820, 84
          %s1822 = scalar_lea.vmem [#allocation3], %s1821
        $region88: #{net_forward.3} parent=83 // pred_fallthru
          _
      $region84: #{net_forward.3} parent=5 // pred_fallthru
        _
    $region6: #{net_forward.3} parent=1 // loop_footer
      %s13 = sadd.s32 1, %s9
    $region7: #{net_forward.3} parent=1 // loop_footer_branch
      %8 = sbr.rel target = $region3
    $region8: #{net_forward.3} parent=1 // loop_exit
      _

// kernel: net_forward.4
$region0: #{net_forward.4}
  #allocation0 [shape = 'u32[]', space=smem, size = 0x4, offset = 0x4, fixed_abs, tag = 'smem constant byte address 0x4 - core index']
  #allocation1 [shape = 'u32[144,128]{1,0:T(1,128)}', space=vmem, size = 0x12000, scoped, tag = 'internal scratch']
  #allocation2 [shape = 'f32[160,128]{1,0:T(8,128)}', space=vmem, size = 0x14000, scoped, tag = 'scratch operand']
  %s0 = inlined_call_operand.vmem [shape: bf16[200,150], index: 0, kind: input, shape index: {}]
  %s1 = inlined_call_operand.vmem [shape: bf16[150,128], index: 1, kind: input, shape index: {}]
  %s2 = inlined_call_operand.vmem [shape: f32[1,128], index: 2, kind: input, shape index: {}]
  %s3 = inlined_call_operand.vmem [shape: bf16[50,128], index: 3, kind: output, shape index: {}]
  %s4 = sld [smem:[#allocation0]]
  $region89: #{net_forward.4} parent=0
    _
  %s6 = ssub.s32 1, %s4
  %s7 = scalar_select 0, %s6, %s4
  $region1: #{net_forward.4} parent=0
    #allocation3 [shape = 'u8[20480]{0}', space=vmem, size = 0x5000, scoped, tag = 'output window, operand 0']
    loop: start=0, step=1, limit=4
    $region2: #{net_forward.4} parent=1 // loop_pre_header
      _
    $region3: #{net_forward.4} parent=1 // loop_header
      %s9 = sphi 0, %s13
      %p10 = scmp.ge.s32.totalorder %s9, 4
      %s19 = sphi 0, %s21
      %s22 = sphi 0, %s19
      %s23 = sphi 0, %s22
      %s39 = sphi 0, %s23
      %s43 = sphi 0, %s43
      %s45 = sphi 0, %s43
      %s46 = sphi 0, %s45
      %s60 = sphi 0, %s46
      %s64 = sphi 0, %s64
      %s66 = sphi 0, %s64
      %s67 = sphi 0, %s66
      %s81 = sphi 0, %s67
      %s87 = sphi 0, %s89
      %s90 = sphi 0, %s87
      %s91 = sphi 0, %s90
      %s107 = sphi 0, %s91
    $region4: #{net_forward.4} parent=1 // loop_header_branch
      %12 = sbr.rel (%p10) target = $region8
    $region5: #{net_forward.4} parent=1 // loop_body
      %s14 = ssub.s32 %s9, 1
      %s15 = ssub.s32 %s9, 2
      %s16 = sadd.s32 %s9, 1
      %s17 = ssub.s32 %s9, %s16
      %p18 = scmp.eq.s32.totalorder %s17, 0
      %s20 = sadd.s32 %s19, 1
      %s21 = scalar_select %p18, %s19, %s20
      %p24 = pneg %p18
      %p25 = scmp.eq.s32.totalorder %s9, 1
      %p26 = por %p24, %p25
      %p27 = scmp.ne.s32.totalorder %s19, %s22
      %p28 = scmp.eq.s32.totalorder %s9, 0
      %p29 = por %p27, %p28
      %p30 = scmp.ne.s32.totalorder %s19, %s22
      %p31 = scmp.eq.s32.totalorder %s14, 1
      %p32 = por %p30, %p31
      %p33 = scmp.ne.s32.totalorder %s22, %s23
      %p34 = scmp.eq.s32.totalorder %s14, 0
      %p35 = por %p33, %p34
      %p36 = scmp.ne.s32.totalorder %s22, %s23
      %p37 = scmp.eq.s32.totalorder %s15, 1
      %p38 = por %p36, %p37
      %p40 = scmp.ne.s32.totalorder %s23, %s39
      %p41 = scmp.eq.s32.totalorder %s15, 0
      %p42 = por %p40, %p41
      %s44 = sadd.s32 %s43, 1
      %p47 = scmp.eq.s32.totalorder %s9, 1
      %p48 = scmp.ne.s32.totalorder %s43, %s45
      %p49 = scmp.eq.s32.totalorder %s9, 0
      %p50 = por %p48, %p49
      %p51 = scmp.ne.s32.totalorder %s43, %s45
      %p52 = scmp.eq.s32.totalorder %s14, 1
      %p53 = por %p51, %p52
      %p54 = scmp.ne.s32.totalorder %s45, %s46
      %p55 = scmp.eq.s32.totalorder %s14, 0
      %p56 = por %p54, %p55
      %p57 = scmp.ne.s32.totalorder %s45, %s46
      %p58 = scmp.eq.s32.totalorder %s15, 1
      %p59 = por %p57, %p58
      %p61 = scmp.ne.s32.totalorder %s46, %s60
      %p62 = scmp.eq.s32.totalorder %s15, 0
      %p63 = por %p61, %p62
      %s65 = sadd.s32 %s64, 1
      %p68 = scmp.eq.s32.totalorder %s9, 1
      %p69 = scmp.ne.s32.totalorder %s64, %s66
      %p70 = scmp.eq.s32.totalorder %s9, 0
      %p71 = por %p69, %p70
      %p72 = scmp.ne.s32.totalorder %s64, %s66
      %p73 = scmp.eq.s32.totalorder %s14, 1
      %p74 = por %p72, %p73
      %p75 = scmp.ne.s32.totalorder %s66, %s67
      %p76 = scmp.eq.s32.totalorder %s14, 0
      %p77 = por %p75, %p76
      %p78 = scmp.ne.s32.totalorder %s66, %s67
      %p79 = scmp.eq.s32.totalorder %s15, 1
      %p80 = por %p78, %p79
      %p82 = scmp.ne.s32.totalorder %s67, %s81
      %p83 = scmp.eq.s32.totalorder %s15, 0
      %p84 = por %p82, %p83
      %s85 = ssub.s32 %s9, %s16
      %p86 = scmp.eq.s32.totalorder %s85, 0
      %s88 = sadd.s32 %s87, 1
      %s89 = scalar_select %p86, %s87, %s88
      %p92 = pneg %p86
      %p93 = scmp.eq.s32.totalorder %s9, 1
      %p94 = por %p92, %p93
      %p95 = scmp.ne.s32.totalorder %s87, %s90
      %p96 = scmp.eq.s32.totalorder %s9, 0
      %p97 = por %p95, %p96
      %p98 = scmp.ne.s32.totalorder %s87, %s90
      %p99 = scmp.eq.s32.totalorder %s14, 1
      %p100 = por %p98, %p99
      %p101 = scmp.ne.s32.totalorder %s90, %s91
      %p102 = scmp.eq.s32.totalorder %s14, 0
      %p103 = por %p101, %p102
      %p104 = scmp.ne.s32.totalorder %s90, %s91
      %p105 = scmp.eq.s32.totalorder %s15, 1
      %p106 = por %p104, %p105
      %p108 = scmp.ne.s32.totalorder %s91, %s107
      %p109 = scmp.eq.s32.totalorder %s15, 0
      %p110 = por %p108, %p109
      %p111 = scmp.le.s32.totalorder 1, %s9
      %p112 = scmp.lt.s32.totalorder %s9, 3
      %p113 = pnand %p111, %p112
      %p114 = pneg %p113
      // Predicated region
      $region9: #{net_forward.4} parent=5 // pred_check
        _
      $region10: #{net_forward.4} parent=5 // pred_check_branch
        %116 = sbr.rel (%p113) target = $region12
      $region11: #{net_forward.4} parent=5 // pred_region
        %s117 = ssub.s32 %s9, 1
        // Predicated region
        $region13: #{net_forward.4} parent=11 // pred_check
          %p118 = pneg %p56
        $region14: #{net_forward.4} parent=11 // pred_check_branch
          %120 = sbr.rel (%p118) target = $region16
        $region15: #{net_forward.4} parent=11 // pred_region
          _
        $region16: #{net_forward.4} parent=11 // pred_fallthru
          _
        // Predicated region
        $region17: #{net_forward.4} parent=11 // pred_check
          %p121 = pneg %p77
        $region18: #{net_forward.4} parent=11 // pred_check_branch
          %123 = sbr.rel (%p121) target = $region20
        $region19: #{net_forward.4} parent=11 // pred_region
          _
        $region20: #{net_forward.4} parent=11 // pred_fallthru
          _
      $region12: #{net_forward.4} parent=5 // pred_fallthru
        _
      %p124 = scmp.lt.s32.totalorder %s9, 2
      // Predicated region
      $region21: #{net_forward.4} parent=5 // pred_check
        %p125 = pneg %p124
      $region22: #{net_forward.4} parent=5 // pred_check_branch
        %127 = sbr.rel (%p125) target = $region24
      $region23: #{net_forward.4} parent=5 // pred_region
        // Predicated region
        $region25: #{net_forward.4} parent=23 // pred_check
          %p128 = pneg %p29
        $region26: #{net_forward.4} parent=23 // pred_check_branch
          %130 = sbr.rel (%p128) target = $region28
        $region27: #{net_forward.4} parent=23 // pred_region
          %s131 = smul.u32 20, %s9
          %s132 = ssub.s32 25, %s131
          %p133 = scmp.lt.s32.totalorder %s132, 20
          %s134 = scalar_select %p133, %s132, 20
          %s135 = smul.u32 64, %s134
          %s136 = smul.u32 %s135, 2
          %p137 = scmp.lt.s32.totalorder %s131, 24
          %s138 = scalar_select %p137, %s131, 24
          %s139 = smul.addr %s138, 2
          %s140 = smul.addr %s139, 4
          %s141 = scalar_lea.vmem %s0, %s140
          %s142 = smul.u32 20, %s9
          %s143 = ssub.s32 25, %s142
          %p144 = scmp.lt.s32.totalorder %s143, 20
          %s145 = scalar_select %p144, %s143, 20
          %s146 = smul.u32 64, %s145
          %s147 = smul.u32 %s146, 2
        $region28: #{net_forward.4} parent=23 // pred_fallthru
          _
      $region24: #{net_forward.4} parent=5 // pred_fallthru
        _
      %p148 = scmp.le.s32.totalorder 1, %s9
      %p149 = scmp.lt.s32.totalorder %s9, 3
      %p150 = pnand %p148, %p149
      %p151 = pneg %p150
      // Predicated region
      $region29: #{net_forward.4} parent=5 // pred_check
        _
      $region30: #{net_forward.4} parent=5 // pred_check_branch
        %153 = sbr.rel (%p150) target = $region32
      $region31: #{net_forward.4} parent=5 // pred_region
        %s154 = ssub.s32 %s9, 1
        %s155 = smul.u32 20, %s14
        %s156 = ssub.s32 25, %s155
        %p157 = scmp.lt.s32.totalorder %s156, 20
        %s158 = scalar_select %p157, %s156, 20
        %s159 = smul.u32 64, %s158
        %s160 = smul.u32 %s159, 2
        %p161 = scmp.lt.s32.totalorder %s155, 24
        %s162 = scalar_select %p161, %s155, 24
        %s163 = smul.addr %s162, 2
        %s164 = smul.addr %s163, 4
        %s165 = scalar_lea.vmem %s0, %s164
        %p166 = pneg %p35
        %p167 = pneg %p32
        %p168 = pneg %p56
        %p169 = pneg %p53
        %p170 = pneg %p77
        %p171 = pneg %p74
        %p172 = pneg %p103
        %p173 = pneg %p100
        %s174 = sand.u32 %s90, 1
        %s175 = sand.u32 %s90, 1
        %s176 = smul.addr %s175, 20
        %s177 = scalar_lea.vmem [#allocation3], %s176
        %s178 = smul.u32 20, %s14
        %s179 = ssub.s32 25, %s178
        %p180 = scmp.lt.s32.totalorder %s179, 20
        %s181 = scalar_select %p180, %s179, 20
        %s182 = smul.u32 64, %s181
        %s183 = smul.u32 %s182, 2
        %p184 = scmp.lt.s32.totalorder %s178, 24
        %s185 = scalar_select %p184, %s178, 24
        %s186 = smul.addr %s185, 2
        %s187 = smul.addr %s186, 4
        %s188 = scalar_lea.vmem %s0, %s187
        %s189 = smul.u32 20, %s14
        %s190 = ssub.s32 25, %s189
        %p191 = scmp.lt.s32.totalorder %s190, 20
        %s192 = scalar_select %p191, %s190, 20
        %s193 = smul.u32 64, %s192
        %s194 = smul.u32 %s193, 2
        %s195 = smul.u32 5, %s14
        %s196 = ssub.s32 7, %s195
        %p197 = scmp.lt.s32.totalorder %s196, 5
        %s198 = scalar_select %p197, %s196, 5
        %s199 = smul.u32 64, %s198
        %v201 = vld [vmem:[%s188] sm:$0xff]
        %v202 = vld [vmem:[%s188 + $0x8] sm:$0xff]
        %v203 = vld [vmem:[%s188 + $0x10] sm:$0xff]
        %v204 = vld [vmem:[%s188 + $0x18] sm:$0xff]
        %v205 = vld [vmem:[%s188 + $0x20] sm:$0xff]
        %v206 = vld [vmem:[%s188 + $0x28] sm:$0xff]
        %v207 = vld [vmem:[%s188 + $0x30] sm:$0xff]
        %v208 = vld [vmem:[%s188 + $0x38] sm:$0xff]
        %v209 = vld [vmem:[%s188 + $0x40] sm:$0xff]
        %v210 = vld [vmem:[%s188 + $0x48] sm:$0xff]
        %v211 = vld [vmem:[%s188 + $0x50] sm:$0xff]
        %v212 = vld [vmem:[%s188 + $0x58] sm:$0xff]
        %v213 = vld [vmem:[%s188 + $0x60] sm:$0xff]
        %v214 = vld [vmem:[%s188 + $0x68] sm:$0xff]
        %v215 = vld [vmem:[%s188 + $0x70] sm:$0xff]
        %v216 = vld [vmem:[%s188 + $0x78] sm:$0xff]
        %v217 = vld [vmem:[%s188 + $0x80] sm:$0xff]
        %v218 = vld [vmem:[%s188 + $0x88] sm:$0xff]
        %v219 = vld [vmem:[%s188 + $0x90] sm:$0xff]
        %v220 = vld [vmem:[%s188 + $0x98] sm:$0xff]
        %v221 = vld [vmem:[%s1] sm:$0xf]
        %v222 = vld [vmem:[%s1 + $0x4] sm:$0xf]
        %v223 = vld [vmem:[%s1 + $0x8] sm:$0xf]
        %v224 = vld [vmem:[%s1 + $0xc] sm:$0xf]
        %v225 = vld [vmem:[%s1 + $0x10] sm:$0xf]
        %v226 = vld [vmem:[%s1 + $0x14] sm:$0xf]
        %v227 = vld [vmem:[%s1 + $0x18] sm:$0xf]
        %v228 = vld [vmem:[%s1 + $0x1c] sm:$0xf]
        %v229 = vld [vmem:[%s1 + $0x20] sm:$0xf]
        %v230 = vld [vmem:[%s1 + $0x24] sm:$0xf]
        %v231 = vld [vmem:[%s1 + $0x28] sm:$0xf]
        %v232 = vld [vmem:[%s1 + $0x2c] sm:$0xf]
        %v233 = vld [vmem:[%s1 + $0x30] sm:$0xf]
        %v234 = vld [vmem:[%s1 + $0x34] sm:$0xf]
        %v235 = vld [vmem:[%s1 + $0x38] sm:$0xf]
        %v236 = vld [vmem:[%s1 + $0x3c] sm:$0xf]
        %v237 = vld [vmem:[%s1 + $0x40] sm:$0xf]
        %v238 = vld [vmem:[%s1 + $0x44] sm:$0xf]
        %v239 = vld [vmem:[%s1 + $0x48] sm:$0x7]
        %v260 = vunpack.c.l.b16 %v201
        %v261 = vunpack.c.h.b16 %v201
        %v262 = vunpack.c.l.b16 %v202
        %v263 = vunpack.c.h.b16 %v202
        %v264 = vunpack.c.l.b16 %v203
        %v265 = vunpack.c.h.b16 %v203
        %v266 = vunpack.c.l.b16 %v204
        %v267 = vunpack.c.h.b16 %v204
        %v268 = vunpack.c.l.b16 %v205
        %v269 = vunpack.c.h.b16 %v205
        %v270 = vunpack.c.l.b16 %v206
        %v271 = vunpack.c.h.b16 %v206
        %v272 = vunpack.c.l.b16 %v207
        %v273 = vunpack.c.h.b16 %v207
        %v274 = vunpack.c.l.b16 %v208
        %v275 = vunpack.c.h.b16 %v208
        %v276 = vunpack.c.l.b16 %v209
        %v277 = vunpack.c.h.b16 %v209
        %v278 = vunpack.c.l.b16 %v210
        %v279 = vunpack.c.h.b16 %v210
        %v280 = vunpack.c.l.b16 %v211
        %v281 = vunpack.c.h.b16 %v211
        %v282 = vunpack.c.l.b16 %v212
        %v283 = vunpack.c.h.b16 %v212
        %v284 = vunpack.c.l.b16 %v213
        %v285 = vunpack.c.h.b16 %v213
        %v286 = vunpack.c.l.b16 %v214
        %v287 = vunpack.c.h.b16 %v214
        %v288 = vunpack.c.l.b16 %v215
        %v289 = vunpack.c.h.b16 %v215
        %v290 = vunpack.c.l.b16 %v216
        %v291 = vunpack.c.h.b16 %v216
        %v292 = vunpack.c.l.b16 %v217
        %v293 = vunpack.c.h.b16 %v217
        %v294 = vunpack.c.l.b16 %v218
        %v295 = vunpack.c.h.b16 %v218
        %v296 = vunpack.c.l.b16 %v219
        %v297 = vunpack.c.h.b16 %v219
        %v298 = vunpack.c.l.b16 %v220
        %v299 = vunpack.c.h.b16 %v220
        %v300 = vpack.c.b16 %v262, %v260
        %v301 = vpack.c.b16 %v263, %v261
        %v302 = vpack.c.b16 %v266, %v264
        %v303 = vpack.c.b16 %v267, %v265
        %v304 = vpack.c.b16 %v270, %v268
        %v305 = vpack.c.b16 %v271, %v269
        %v306 = vpack.c.b16 %v274, %v272
        %v307 = vpack.c.b16 %v275, %v273
        %v308 = vpack.c.b16 %v278, %v276
        %v309 = vpack.c.b16 %v279, %v277
        %v310 = vpack.c.b16 %v282, %v280
        %v311 = vpack.c.b16 %v283, %v281
        %v312 = vpack.c.b16 %v286, %v284
        %v313 = vpack.c.b16 %v287, %v285
        %v314 = vpack.c.b16 %v290, %v288
        %v315 = vpack.c.b16 %v291, %v289
        %v316 = vpack.c.b16 %v294, %v292
        %v317 = vpack.c.b16 %v295, %v293
        %v318 = vpack.c.b16 %v298, %v296
        %v319 = vpack.c.b16 %v299, %v297
        %v349 = vunpack.c.l.b16 %v221
        %v350 = vunpack.c.l.b16 %v222
        %v351 = vunpack.c.l.b16 %v223
        %v352 = vunpack.c.l.b16 %v224
        %v353 = vunpack.c.l.b16 %v225
        %v354 = vunpack.c.l.b16 %v226
        %v355 = vunpack.c.l.b16 %v227
        %v356 = vunpack.c.l.b16 %v228
        %v357 = vunpack.c.l.b16 %v229
        %v358 = vunpack.c.l.b16 %v230
        %v359 = vunpack.c.l.b16 %v231
        %v360 = vunpack.c.l.b16 %v232
        %v361 = vunpack.c.l.b16 %v233
        %v362 = vunpack.c.l.b16 %v234
        %v363 = vunpack.c.l.b16 %v235
        %v364 = vunpack.c.l.b16 %v236
        %v365 = vunpack.c.l.b16 %v237
        %v366 = vunpack.c.l.b16 %v238
        %v367 = vunpack.c.l.b16 %v239
        %v368 = vpack.c.b16 %v350, %v349
        %v369 = vpack.c.b16 %v352, %v351
        %v370 = vpack.c.b16 %v354, %v353
        %v371 = vpack.c.b16 %v356, %v355
        %v372 = vpack.c.b16 %v358, %v357
        %v373 = vpack.c.b16 %v360, %v359
        %v374 = vpack.c.b16 %v362, %v361
        %v375 = vpack.c.b16 %v364, %v363
        %v376 = vpack.c.b16 %v366, %v365
        %v377 = vpack.c.b16 %v367, %v367
        %vm387 = vcmask 179200
        %v389 = vsel %vm387, %v301, 0
        %v392 = vsel %vm387, %v303, 0
        %v395 = vsel %vm387, %v305, 0
        %v398 = vsel %vm387, %v307, 0
        %v401 = vsel %vm387, %v309, 0
        %v404 = vsel %vm387, %v311, 0
        %v407 = vsel %vm387, %v313, 0
        %v410 = vsel %vm387, %v315, 0
        %v413 = vsel %vm387, %v317, 0
        %v416 = vsel %vm387, %v319, 0
        %vm418 = vcmask 1042432
        %v420 = vsel %vm418, %v377, 0
        %422 = vmatprep.subr.bf16.mxu0 0
        %423 = vmatpush1.bf16.msra.mxu0 %v368
        %424 = vmatprep.subr.bf16.mxu0 0
        %425 = vmatpush1.bf16.msra.mxu0 %v369
        %426 = vmatprep.subr.bf16.mxu0 0
        %427 = vmatpush1.bf16.msra.mxu0 %v370
        %428 = vmatprep.subr.bf16.mxu0 0
        %429 = vmatpush1.bf16.msra.mxu0 %v371
        %430 = vmatprep.subr.bf16.mxu0 0
        %431 = vmatpush1.bf16.msra.mxu0 %v372
        %432 = vmatprep.subr.bf16.mxu0 0
        %433 = vmatpush1.bf16.msra.mxu0 %v373
        %434 = vmatprep.subr.bf16.mxu0 0
        %435 = vmatpush1.bf16.msra.mxu0 %v374
        %436 = vmatprep.subr.bf16.mxu0 0
        %437 = vmatpush1.bf16.msra.mxu0 %v375
        %438 = vmatprep.subr.bf16.mxu0 0
        %439 = vmatpush1.bf16.msra.mxu0 %v376
        %440 = vmatprep.subr.bf16.mxu0 0
        %441 = vmatpush1.bf16.msra.mxu0 %v420
        %442 = vmatprep.subr.bf16.mxu0 0
        %443 = vmatpush1.bf16.msra.mxu0 0
        %444 = vmatprep.subr.bf16.mxu0 0
        %445 = vmatpush1.bf16.msra.mxu0 0
        %446 = vmatprep.subr.bf16.mxu0 0
        %447 = vmatpush1.bf16.msra.mxu0 0
        %448 = vmatprep.subr.bf16.mxu0 0
        %449 = vmatpush1.bf16.msra.mxu0 0
        %450 = vmatprep.subr.bf16.mxu0 0
        %451 = vmatpush1.bf16.msra.mxu0 0
        %452 = vmatprep.subr.bf16.mxu0 0
        %453 = vmatpush1.bf16.msra.mxu0 0
        %454 = vmatprep.mubr.bf16.mxu0 %v389
        %455 = vmatmul.mubr.bf16.gmra.mrb[0].mxu0 %v300
        %v456 = vpop.f32.mrb[0].mxu0
        %v457 = vadd.f32 0.0, %v456
        %v458 = vpop.f32.mrb[0].mxu0
        %v459 = vpop.f32.mrb[0].mxu0
        %v460 = vadd.f32 0.0, %v459
        %v461 = vpop.f32.mrb[0].mxu0
        %462 = vmatprep.mubr.bf16.mxu0 %v392
        %463 = vmatmul.mubr.bf16.gmra.mrb[0].mxu0 %v302
        %v464 = vpop.f32.mrb[0].mxu0
        %v465 = vadd.f32 0.0, %v464
        %v466 = vpop.f32.mrb[0].mxu0
        %v467 = vpop.f32.mrb[0].mxu0
        %v468 = vadd.f32 0.0, %v467
        %v469 = vpop.f32.mrb[0].mxu0
        %470 = vmatprep.mubr.bf16.mxu0 %v395
        %471 = vmatmul.mubr.bf16.gmra.mrb[0].mxu0 %v304
        %v472 = vpop.f32.mrb[0].mxu0
        %v473 = vadd.f32 0.0, %v472
        %v474 = vpop.f32.mrb[0].mxu0
        %v475 = vpop.f32.mrb[0].mxu0
        %v476 = vadd.f32 0.0, %v475
        %v477 = vpop.f32.mrb[0].mxu0
        %478 = vmatprep.mubr.bf16.mxu0 %v398
        %479 = vmatmul.mubr.bf16.gmra.mrb[0].mxu0 %v306
        %v480 = vpop.f32.mrb[0].mxu0
        %v481 = vadd.f32 0.0, %v480
        %v482 = vpop.f32.mrb[0].mxu0
        %v483 = vpop.f32.mrb[0].mxu0
        %v484 = vadd.f32 0.0, %v483
        %v485 = vpop.f32.mrb[0].mxu0
        %486 = vmatprep.mubr.bf16.mxu0 %v401
        %487 = vmatmul.mubr.bf16.gmra.mrb[0].mxu0 %v308
        %v488 = vpop.f32.mrb[0].mxu0
        %v489 = vadd.f32 0.0, %v488
        %v490 = vpop.f32.mrb[0].mxu0
        %v491 = vpop.f32.mrb[0].mxu0
        %v492 = vadd.f32 0.0, %v491
        %v493 = vpop.f32.mrb[0].mxu0
        %494 = vmatprep.mubr.bf16.mxu0 %v404
        %495 = vmatmul.mubr.bf16.gmra.mrb[0].mxu0 %v310
        %v496 = vpop.f32.mrb[0].mxu0
        %v497 = vadd.f32 0.0, %v496
        %v498 = vpop.f32.mrb[0].mxu0
        %v499 = vpop.f32.mrb[0].mxu0
        %v500 = vadd.f32 0.0, %v499
        %v501 = vpop.f32.mrb[0].mxu0
        %502 = vmatprep.mubr.bf16.mxu0 %v407
        %503 = vmatmul.mubr.bf16.gmra.mrb[0].mxu0 %v312
        %v504 = vpop.f32.mrb[0].mxu0
        %v505 = vadd.f32 0.0, %v504
        %v506 = vpop.f32.mrb[0].mxu0
        %v507 = vpop.f32.mrb[0].mxu0
        %v508 = vadd.f32 0.0, %v507
        %v509 = vpop.f32.mrb[0].mxu0
        %510 = vmatprep.mubr.bf16.mxu0 %v410
        %511 = vmatmul.mubr.bf16.gmra.mrb[0].mxu0 %v314
        %v512 = vpop.f32.mrb[0].mxu0
        %v513 = vadd.f32 0.0, %v512
        %v514 = vpop.f32.mrb[0].mxu0
        %v515 = vpop.f32.mrb[0].mxu0
        %v516 = vadd.f32 0.0, %v515
        %v517 = vpop.f32.mrb[0].mxu0
        %518 = vmatprep.mubr.bf16.mxu0 %v413
        %519 = vmatmul.mubr.bf16.gmra.mrb[0].mxu0 %v316
        %v520 = vpop.f32.mrb[0].mxu0
        %v521 = vadd.f32 0.0, %v520
        %v522 = vpop.f32.mrb[0].mxu0
        %v523 = vpop.f32.mrb[0].mxu0
        %v524 = vadd.f32 0.0, %v523
        %v525 = vpop.f32.mrb[0].mxu0
        %526 = vmatprep.mubr.bf16.mxu0 %v416
        %527 = vmatmul.mubr.bf16.gmra.mrb[0].mxu0 %v318
        %v528 = vpop.f32.mrb[0].mxu0
        %v529 = vadd.f32 0.0, %v528
        %v530 = vpop.f32.mrb[0].mxu0
        %v531 = vpop.f32.mrb[0].mxu0
        %v532 = vadd.f32 0.0, %v531
        %v533 = vpop.f32.mrb[0].mxu0
        %534 = vdwg.mxu0
        %535 = vst [vmem:[#allocation2] sm:$0xff] %v457
        %536 = vst [vmem:[#allocation2 + $0x8] sm:$0xff] %v460
        %537 = vst [vmem:[#allocation2 + $0x10] sm:$0xff] %v465
        %538 = vst [vmem:[#allocation2 + $0x18] sm:$0xff] %v468
        %539 = vst [vmem:[#allocation2 + $0x20] sm:$0xff] %v473
        %540 = vst [vmem:[#allocation2 + $0x28] sm:$0xff] %v476
        %541 = vst [vmem:[#allocation2 + $0x30] sm:$0xff] %v481
        %542 = vst [vmem:[#allocation2 + $0x38] sm:$0xff] %v484
        %543 = vst [vmem:[#allocation2 + $0x40] sm:$0xff] %v489
        %544 = vst [vmem:[#allocation2 + $0x48] sm:$0xff] %v492
        %545 = vst [vmem:[#allocation2 + $0x50] sm:$0xff] %v497
        %546 = vst [vmem:[#allocation2 + $0x58] sm:$0xff] %v500
        %547 = vst [vmem:[#allocation2 + $0x60] sm:$0xff] %v505
        %548 = vst [vmem:[#allocation2 + $0x68] sm:$0xff] %v508
        %549 = vst [vmem:[#allocation2 + $0x70] sm:$0xff] %v513
        %550 = vst [vmem:[#allocation2 + $0x78] sm:$0xff] %v516
        %551 = vst [vmem:[#allocation2 + $0x80] sm:$0xff] %v521
        %552 = vst [vmem:[#allocation2 + $0x88] sm:$0xff] %v524
        %553 = vst [vmem:[#allocation2 + $0x90] sm:$0xff] %v529
        %554 = vst [vmem:[#allocation2 + $0x98] sm:$0xff] %v532
        %v555 = vld [vmem:[%s2] sm:$0x1]
        %v556 = vld [vmem:[#allocation2] ss:$2 sm:$0x1f]
        %s557 = scalar_lea.vmem [#allocation2], 1
        %v558 = vld [vmem:[%s557] ss:$2 sm:$0x1f]
        %s559 = scalar_lea.vmem [#allocation2], 10
        %v560 = vld [vmem:[%s559] ss:$2 sm:$0x1f]
        %s561 = scalar_lea.vmem [#allocation2], 11
        %v562 = vld [vmem:[%s561] ss:$2 sm:$0x1f]
        %v563 = vmax.f32 %v556, %v558
        %v564 = vmax.f32 %v560, %v562
        %v565 = vmax.f32 %v563, %v564
        %v567 = vlaneseq
        %v568 = vshrl.u32 %v567, 7
        %v569 = vsub.s32 0, %v568
        %v570 = vrot.slane %v555, %v569
        %v572 = vadd.f32 %v565, %v570
        %v573 = vmax.f32 %v572, 0.0
        %v574 = vpack.c.bf16 %v573, %v573
        %vm575 = vcmask 1042432
        %vm576 = vsmask.f32 2304
        %vm577 = vmand %vm575, %vm576
        %v578 = vld [vmem:[%s177] sm:$0x7]
        %v579 = vsel %vm577, %v574, %v578
        %580 = vst [vmem:[%s177] sm:$0x7] %v579
        %s581 = scalar_lea.vmem [#allocation2], 20
        %v582 = vld [vmem:[%s581] ss:$2 sm:$0x1f]
        %s583 = scalar_lea.vmem [#allocation2], 21
        %v584 = vld [vmem:[%s583] ss:$2 sm:$0x1f]
        %s585 = scalar_lea.vmem [#allocation2], 30
        %v586 = vld [vmem:[%s585] ss:$2 sm:$0x1f]
        %s587 = scalar_lea.vmem [#allocation2], 31
        %v588 = vld [vmem:[%s587] ss:$2 sm:$0x1f]
        %v589 = vmax.f32 %v582, %v584
        %v590 = vmax.f32 %v586, %v588
        %v591 = vmax.f32 %v589, %v590
        %v592 = vadd.f32 %v591, %v570
        %v593 = vmax.f32 %v592, 0.0
        %v594 = vpack.c.bf16 %v593, %v593
        %v596 = vunpack.c.l.b16 %v594
        %v597 = vpack.c.b16 %v596, %v596
        %v599 = vshrl.u32 %v597, 16
        %v601 = vrot.slane %v599, 5
        %v602 = vshll.u32 %v597, 16
        %v604 = vrot.slane %v602, 6
        %v605 = vor.u32 %v601, %v604
        %v606 = vrot.slane %v605, 4
        %vm609 = vcmask 1043458
        %vm610 = vsmask.f32 7946
        %vm611 = vmand %vm609, %vm610
        %v612 = vld [vmem:[%s177] sm:$0xc]
        %v613 = vsel %vm611, %v605, %v612
        %614 = vst [vmem:[%s177] sm:$0xc] %v613
        %615 = vst [vmem:[%s177 + $0x4] sm:$0x1] %v606
        %s616 = scalar_lea.vmem [#allocation2], 40
        %v617 = vld [vmem:[%s616] ss:$2 sm:$0x1f]
        %s618 = scalar_lea.vmem [#allocation2], 41
        %v619 = vld [vmem:[%s618] ss:$2 sm:$0x1f]
        %s620 = scalar_lea.vmem [#allocation2], 50
        %v621 = vld [vmem:[%s620] ss:$2 sm:$0x1f]
        %s622 = scalar_lea.vmem [#allocation2], 51
        %v623 = vld [vmem:[%s622] ss:$2 sm:$0x1f]
        %v624 = vmax.f32 %v617, %v619
        %v625 = vmax.f32 %v621, %v623
        %v626 = vmax.f32 %v624, %v625
        %v627 = vadd.f32 %v626, %v570
        %v628 = vmax.f32 %v627, 0.0
        %v629 = vpack.c.bf16 %v628, %v628
        %v631 = vunpack.c.l.b16 %v629
        %v632 = vpack.c.b16 %v631, %v631
        %v633 = vrot.slane %v632, 7
        %vm635 = vcmask 1043457
        %vm636 = vsmask.f32 3328
        %vm637 = vmand %vm635, %vm636
        %v638 = vld [vmem:[%s177 + $0x4] sm:$0xe]
        %v639 = vsel %vm637, %v633, %v638
        %640 = vst [vmem:[%s177 + $0x4] sm:$0xe] %v639
        %s641 = scalar_lea.vmem [#allocation2], 60
        %v642 = vld [vmem:[%s641] ss:$2 sm:$0x1f]
        %s643 = scalar_lea.vmem [#allocation2], 61
        %v644 = vld [vmem:[%s643] ss:$2 sm:$0x1f]
        %s645 = scalar_lea.vmem [#allocation2], 70
        %v646 = vld [vmem:[%s645] ss:$2 sm:$0x1f]
        %s647 = scalar_lea.vmem [#allocation2], 71
        %v648 = vld [vmem:[%s647] ss:$2 sm:$0x1f]
        %v649 = vmax.f32 %v642, %v644
        %v650 = vmax.f32 %v646, %v648
        %v651 = vmax.f32 %v649, %v650
        %v652 = vadd.f32 %v651, %v570
        %v653 = vmax.f32 %v652, 0.0
        %v654 = vpack.c.bf16 %v653, %v653
        %v656 = vunpack.c.l.b16 %v654
        %v657 = vpack.c.b16 %v656, %v656
        %v659 = vshll.u32 %v657, 16
        %v661 = vrot.slane %v659, 5
        %v662 = vshrl.u32 %v657, 16
        %v664 = vrot.slane %v662, 4
        %v665 = vor.u32 %v664, %v661
        %v666 = vrot.slane %v665, 4
        %vm669 = vcmask 1043459
        %vm670 = vsmask.f32 7950
        %vm671 = vmand %vm669, %vm670
        %v672 = vld [vmem:[%s177 + $0x4] sm:$0x8]
        %v673 = vsel %vm671, %v661, %v672
        %674 = vst [vmem:[%s177 + $0x4] sm:$0x8] %v673
        %675 = vst [vmem:[%s177 + $0x8] sm:$0x3] %v666
        %s676 = scalar_lea.vmem [#allocation2], 80
        %v677 = vld [vmem:[%s676] ss:$2 sm:$0x1f]
        %s678 = scalar_lea.vmem [#allocation2], 81
        %v679 = vld [vmem:[%s678] ss:$2 sm:$0x1f]
        %s680 = scalar_lea.vmem [#allocation2], 90
        %v681 = vld [vmem:[%s680] ss:$2 sm:$0x1f]
        %s682 = scalar_lea.vmem [#allocation2], 91
        %v683 = vld [vmem:[%s682] ss:$2 sm:$0x1f]
        %v684 = vmax.f32 %v677, %v679
        %v685 = vmax.f32 %v681, %v683
        %v686 = vmax.f32 %v684, %v685
        %v687 = vadd.f32 %v686, %v570
        %v688 = vmax.f32 %v687, 0.0
        %v689 = vpack.c.bf16 %v688, %v688
        %v691 = vunpack.c.l.b16 %v689
        %v692 = vpack.c.b16 %v691, %v691
        %v693 = vrot.slane %v692, 6
        %v694 = vrot.slane %v693, 4
        %697 = vst [vmem:[%s177 + $0x8] sm:$0xc] %v693
        %vm698 = vcmask 1040384
        %vm699 = vsmask.f32 256
        %vm700 = vmand %vm698, %vm699
        %v701 = vld [vmem:[%s177 + $0xc] sm:$0x1]
        %v702 = vsel %vm700, %v694, %v701
        %703 = vst [vmem:[%s177 + $0xc] sm:$0x1] %v702
        %s704 = scalar_lea.vmem [#allocation2], 100
        %v705 = vld [vmem:[%s704] ss:$2 sm:$0x1f]
        %s706 = scalar_lea.vmem [#allocation2], 101
        %v707 = vld [vmem:[%s706] ss:$2 sm:$0x1f]
        %s708 = scalar_lea.vmem [#allocation2], 110
        %v709 = vld [vmem:[%s708] ss:$2 sm:$0x1f]
        %s710 = scalar_lea.vmem [#allocation2], 111
        %v711 = vld [vmem:[%s710] ss:$2 sm:$0x1f]
        %v712 = vmax.f32 %v705, %v707
        %v713 = vmax.f32 %v709, %v711
        %v714 = vmax.f32 %v712, %v713
        %v715 = vadd.f32 %v714, %v570
        %v716 = vmax.f32 %v715, 0.0
        %v717 = vpack.c.bf16 %v716, %v716
        %v719 = vunpack.c.l.b16 %v717
        %v720 = vpack.c.b16 %v719, %v719
        %v722 = vshrl.u32 %v720, 16
        %v724 = vrot.slane %v722, 7
        %v725 = vshll.u32 %v720, 16
        %v727 = vor.u32 %v724, %v725
        %vm729 = vsmask.f32 7938
        %vm730 = vmand %vm575, %vm729
        %v731 = vld [vmem:[%s177 + $0xc] sm:$0x7]
        %v732 = vsel %vm730, %v727, %v731
        %733 = vst [vmem:[%s177 + $0xc] sm:$0x7] %v732
        %s734 = scalar_lea.vmem [#allocation2], 120
        %v735 = vld [vmem:[%s734] ss:$2 sm:$0x1f]
        %s736 = scalar_lea.vmem [#allocation2], 121
        %v737 = vld [vmem:[%s736] ss:$2 sm:$0x1f]
        %s738 = scalar_lea.vmem [#allocation2], 130
        %v739 = vld [vmem:[%s738] ss:$2 sm:$0x1f]
        %s740 = scalar_lea.vmem [#allocation2], 131
        %v741 = vld [vmem:[%s740] ss:$2 sm:$0x1f]
        %v742 = vmax.f32 %v735, %v737
        %v743 = vmax.f32 %v739, %v741
        %v744 = vmax.f32 %v742, %v743
        %v745 = vadd.f32 %v744, %v570
        %v746 = vmax.f32 %v745, 0.0
        %v747 = vpack.c.bf16 %v746, %v746
        %v749 = vunpack.c.l.b16 %v747
        %v750 = vpack.c.b16 %v749, %v749
        %v751 = vrot.slane %v750, 5
        %v752 = vrot.slane %v751, 4
        %755 = vst [vmem:[%s177 + $0xc] sm:$0x8] %v751
        %vm756 = vcmask 1041408
        %vm757 = vsmask.f32 1280
        %vm758 = vmand %vm756, %vm757
        %v759 = vld [vmem:[%s177 + $0x10] sm:$0x3]
        %v760 = vsel %vm758, %v752, %v759
        %761 = vst [vmem:[%s177 + $0x10] sm:$0x3] %v760
        %s762 = scalar_lea.vmem [#allocation2], 140
        %v763 = vld [vmem:[%s762] ss:$2 sm:$0x1f]
        %s764 = scalar_lea.vmem [#allocation2], 141
        %v765 = vld [vmem:[%s764] ss:$2 sm:$0x1f]
        %s766 = scalar_lea.vmem [#allocation2], 150
        %v767 = vld [vmem:[%s766] ss:$2 sm:$0x1f]
        %s768 = scalar_lea.vmem [#allocation2], 151
        %v769 = vld [vmem:[%s768] ss:$2 sm:$0x1f]
        %v770 = vmax.f32 %v763, %v765
        %v771 = vmax.f32 %v767, %v769
        %v772 = vmax.f32 %v770, %v771
        %v773 = vadd.f32 %v772, %v570
        %v774 = vmax.f32 %v773, 0.0
        %v775 = vpack.c.bf16 %v774, %v774
        %v777 = vunpack.c.l.b16 %v775
        %v778 = vpack.c.b16 %v777, %v777
        %v780 = vshrl.u32 %v778, 16
        %v782 = vrot.slane %v780, 6
        %v783 = vshll.u32 %v778, 16
        %v785 = vrot.slane %v783, 7
        %v786 = vor.u32 %v782, %v785
        %vm788 = vsmask.f32 7942
        %vm789 = vmand %vm635, %vm788
        %v790 = vld [vmem:[%s177 + $0x10] sm:$0xe]
        %v791 = vsel %vm789, %v786, %v790
        %792 = vst [vmem:[%s177 + $0x10] sm:$0xe] %v791
        %s793 = sand.u32 %s90, 1
        %s794 = sand.u32 %s90, 1
        %s795 = smul.addr %s794, 20
        %s796 = scalar_lea.vmem [#allocation3], %s795
        // Predicated region
        $region33: #{net_forward.4} parent=31 // pred_check
          %p797 = pneg %p100
        $region34: #{net_forward.4} parent=31 // pred_check_branch
          %799 = sbr.rel (%p797) target = $region36
        $region35: #{net_forward.4} parent=31 // pred_region
          %s800 = smul.u32 5, %s14
          %s801 = ssub.s32 7, %s800
          %p802 = scmp.lt.s32.totalorder %s801, 5
          %s803 = scalar_select %p802, %s801, 5
          %s804 = smul.u32 64, %s803
          %p805 = scmp.ne.s32.totalorder 0, %s804
          %s806 = smul.addr %s800, 4
          %s807 = scalar_lea.vmem %s3, %s806
          // Predicated region
          $region37: #{net_forward.4} parent=35 // pred_check
            %p808 = pneg %p805
          $region38: #{net_forward.4} parent=35 // pred_check_branch
            %810 = sbr.rel (%p808) target = $region40
          $region39: #{net_forward.4} parent=35 // pred_region
            // Predicated region
            $region41: #{net_forward.4} parent=39 // pred_check
              _
            $region42: #{net_forward.4} parent=39 // pred_check_branch
              %812 = sbr.rel target = $region44
            $region43: #{net_forward.4} parent=39 // pred_region
              // Predicated region
              $region63: #{net_forward.4} parent=43 // pred_check
                _
              $region64: #{net_forward.4} parent=43 // pred_check_branch
                %870 = sbr.rel (0) target = $region66
              $region65: #{net_forward.4} parent=43 // pred_region
                %s872 = sdiv.u32.pop %s803, 5
                %s873 = srem.u32.pop %s803, 5
                // While loop
                $region67: #{net_forward.4} parent=65 // loop_pre_header
                  _
                $region68: #{net_forward.4} parent=65 // loop_header
                  %s875 = sphi 0, %s877
                  %p876 = scmp.ge.s32.totalorder %s875, %s872
                  %s880 = sphi 0, %s895
                  %s881 = sphi %s796, %s898
                  %s882 = sphi %s807, %s899
                $region69: #{net_forward.4} parent=65 // loop_header_branch
                  %879 = sbr.rel (%p876) target = $region73
                $region70: #{net_forward.4} parent=65 // loop_body
                  %v883 = vld [vmem:[%s881] sm:$0xf]
                  %884 = vst [vmem:[%s882] sm:$0xf] %v883
                  %v885 = vld [vmem:[%s881 + $0x4] sm:$0xf]
                  %886 = vst [vmem:[%s882 + $0x4] sm:$0xf] %v885
                  %v887 = vld [vmem:[%s881 + $0x8] sm:$0xf]
                  %888 = vst [vmem:[%s882 + $0x8] sm:$0xf] %v887
                  %v889 = vld [vmem:[%s881 + $0xc] sm:$0xf]
                  %890 = vst [vmem:[%s882 + $0xc] sm:$0xf] %v889
                  %v891 = vld [vmem:[%s881 + $0x10] sm:$0xf]
                  %892 = vst [vmem:[%s882 + $0x10] sm:$0xf] %v891
                  %s893 = sadd.s32 1, %s880
                  %p894 = scmp.ge.s32.totalorder %s893, %s872
                  %s895 = scalar_select %p894, 0, %s893
                  %s896 = smul.u32 %s895, 20
                  %s897 = smul.u32 %s895, 20
                  %s898 = scalar_lea.vmem %s796, %s896 [#allocation3]
                  %s899 = scalar_lea.vmem %s807, %s897
                $region71: #{net_forward.4} parent=65 // loop_footer
                  %s877 = sadd.s32 %s875, 1
                $region72: #{net_forward.4} parent=65 // loop_footer_branch
                  %874 = sbr.rel target = $region68
                $region73: #{net_forward.4} parent=65 // loop_exit
                  _
                %s900 = sdiv.u32.pop %s803, 5
                %s901 = srem.u32.pop %s803, 5
                %s902 = smul.u32 %s900, 5
                %s903 = smul.u32 4, %s902
                %s904 = scalar_lea.vmem %s796, %s903 [#allocation3]
                %s905 = smul.u32 4, %s902
                %s906 = scalar_lea.vmem %s807, %s905
                // While loop
                $region74: #{net_forward.4} parent=65 // loop_pre_header
                  _
                $region75: #{net_forward.4} parent=65 // loop_header
                  %s908 = sphi 0, %s910
                  %p909 = scmp.ge.s32.totalorder %s908, %s901
                  %s913 = sphi 0, %s920
                  %s914 = sphi %s904, %s923
                  %s915 = sphi %s906, %s924
                $region76: #{net_forward.4} parent=65 // loop_header_branch
                  %912 = sbr.rel (%p909) target = $region80
                $region77: #{net_forward.4} parent=65 // loop_body
                  %v916 = vld [vmem:[%s914] sm:$0xf]
                  %917 = vst [vmem:[%s915] sm:$0xf] %v916
                  %s918 = sadd.s32 1, %s913
                  %p919 = scmp.ge.s32.totalorder %s918, %s901
                  %s920 = scalar_select %p919, 0, %s918
                  %s921 = smul.u32 %s920, 4
                  %s922 = smul.u32 %s920, 4
                  %s923 = scalar_lea.vmem %s904, %s921 [#allocation3]
                  %s924 = scalar_lea.vmem %s906, %s922
                $region78: #{net_forward.4} parent=65 // loop_footer
                  %s910 = sadd.s32 %s908, 1
                $region79: #{net_forward.4} parent=65 // loop_footer_branch
                  %907 = sbr.rel target = $region75
                $region80: #{net_forward.4} parent=65 // loop_exit
                  _
              $region66: #{net_forward.4} parent=43 // pred_fallthru
                _
            $region44: #{net_forward.4} parent=39 // pred_fallthru
              _
            // Predicated region
            $region45: #{net_forward.4} parent=39 // pred_check
              _
            $region46: #{net_forward.4} parent=39 // pred_check_branch
              %814 = sbr.rel (0) target = $region48
            $region47: #{net_forward.4} parent=39 // pred_region
              %s816 = sdiv.u32.pop %s803, 5
              %s817 = srem.u32.pop %s803, 5
              // While loop
              $region49: #{net_forward.4} parent=47 // loop_pre_header
                _
              $region50: #{net_forward.4} parent=47 // loop_header
                %s819 = sphi 0, %s821
                %p820 = scmp.ge.s32.totalorder %s819, %s816
                %s824 = sphi 0, %s839
                %s825 = sphi %s796, %s842
                %s826 = sphi %s807, %s843
              $region51: #{net_forward.4} parent=47 // loop_header_branch
                %823 = sbr.rel (%p820) target = $region55
              $region52: #{net_forward.4} parent=47 // loop_body
                %v827 = vld [vmem:[%s825] sm:$0xf]
                %828 = vst [vmem:[%s826] sm:$0xf] %v827
                %v829 = vld [vmem:[%s825 + $0x4] sm:$0xf]
                %830 = vst [vmem:[%s826 + $0x4] sm:$0xf] %v829
                %v831 = vld [vmem:[%s825 + $0x8] sm:$0xf]
                %832 = vst [vmem:[%s826 + $0x8] sm:$0xf] %v831
                %v833 = vld [vmem:[%s825 + $0xc] sm:$0xf]
                %834 = vst [vmem:[%s826 + $0xc] sm:$0xf] %v833
                %v835 = vld [vmem:[%s825 + $0x10] sm:$0xf]
                %836 = vst [vmem:[%s826 + $0x10] sm:$0xf] %v835
                %s837 = sadd.s32 1, %s824
                %p838 = scmp.ge.s32.totalorder %s837, %s816
                %s839 = scalar_select %p838, 0, %s837
                %s840 = smul.u32 %s839, 20
                %s841 = smul.u32 %s839, 20
                %s842 = scalar_lea.vmem %s796, %s840 [#allocation3]
                %s843 = scalar_lea.vmem %s807, %s841
              $region53: #{net_forward.4} parent=47 // loop_footer
                %s821 = sadd.s32 %s819, 1
              $region54: #{net_forward.4} parent=47 // loop_footer_branch
                %818 = sbr.rel target = $region50
              $region55: #{net_forward.4} parent=47 // loop_exit
                _
              %s844 = sdiv.u32.pop %s803, 5
              %s845 = srem.u32.pop %s803, 5
              %s846 = smul.u32 %s844, 5
              %s847 = smul.u32 4, %s846
              %s848 = scalar_lea.vmem %s796, %s847 [#allocation3]
              %s849 = smul.u32 4, %s846
              %s850 = scalar_lea.vmem %s807, %s849
              // While loop
              $region56: #{net_forward.4} parent=47 // loop_pre_header
                _
              $region57: #{net_forward.4} parent=47 // loop_header
                %s852 = sphi 0, %s854
                %p853 = scmp.ge.s32.totalorder %s852, %s845
                %s857 = sphi 0, %s864
                %s858 = sphi %s848, %s867
                %s859 = sphi %s850, %s868
              $region58: #{net_forward.4} parent=47 // loop_header_branch
                %856 = sbr.rel (%p853) target = $region62
              $region59: #{net_forward.4} parent=47 // loop_body
                %v860 = vld [vmem:[%s858] sm:$0xf]
                %861 = vst [vmem:[%s859] sm:$0xf] %v860
                %s862 = sadd.s32 1, %s857
                %p863 = scmp.ge.s32.totalorder %s862, %s845
                %s864 = scalar_select %p863, 0, %s862
                %s865 = smul.u32 %s864, 4
                %s866 = smul.u32 %s864, 4
                %s867 = scalar_lea.vmem %s848, %s865 [#allocation3]
                %s868 = scalar_lea.vmem %s850, %s866
              $region60: #{net_forward.4} parent=47 // loop_footer
                %s854 = sadd.s32 %s852, 1
              $region61: #{net_forward.4} parent=47 // loop_footer_branch
                %851 = sbr.rel target = $region57
              $region62: #{net_forward.4} parent=47 // loop_exit
                _
            $region48: #{net_forward.4} parent=39 // pred_fallthru
              _
          $region40: #{net_forward.4} parent=35 // pred_fallthru
            _
          %925 = vnop
        $region36: #{net_forward.4} parent=31 // pred_fallthru
          _
      $region32: #{net_forward.4} parent=5 // pred_fallthru
        _
      %p926 = scmp.le.s32.totalorder 2, %s9
      // Predicated region
      $region81: #{net_forward.4} parent=5 // pred_check
        %p927 = pneg %p926
      $region82: #{net_forward.4} parent=5 // pred_check_branch
        %929 = sbr.rel (%p927) target = $region84
      $region83: #{net_forward.4} parent=5 // pred_region
        %s930 = ssub.s32 %s9, 2
        // Predicated region
        $region85: #{net_forward.4} parent=83 // pred_check
          %p931 = pneg %p106
        $region86: #{net_forward.4} parent=83 // pred_check_branch
          %933 = sbr.rel (%p931) target = $region88
        $region87: #{net_forward.4} parent=83 // pred_region
          %s934 = sand.u32 %s91, 1
          %s935 = sand.u32 %s91, 1
          %s936 = smul.addr %s935, 20
          %s937 = scalar_lea.vmem [#allocation3], %s936
        $region88: #{net_forward.4} parent=83 // pred_fallthru
          _
      $region84: #{net_forward.4} parent=5 // pred_fallthru
        _
    $region6: #{net_forward.4} parent=1 // loop_footer
      %s13 = sadd.s32 1, %s9
    $region7: #{net_forward.4} parent=1 // loop_footer_branch
      %8 = sbr.rel target = $region3
    $region8: #{net_forward.4} parent=1 // loop_exit
      _

// kernel: net_forward.5
$region0: #{net_forward.5}
  #allocation0 [shape = 'u32[]', space=smem, size = 0x4, offset = 0x4, fixed_abs, tag = 'smem constant byte address 0x4 - core index']
  #allocation1 [shape = 'u32[144,128]{1,0:T(1,128)}', space=vmem, size = 0x12000, scoped, tag = 'internal scratch']
  %s0 = inlined_call_operand.vmem [shape: bf16[2,400], index: 0, kind: input, shape index: {}]
  %s1 = inlined_call_operand.vmem [shape: bf16[400,128], index: 1, kind: input, shape index: {}]
  %s2 = inlined_call_operand.vmem [shape: f32[1,128], index: 2, kind: input, shape index: {}]
  %s3 = inlined_call_operand.vmem [shape: bf16[128,128], index: 3, kind: input, shape index: {}]
  %s4 = inlined_call_operand.vmem [shape: f32[1,128], index: 4, kind: input, shape index: {}]
  %s5 = inlined_call_operand.vmem [shape: bf16[128,128], index: 5, kind: input, shape index: {}]
  %s6 = inlined_call_operand.vmem [shape: f32[1,128], index: 6, kind: input, shape index: {}]
  %s7 = inlined_call_operand.hbm [shape: f32[2,128], index: 7, kind: output, shape index: {}]
  %s8 = sld [smem:[#allocation0]]
  $region38: #{net_forward.5} parent=0
    _
  %s10 = ssub.s32 1, %s8
  %s11 = scalar_select 0, %s10, %s8
  $region1: #{net_forward.5} parent=0
    #allocation2 [shape = 'u8[1024]{0}', space=vmem, size = 0x400, scoped, tag = 'output window, operand 0, single buffered']
    #allocation3 [shape = 's32[1]{0}', space=sflag, size = 0x4, scoped, tag = 'scoped memory for net_forward.5']
    %12 = vsyncpa [#allocation3], 0
    // Predicated region
    $region2: #{net_forward.5} parent=1 // pred_check
      _
    $region3: #{net_forward.5} parent=1 // pred_check_branch
      %14 = sbr.rel (0) target = $region5
    $region4: #{net_forward.5} parent=1 // pred_region
      _
    $region5: #{net_forward.5} parent=1 // pred_fallthru
      _
    // Predicated region
    $region6: #{net_forward.5} parent=1 // pred_check
      _
    $region7: #{net_forward.5} parent=1 // pred_check_branch
      %16 = sbr.rel (0) target = $region9
    $region8: #{net_forward.5} parent=1 // pred_region
      _
    $region9: #{net_forward.5} parent=1 // pred_fallthru
      _
    // Predicated region
    $region10: #{net_forward.5} parent=1 // pred_check
      _
    $region11: #{net_forward.5} parent=1 // pred_check_branch
      %18 = sbr.rel (0) target = $region13
    $region12: #{net_forward.5} parent=1 // pred_region
      _
    $region13: #{net_forward.5} parent=1 // pred_fallthru
      _
    // Predicated region
    $region14: #{net_forward.5} parent=1 // pred_check
      _
    $region15: #{net_forward.5} parent=1 // pred_check_branch
      %20 = sbr.rel (0) target = $region17
    $region16: #{net_forward.5} parent=1 // pred_region
      _
    $region17: #{net_forward.5} parent=1 // pred_fallthru
      _
    // Predicated region
    $region18: #{net_forward.5} parent=1 // pred_check
      _
    $region19: #{net_forward.5} parent=1 // pred_check_branch
      %22 = sbr.rel (0) target = $region21
    $region20: #{net_forward.5} parent=1 // pred_region
      _
    $region21: #{net_forward.5} parent=1 // pred_fallthru
      _
    // Predicated region
    $region22: #{net_forward.5} parent=1 // pred_check
      _
    $region23: #{net_forward.5} parent=1 // pred_check_branch
      %24 = sbr.rel (0) target = $region25
    $region24: #{net_forward.5} parent=1 // pred_region
      _
    $region25: #{net_forward.5} parent=1 // pred_fallthru
      _
    // Predicated region
    $region26: #{net_forward.5} parent=1 // pred_check
      _
    $region27: #{net_forward.5} parent=1 // pred_check_branch
      %26 = sbr.rel (0) target = $region29
    $region28: #{net_forward.5} parent=1 // pred_region
      _
    $region29: #{net_forward.5} parent=1 // pred_fallthru
      _
    %v28 = vld [vmem:[%s0] sm:$0xf]
    %v29 = vld [vmem:[%s1] sm:$0xf]
    %v30 = vld [vmem:[%s1 + $0x4] sm:$0xf]
    %v31 = vld [vmem:[%s1 + $0x8] sm:$0xf]
    %v32 = vld [vmem:[%s1 + $0xc] sm:$0xf]
    %v33 = vld [vmem:[%s1 + $0x10] sm:$0xf]
    %v34 = vld [vmem:[%s1 + $0x14] sm:$0xf]
    %v35 = vld [vmem:[%s1 + $0x18] sm:$0xf]
    %v36 = vld [vmem:[%s1 + $0x1c] sm:$0xf]
    %v37 = vld [vmem:[%s1 + $0x20] sm:$0xf]
    %v38 = vld [vmem:[%s1 + $0x24] sm:$0xf]
    %v39 = vld [vmem:[%s1 + $0x28] sm:$0xf]
    %v40 = vld [vmem:[%s1 + $0x2c] sm:$0xf]
    %v41 = vld [vmem:[%s1 + $0x30] sm:$0xf]
    %v42 = vld [vmem:[%s1 + $0x34] sm:$0xf]
    %v43 = vld [vmem:[%s1 + $0x38] sm:$0xf]
    %v44 = vld [vmem:[%s1 + $0x3c] sm:$0xf]
    %v45 = vld [vmem:[%s1 + $0x40] sm:$0xf]
    %v46 = vld [vmem:[%s1 + $0x44] sm:$0xf]
    %v47 = vld [vmem:[%s1 + $0x48] sm:$0xf]
    %v48 = vld [vmem:[%s1 + $0x4c] sm:$0xf]
    %v49 = vld [vmem:[%s1 + $0x50] sm:$0xf]
    %v50 = vld [vmem:[%s1 + $0x54] sm:$0xf]
    %v51 = vld [vmem:[%s1 + $0x58] sm:$0xf]
    %v52 = vld [vmem:[%s1 + $0x5c] sm:$0xf]
    %v53 = vld [vmem:[%s1 + $0x60] sm:$0xf]
    %v54 = vld [vmem:[%s1 + $0x64] sm:$0xf]
    %v55 = vld [vmem:[%s1 + $0x68] sm:$0xf]
    %v56 = vld [vmem:[%s1 + $0x6c] sm:$0xf]
    %v57 = vld [vmem:[%s1 + $0x70] sm:$0xf]
    %v58 = vld [vmem:[%s1 + $0x74] sm:$0xf]
    %v59 = vld [vmem:[%s1 + $0x78] sm:$0xf]
    %v60 = vld [vmem:[%s1 + $0x7c] sm:$0xf]
    %v61 = vld [vmem:[%s1 + $0x80] sm:$0xf]
    %v62 = vld [vmem:[%s1 + $0x84] sm:$0xf]
    %v63 = vld [vmem:[%s1 + $0x88] sm:$0xf]
    %v64 = vld [vmem:[%s1 + $0x8c] sm:$0xf]
    %v65 = vld [vmem:[%s1 + $0x90] sm:$0xf]
    %v66 = vld [vmem:[%s1 + $0x94] sm:$0xf]
    %v67 = vld [vmem:[%s1 + $0x98] sm:$0xf]
    %v68 = vld [vmem:[%s1 + $0x9c] sm:$0xf]
    %v69 = vld [vmem:[%s1 + $0xa0] sm:$0xf]
    %v70 = vld [vmem:[%s1 + $0xa4] sm:$0xf]
    %v71 = vld [vmem:[%s1 + $0xa8] sm:$0xf]
    %v72 = vld [vmem:[%s1 + $0xac] sm:$0xf]
    %v73 = vld [vmem:[%s1 + $0xb0] sm:$0xf]
    %v74 = vld [vmem:[%s1 + $0xb4] sm:$0xf]
    %v75 = vld [vmem:[%s1 + $0xb8] sm:$0xf]
    %v76 = vld [vmem:[%s1 + $0xbc] sm:$0xf]
    %v77 = vld [vmem:[%s1 + $0xc0] sm:$0xf]
    %v78 = vld [vmem:[%s1 + $0xc4] sm:$0xf]
    %v79 = vld [vmem:[%s2] sm:$0x1]
    %v81 = vlaneseq
    %v82 = vshrl.u32 %v81, 7
    %v83 = vsub.s32 0, %v82
    %v84 = vrot.slane %v79, %v83
    %v88 = vunpack.c.l.s4 1966171168
    %v89 = vunpack.c.0.s8 %v88
    %v90 = vlaneseq
    %v91 = vshrl.u32 %v90, 7
    %v92 = vsub.s32 %v89, %v91
    %v93 = vrot.slane %v28, %v92
    %v94 = vcombine.high %v93, %v93
    %v96 = vunpack.c.l.s4 1966171168
    %v97 = vunpack.c.0.s8 %v96
    %v98 = vlaneseq
    %v99 = vshrl.u32 %v98, 7
    %v100 = vsub.s32 %v97, %v99
    %v101 = vrot.slane %v93, %v100
    %v103 = vunpack.c.l.s4 1966171168
    %v104 = vunpack.c.0.s8 %v103
    %v105 = vlaneseq
    %v106 = vshrl.u32 %v105, 7
    %v107 = vsub.s32 %v104, %v106
    %v108 = vrot.slane %v94, %v107
    %v109 = vcombine.high %v101, %v101
    %v110 = vcombine.high %v108, %v108
    %v164 = vunpack.c.l.b16 %v29
    %v165 = vunpack.c.l.b16 %v30
    %v166 = vunpack.c.l.b16 %v31
    %v167 = vunpack.c.l.b16 %v32
    %v168 = vunpack.c.l.b16 %v33
    %v169 = vunpack.c.l.b16 %v34
    %v170 = vunpack.c.l.b16 %v35
    %v171 = vunpack.c.l.b16 %v36
    %v172 = vunpack.c.l.b16 %v37
    %v173 = vunpack.c.l.b16 %v38
    %v174 = vunpack.c.l.b16 %v39
    %v175 = vunpack.c.l.b16 %v40
    %v176 = vunpack.c.l.b16 %v41
    %v177 = vunpack.c.l.b16 %v42
    %v178 = vunpack.c.l.b16 %v43
    %v179 = vunpack.c.l.b16 %v44
    %v180 = vunpack.c.l.b16 %v45
    %v181 = vunpack.c.l.b16 %v46
    %v182 = vunpack.c.l.b16 %v47
    %v183 = vunpack.c.l.b16 %v48
    %v184 = vunpack.c.l.b16 %v49
    %v185 = vunpack.c.l.b16 %v50
    %v186 = vunpack.c.l.b16 %v51
    %v187 = vunpack.c.l.b16 %v52
    %v188 = vunpack.c.l.b16 %v53
    %v189 = vunpack.c.l.b16 %v54
    %v190 = vunpack.c.l.b16 %v55
    %v191 = vunpack.c.l.b16 %v56
    %v192 = vunpack.c.l.b16 %v57
    %v193 = vunpack.c.l.b16 %v58
    %v194 = vunpack.c.l.b16 %v59
    %v195 = vunpack.c.l.b16 %v60
    %v196 = vunpack.c.l.b16 %v61
    %v197 = vunpack.c.l.b16 %v62
    %v198 = vunpack.c.l.b16 %v63
    %v199 = vunpack.c.l.b16 %v64
    %v200 = vunpack.c.l.b16 %v65
    %v201 = vunpack.c.l.b16 %v66
    %v202 = vunpack.c.l.b16 %v67
    %v203 = vunpack.c.l.b16 %v68
    %v204 = vunpack.c.l.b16 %v69
    %v205 = vunpack.c.l.b16 %v70
    %v206 = vunpack.c.l.b16 %v71
    %v207 = vunpack.c.l.b16 %v72
    %v208 = vunpack.c.l.b16 %v73
    %v209 = vunpack.c.l.b16 %v74
    %v210 = vunpack.c.l.b16 %v75
    %v211 = vunpack.c.l.b16 %v76
    %v212 = vunpack.c.l.b16 %v77
    %v213 = vunpack.c.l.b16 %v78
    %v214 = vpack.c.b16 %v165, %v164
    %v215 = vpack.c.b16 %v167, %v166
    %v216 = vpack.c.b16 %v169, %v168
    %v217 = vpack.c.b16 %v171, %v170
    %v218 = vpack.c.b16 %v173, %v172
    %v219 = vpack.c.b16 %v175, %v174
    %v220 = vpack.c.b16 %v177, %v176
    %v221 = vpack.c.b16 %v179, %v178
    %v222 = vpack.c.b16 %v181, %v180
    %v223 = vpack.c.b16 %v183, %v182
    %v224 = vpack.c.b16 %v185, %v184
    %v225 = vpack.c.b16 %v187, %v186
    %v226 = vpack.c.b16 %v189, %v188
    %v227 = vpack.c.b16 %v191, %v190
    %v228 = vpack.c.b16 %v193, %v192
    %v229 = vpack.c.b16 %v195, %v194
    %v230 = vpack.c.b16 %v197, %v196
    %v231 = vpack.c.b16 %v199, %v198
    %v232 = vpack.c.b16 %v201, %v200
    %v233 = vpack.c.b16 %v203, %v202
    %v234 = vpack.c.b16 %v205, %v204
    %v235 = vpack.c.b16 %v207, %v206
    %v236 = vpack.c.b16 %v209, %v208
    %v237 = vpack.c.b16 %v211, %v210
    %v238 = vpack.c.b16 %v213, %v212
    %vm264 = vcmask 130048
    %v266 = vsel %vm264, %v110, 0
    %268 = vmatprep.subr.bf16.mxu0 0
    %269 = vmatpush1.bf16.msra.mxu0 %v214
    %270 = vmatprep.subr.bf16.mxu0 0
    %271 = vmatpush1.bf16.msra.mxu0 %v215
    %272 = vmatprep.subr.bf16.mxu0 0
    %273 = vmatpush1.bf16.msra.mxu0 %v216
    %274 = vmatprep.subr.bf16.mxu0 0
    %275 = vmatpush1.bf16.msra.mxu0 %v217
    %276 = vmatprep.subr.bf16.mxu0 0
    %277 = vmatpush1.bf16.msra.mxu0 %v218
    %278 = vmatprep.subr.bf16.mxu0 0
    %279 = vmatpush1.bf16.msra.mxu0 %v219
    %280 = vmatprep.subr.bf16.mxu0 0
    %281 = vmatpush1.bf16.msra.mxu0 %v220
    %282 = vmatprep.subr.bf16.mxu0 0
    %283 = vmatpush1.bf16.msra.mxu0 %v221
    %284 = vmatprep.subr.bf16.mxu0 0
    %285 = vmatpush1.bf16.msra.mxu0 %v222
    %286 = vmatprep.subr.bf16.mxu0 0
    %287 = vmatpush1.bf16.msra.mxu0 %v223
    %288 = vmatprep.subr.bf16.mxu0 0
    %289 = vmatpush1.bf16.msra.mxu0 %v224
    %290 = vmatprep.subr.bf16.mxu0 0
    %291 = vmatpush1.bf16.msra.mxu0 %v225
    %292 = vmatprep.subr.bf16.mxu0 0
    %293 = vmatpush1.bf16.msra.mxu0 %v226
    %294 = vmatprep.subr.bf16.mxu0 0
    %295 = vmatpush1.bf16.msra.mxu0 %v227
    %296 = vmatprep.subr.bf16.mxu0 0
    %297 = vmatpush1.bf16.msra.mxu0 %v228
    %298 = vmatprep.subr.bf16.mxu0 0
    %299 = vmatpush1.bf16.msra.mxu0 %v229
    %300 = vmatprep.mubr.bf16.mxu0 %v108
    %301 = vmatmul.mubr.bf16.gmra.mrb[0].mxu0 %v101
    %v302 = vpop.f32.mrb[0].mxu0
    %v303 = vadd.f32 %v84, %v302
    %v304 = vpop.f32.mrb[0].mxu0
    %v305 = vpop.f32.mrb[0].mxu0
    %v306 = vpop.f32.mrb[0].mxu0
    %307 = vdwg.mxu0
    %308 = vmatprep.subr.bf16.mxu0 0
    %309 = vmatpush1.bf16.msra.mxu0 %v230
    %310 = vmatprep.subr.bf16.mxu0 0
    %311 = vmatpush1.bf16.msra.mxu0 %v231
    %312 = vmatprep.subr.bf16.mxu0 0
    %313 = vmatpush1.bf16.msra.mxu0 %v232
    %314 = vmatprep.subr.bf16.mxu0 0
    %315 = vmatpush1.bf16.msra.mxu0 %v233
    %316 = vmatprep.subr.bf16.mxu0 0
    %317 = vmatpush1.bf16.msra.mxu0 %v234
    %318 = vmatprep.subr.bf16.mxu0 0
    %319 = vmatpush1.bf16.msra.mxu0 %v235
    %320 = vmatprep.subr.bf16.mxu0 0
    %321 = vmatpush1.bf16.msra.mxu0 %v236
    %322 = vmatprep.subr.bf16.mxu0 0
    %323 = vmatpush1.bf16.msra.mxu0 %v237
    %324 = vmatprep.subr.bf16.mxu0 0
    %325 = vmatpush1.bf16.msra.mxu0 %v238
    %326 = vmatprep.subr.bf16.mxu0 0
    %327 = vmatpush1.bf16.msra.mxu0 0
    %328 = vmatprep.subr.bf16.mxu0 0
    %329 = vmatpush1.bf16.msra.mxu0 0
    %330 = vmatprep.subr.bf16.mxu0 0
    %331 = vmatpush1.bf16.msra.mxu0 0
    %332 = vmatprep.subr.bf16.mxu0 0
    %333 = vmatpush1.bf16.msra.mxu0 0
    %334 = vmatprep.subr.bf16.mxu0 0
    %335 = vmatpush1.bf16.msra.mxu0 0
    %336 = vmatprep.subr.bf16.mxu0 0
    %337 = vmatpush1.bf16.msra.mxu0 0
    %338 = vmatprep.subr.bf16.mxu0 0
    %339 = vmatpush1.bf16.msra.mxu0 0
    %340 = vmatprep.mubr.bf16.mxu0 %v266
    %341 = vmatmul.mubr.bf16.gmra.mrb[0].mxu0 %v109
    %v342 = vpop.f32.mrb[0].mxu0
    %v343 = vadd.f32 %v303, %v342
    %v344 = vpop.f32.mrb[0].mxu0
    %v345 = vpop.f32.mrb[0].mxu0
    %v346 = vpop.f32.mrb[0].mxu0
    %347 = vdwg.mxu0
    %v348 = vmax.f32 %v343, 0.0
    %v349 = vpack.c.bf16 %v348, %v348
    %v350 = vld [vmem:[%s3] sm:$0xf]
    %v351 = vld [vmem:[%s3 + $0x4] sm:$0xf]
    %v352 = vld [vmem:[%s3 + $0x8] sm:$0xf]
    %v353 = vld [vmem:[%s3 + $0xc] sm:$0xf]
    %v354 = vld [vmem:[%s3 + $0x10] sm:$0xf]
    %v355 = vld [vmem:[%s3 + $0x14] sm:$0xf]
    %v356 = vld [vmem:[%s3 + $0x18] sm:$0xf]
    %v357 = vld [vmem:[%s3 + $0x1c] sm:$0xf]
    %v358 = vld [vmem:[%s3 + $0x20] sm:$0xf]
    %v359 = vld [vmem:[%s3 + $0x24] sm:$0xf]
    %v360 = vld [vmem:[%s3 + $0x28] sm:$0xf]
    %v361 = vld [vmem:[%s3 + $0x2c] sm:$0xf]
    %v362 = vld [vmem:[%s3 + $0x30] sm:$0xf]
    %v363 = vld [vmem:[%s3 + $0x34] sm:$0xf]
    %v364 = vld [vmem:[%s3 + $0x38] sm:$0xf]
    %v365 = vld [vmem:[%s3 + $0x3c] sm:$0xf]
    %v366 = vld [vmem:[%s4] sm:$0x1]
    %v368 = vlaneseq
    %v369 = vshrl.u32 %v368, 7
    %v370 = vsub.s32 0, %v369
    %v371 = vrot.slane %v366, %v370
    %v389 = vunpack.c.l.b16 %v350
    %v390 = vunpack.c.l.b16 %v351
    %v391 = vunpack.c.l.b16 %v352
    %v392 = vunpack.c.l.b16 %v353
    %v393 = vunpack.c.l.b16 %v354
    %v394 = vunpack.c.l.b16 %v355
    %v395 = vunpack.c.l.b16 %v356
    %v396 = vunpack.c.l.b16 %v357
    %v397 = vunpack.c.l.b16 %v358
    %v398 = vunpack.c.l.b16 %v359
    %v399 = vunpack.c.l.b16 %v360
    %v400 = vunpack.c.l.b16 %v361
    %v401 = vunpack.c.l.b16 %v362
    %v402 = vunpack.c.l.b16 %v363
    %v403 = vunpack.c.l.b16 %v364
    %v404 = vunpack.c.l.b16 %v365
    %v405 = vpack.c.b16 %v390, %v389
    %v406 = vpack.c.b16 %v392, %v391
    %v407 = vpack.c.b16 %v394, %v393
    %v408 = vpack.c.b16 %v396, %v395
    %v409 = vpack.c.b16 %v398, %v397
    %v410 = vpack.c.b16 %v400, %v399
    %v411 = vpack.c.b16 %v402, %v401
    %v412 = vpack.c.b16 %v404, %v403
    %421 = vmatprep.subr.bf16.mxu0 0
    %422 = vmatpush1.bf16.msra.mxu0 %v405
    %423 = vmatprep.subr.bf16.mxu0 0
    %424 = vmatpush1.bf16.msra.mxu0 %v406
    %425 = vmatprep.subr.bf16.mxu0 0
    %426 = vmatpush1.bf16.msra.mxu0 %v407
    %427 = vmatprep.subr.bf16.mxu0 0
    %428 = vmatpush1.bf16.msra.mxu0 %v408
    %429 = vmatprep.subr.bf16.mxu0 0
    %430 = vmatpush1.bf16.msra.mxu0 %v409
    %431 = vmatprep.subr.bf16.mxu0 0
    %432 = vmatpush1.bf16.msra.mxu0 %v410
    %433 = vmatprep.subr.bf16.mxu0 0
    %434 = vmatpush1.bf16.msra.mxu0 %v411
    %435 = vmatprep.subr.bf16.mxu0 0
    %436 = vmatpush1.bf16.msra.mxu0 %v412
    %437 = vmatprep.subr.bf16.mxu0 0
    %438 = vmatpush1.bf16.msra.mxu0 0
    %439 = vmatprep.subr.bf16.mxu0 0
    %440 = vmatpush1.bf16.msra.mxu0 0
    %441 = vmatprep.subr.bf16.mxu0 0
    %442 = vmatpush1.bf16.msra.mxu0 0
    %443 = vmatprep.subr.bf16.mxu0 0
    %444 = vmatpush1.bf16.msra.mxu0 0
    %445 = vmatprep.subr.bf16.mxu0 0
    %446 = vmatpush1.bf16.msra.mxu0 0
    %447 = vmatprep.subr.bf16.mxu0 0
    %448 = vmatpush1.bf16.msra.mxu0 0
    %449 = vmatprep.subr.bf16.mxu0 0
    %450 = vmatpush1.bf16.msra.mxu0 0
    %451 = vmatprep.subr.bf16.mxu0 0
    %452 = vmatpush1.bf16.msra.mxu0 0
    %453 = vmatprep.mubr.bf16.mxu0 0
    %454 = vmatmul.mubr.bf16.gmra.mrb[0].mxu0 %v349
    %v455 = vpop.f32.mrb[0].mxu0
    %v456 = vadd.f32 %v371, %v455
    %v457 = vpop.f32.mrb[0].mxu0
    %v458 = vpop.f32.mrb[0].mxu0
    %v459 = vpop.f32.mrb[0].mxu0
    %460 = vdwg.mxu0
    %v461 = vmax.f32 %v456, 0.0
    %v462 = vpack.c.bf16 %v461, %v461
    %v463 = vld [vmem:[%s5] sm:$0xf]
    %v464 = vld [vmem:[%s5 + $0x4] sm:$0xf]
    %v465 = vld [vmem:[%s5 + $0x8] sm:$0xf]
    %v466 = vld [vmem:[%s5 + $0xc] sm:$0xf]
    %v467 = vld [vmem:[%s5 + $0x10] sm:$0xf]
    %v468 = vld [vmem:[%s5 + $0x14] sm:$0xf]
    %v469 = vld [vmem:[%s5 + $0x18] sm:$0xf]
    %v470 = vld [vmem:[%s5 + $0x1c] sm:$0xf]
    %v471 = vld [vmem:[%s5 + $0x20] sm:$0xf]
    %v472 = vld [vmem:[%s5 + $0x24] sm:$0xf]
    %v473 = vld [vmem:[%s5 + $0x28] sm:$0xf]
    %v474 = vld [vmem:[%s5 + $0x2c] sm:$0xf]
    %v475 = vld [vmem:[%s5 + $0x30] sm:$0xf]
    %v476 = vld [vmem:[%s5 + $0x34] sm:$0xf]
    %v477 = vld [vmem:[%s5 + $0x38] sm:$0xf]
    %v478 = vld [vmem:[%s5 + $0x3c] sm:$0xf]
    %v479 = vld [vmem:[%s6] sm:$0x1]
    %v481 = vlaneseq
    %v482 = vshrl.u32 %v481, 7
    %v483 = vsub.s32 0, %v482
    %v484 = vrot.slane %v479, %v483
    %v502 = vunpack.c.l.b16 %v463
    %v503 = vunpack.c.l.b16 %v464
    %v504 = vunpack.c.l.b16 %v465
    %v505 = vunpack.c.l.b16 %v466
    %v506 = vunpack.c.l.b16 %v467
    %v507 = vunpack.c.l.b16 %v468
    %v508 = vunpack.c.l.b16 %v469
    %v509 = vunpack.c.l.b16 %v470
    %v510 = vunpack.c.l.b16 %v471
    %v511 = vunpack.c.l.b16 %v472
    %v512 = vunpack.c.l.b16 %v473
    %v513 = vunpack.c.l.b16 %v474
    %v514 = vunpack.c.l.b16 %v475
    %v515 = vunpack.c.l.b16 %v476
    %v516 = vunpack.c.l.b16 %v477
    %v517 = vunpack.c.l.b16 %v478
    %v518 = vpack.c.b16 %v503, %v502
    %v519 = vpack.c.b16 %v505, %v504
    %v520 = vpack.c.b16 %v507, %v506
    %v521 = vpack.c.b16 %v509, %v508
    %v522 = vpack.c.b16 %v511, %v510
    %v523 = vpack.c.b16 %v513, %v512
    %v524 = vpack.c.b16 %v515, %v514
    %v525 = vpack.c.b16 %v517, %v516
    %534 = vmatprep.subr.bf16.mxu0 0
    %535 = vmatpush1.bf16.msra.mxu0 %v518
    %536 = vmatprep.subr.bf16.mxu0 0
    %537 = vmatpush1.bf16.msra.mxu0 %v519
    %538 = vmatprep.subr.bf16.mxu0 0
    %539 = vmatpush1.bf16.msra.mxu0 %v520
    %540 = vmatprep.subr.bf16.mxu0 0
    %541 = vmatpush1.bf16.msra.mxu0 %v521
    %542 = vmatprep.subr.bf16.mxu0 0
    %543 = vmatpush1.bf16.msra.mxu0 %v522
    %544 = vmatprep.subr.bf16.mxu0 0
    %545 = vmatpush1.bf16.msra.mxu0 %v523
    %546 = vmatprep.subr.bf16.mxu0 0
    %547 = vmatpush1.bf16.msra.mxu0 %v524
    %548 = vmatprep.subr.bf16.mxu0 0
    %549 = vmatpush1.bf16.msra.mxu0 %v525
    %550 = vmatprep.subr.bf16.mxu0 0
    %551 = vmatpush1.bf16.msra.mxu0 0
    %552 = vmatprep.subr.bf16.mxu0 0
    %553 = vmatpush1.bf16.msra.mxu0 0
    %554 = vmatprep.subr.bf16.mxu0 0
    %555 = vmatpush1.bf16.msra.mxu0 0
    %556 = vmatprep.subr.bf16.mxu0 0
    %557 = vmatpush1.bf16.msra.mxu0 0
    %558 = vmatprep.subr.bf16.mxu0 0
    %559 = vmatpush1.bf16.msra.mxu0 0
    %560 = vmatprep.subr.bf16.mxu0 0
    %561 = vmatpush1.bf16.msra.mxu0 0
    %562 = vmatprep.subr.bf16.mxu0 0
    %563 = vmatpush1.bf16.msra.mxu0 0
    %564 = vmatprep.subr.bf16.mxu0 0
    %565 = vmatpush1.bf16.msra.mxu0 0
    %566 = vmatprep.mubr.bf16.mxu0 0
    %567 = vmatmul.mubr.bf16.gmra.mrb[0].mxu0 %v462
    %v568 = vpop.f32.mrb[0].mxu0
    %v569 = vadd.f32 %v484, %v568
    %v570 = vpop.f32.mrb[0].mxu0
    %v571 = vpop.f32.mrb[0].mxu0
    %v572 = vpop.f32.mrb[0].mxu0
    %573 = vdwg.mxu0
    %574 = vst [vmem:[#allocation2] sm:$0x3] %v569
    // Predicated region
    $region30: #{net_forward.5} parent=1 // pred_check
      _
    $region31: #{net_forward.5} parent=1 // pred_check_branch
      %576 = sbr.rel (0) target = $region33
    $region32: #{net_forward.5} parent=1 // pred_region
      %s578 = ssub.s32 32, 32
      %579 = vsyncadd [#allocation3], %s578
      %s581 = sshll.u32 [#allocation2], 4
      %s582 = int_to_ptr.vmem [resolvable:$true] %s581
      %584 = dma.vmem_to_hbm [thread:$0]  %s582, 32, %s7, [#allocation3]
    $region33: #{net_forward.5} parent=1 // pred_fallthru
      _
    // Predicated region
    $region34: #{net_forward.5} parent=1 // pred_check
      _
    $region35: #{net_forward.5} parent=1 // pred_check_branch
      %586 = sbr.rel (0) target = $region37
    $region36: #{net_forward.5} parent=1 // pred_region
      %587 = dma.done [#allocation3], 32
    $region37: #{net_forward.5} parent=1 // pred_fallthru
      _
    %588 = vsyncpa [#allocation3], 1

</llo_original>
